<compile_context>
chip_gen: v6e
topology: v6e:2x2x1
jax: 0.10.0
libtpu: 0.0.40
codegen_flags: <defaults>
</compile_context>

<pallas_src>
import jax
import jax.numpy as jnp
from jax.experimental import pallas as pl
from jax.experimental.pallas import tpu as pltpu


# ----------------------------------------------------------------------------- kernel


def _make_kernel(num_branches, tile_n, n_instances):
    f32 = jnp.float32
    bf16 = jnp.bfloat16

    def sigmoid_via_tanh(x):
        # sigmoid(x) = 0.5*(tanh(0.5*x) + 1): a single EUP push plus two cheap VPU ops,
        # vs exp + reciprocal (two EUP pushes) in the previous version.
        return 0.5 * jnp.tanh(0.5 * x) + 0.5

    def kernel(*refs):
        xs = refs[:num_branches]
        wfs = refs[num_branches:2 * num_branches]
        (bfused_ref, wa_ref, ba_ref, wb_ref, bb_ref,
         wattnT_ref, battn_ref, wcls_ref, bcls_ref) = refs[2 * num_branches:2 * num_branches + 9]
        (attn_ref, m_out_ref, l_out_ref, mpool_ref,
         logits_ref, yprob_ref) = refs[2 * num_branches + 9:2 * num_branches + 15]
        m_scr, l_scr, acc_scr = refs[2 * num_branches + 15:]

        step = pl.program_id(0)
        last = pl.num_programs(0) - 1
        base = step * tile_n

        @pl.when(step == 0)
        def _init():
            m_scr[...] = jnp.full_like(m_scr, -jnp.inf)
            l_scr[...] = jnp.zeros_like(l_scr)
            acc_scr[...] = jnp.zeros_like(acc_scr)

        # Tail-tile masks (instances on sublanes for h1, on lanes for the attention scores).
        row_valid = (jax.lax.broadcasted_iota(jnp.int32, (tile_n, 1), 0) + base) < n_instances
        lane_valid = (jax.lax.broadcasted_iota(jnp.int32, (1, tile_n), 1) + base) < n_instances

        # h1 = ReLU(sum_i sigmoid(x_i) @ Wfused_i + b_fused)   (projection folded into fc)
        acc_h = None
        for x_ref, w_ref in zip(xs, wfs):
            s = sigmoid_via_tanh(x_ref[...].astype(f32)).astype(bf16)
            part = jnp.dot(s, w_ref[...], preferred_element_type=f32)
            acc_h = part if acc_h is None else acc_h + part
        h1 = jnp.maximum(acc_h + bfused_ref[...], 0.0)
        h1 = jnp.where(row_valid, h1, 0.0)          # zero padded rows (garbage/NaN safe)
        h1_bf = h1.astype(bf16)                     # (tile_n, L1)

        # Gated attention, lane-dense (C, tile_n).
        a = jnp.tanh(jnp.dot(h1_bf, wa_ref[...], preferred_element_type=f32) + ba_ref[...])
        g = sigmoid_via_tanh(jnp.dot(h1_bf, wb_ref[...], preferred_element_type=f32) + bb_ref[...])
        ag = (a * g).astype(bf16)                   # (tile_n, D)
        # TODO(synk): if pl.lower_as_mlir shows a vxpose of the large (tile_n, D) ag tile here,
        #             restructure so any XLU transpose lands on the small (C, D) operand instead.
        scores = jax.lax.dot_general(
            wattnT_ref[...], ag, (((1,), (1,)), ((), ())),
            preferred_element_type=f32) + battn_ref[...]             # (C, tile_n)
        scores = jnp.where(lane_valid, scores, -jnp.inf)

        # Stream un-normalized scores; the wrapper normalizes with the exported (m, l).
        attn_ref[...] = scores

        # Online softmax over the instance (lane) axis + M accumulation.
        m_tile = jnp.max(scores, axis=-1, keepdims=True)             # (C, 1)
        m_new = jnp.maximum(m_scr[...], m_tile)
        alpha = jnp.exp(m_scr[...] - m_new)
        p = jnp.exp(scores - m_new)                                   # padded lanes -> 0
        l_scr[...] = alpha * l_scr[...] + jnp.sum(p, axis=-1, keepdims=True)
        acc_scr[...] = alpha * acc_scr[...] + jnp.dot(
            p.astype(bf16), h1_bf, preferred_element_type=f32)        # (C, L1)
        m_scr[...] = m_new

        @pl.when(step == last)
        def _finalize():
            l = l_scr[...]
            # One-shot epilogue: exact division (no approx reciprocal error in outputs).
            M = acc_scr[...] / l                                       # (C, L1)
            mpool_ref[...] = M
            m_out_ref[...] = m_scr[...]
            l_out_ref[...] = l
            logits = jnp.sum(M * wcls_ref[...], axis=-1, keepdims=True) + bcls_ref[...]  # (C, 1)
            logits_ref[...] = logits
            z = jnp.exp(logits - jnp.max(logits, axis=0, keepdims=True))
            yprob_ref[...] = z / jnp.sum(z, axis=0, keepdims=True)

    return kernel


# ----------------------------------------------------------------------------- params


def init_params(key, in_dims, embed_dim=32, num_classes=2, size_arg="small"):
    """Deterministic synthetic parameters matching the module's __init__ shapes."""
    num_branches = len(in_dims)
    L0 = embed_dim * num_branches                   # CLAM_MB_MIL(embed_dim = E * num_branches)
    size_dict = {"small": [L0, 512, 256], "big": [L0, 512, 384]}
    _, L1, D = size_dict[size_arg]
    keys = iter(jax.random.split(key, 64))

    def lin(kin, kout):
        return 0.02 * jax.random.normal(next(keys), (kin, kout), jnp.float32)

    return {
        "proj_w": [lin(d, embed_dim) for d in in_dims],
        "proj_b": [0.01 * jax.random.normal(next(keys), (1, embed_dim), jnp.float32)
                   for _ in in_dims],
        "fc_w": lin(L0, L1),
        "fc_b": jnp.zeros((1, L1), jnp.float32),
        "attn_a_w": lin(L1, D), "attn_a_b": jnp.zeros((1, D), jnp.float32),
        "attn_b_w": lin(L1, D), "attn_b_b": jnp.zeros((1, D), jnp.float32),
        "attn_c_w": lin(D, num_classes), "attn_c_b": jnp.zeros((1, num_classes), jnp.float32),
        # one nn.Linear(L1, 1) per class, stacked on rows
        "cls_w": lin(num_classes, L1),
        "cls_b": jnp.zeros((num_classes, 1), jnp.float32),
        "dims": (embed_dim, num_classes, L1, D),
    }


def prepare_params(params):
    """One-time prep: fold per-branch projections into fc (exact algebra), transpose the
    attention head to the lane-dense layout and pre-cast MXU operands to bf16.
    Call once and reuse across forward calls (removes fixed per-call host work)."""
    f32, bf16 = jnp.float32, jnp.bfloat16
    E, C, L1, D = params["dims"]
    nb = len(params["proj_w"])

    wfc, bfc = params["fc_w"], params["fc_b"]
    wfused, b_fused = [], bfc
    for i in range(nb):
        wfc_i = wfc[E * i:E * (i + 1), :]
        wfused.append((params["proj_w"][i] @ wfc_i).astype(bf16))
        b_fused = b_fused + params["proj_b"][i] @ wfc_i

    return {
        "wfused": wfused,                               # list of (d_i, L1) bf16
        "b_fused": b_fused.astype(f32),                 # (1, L1)
        "wa": params["attn_a_w"].astype(bf16), "ba": params["attn_a_b"],
        "wb": params["attn_b_w"].astype(bf16), "bb": params["attn_b_b"],
        "wattnT": params["attn_c_w"].T.astype(bf16),    # (C, D): lane-dense score layout
        "battn": params["attn_c_b"].reshape(C, 1),
        "wcls": params["cls_w"], "bcls": params["cls_b"],
        "dims": params["dims"],
        "num_branches": nb,
    }


# ----------------------------------------------------------------------------- wrapper


def clam_mb_mil_fusion_forward(feature_list, prepared, tile_n=1024):
    f32 = jnp.float32
    # Stream features in their native dtype (bf16 recommended upstream: halves the dominant
    # HBM x stream, the binding resource on v6e). The kernel upcasts to f32 for the sigmoid.
    xs = [jnp.asarray(f)[0] for f in feature_list]            # squeeze the torch batch-of-1 dim
    n = xs[0].shape[0]
    nb = prepared["num_branches"]
    E, C, L1, D = prepared["dims"]

    # Lane-aligned instance tile (multiple of 128, capped by caller / by n).
    def _round_up(v, m):
        return ((v + m - 1) // m) * m

    tile_n = max(128, min(_round_up(tile_n, 128), _round_up(n, 128)))
    num_tiles = pl.cdiv(n, tile_n)

    weights = (list(prepared["wfused"])
               + [prepared["b_fused"], prepared["wa"], prepared["ba"],
                  prepared["wb"], prepared["bb"], prepared["wattnT"], prepared["battn"],
                  prepared["wcls"], prepared["bcls"]])
    args = list(xs) + weights

    def resident(arr):
        shape = arr.shape
        return pl.BlockSpec(shape, lambda i: (0,) * len(shape))

    in_specs = ([pl.BlockSpec((tile_n, x.shape[1]), lambda i: (i, 0)) for x in xs]
                + [resident(a) for a in weights])

    out_shape = (
        jax.ShapeDtypeStruct((C, n), f32),     # un-normalized attention scores (lane-dense)
        jax.ShapeDtypeStruct((C, 1), f32),     # running max m (softmax statistic)
        jax.ShapeDtypeStruct((C, 1), f32),     # running sum l (softmax statistic)
        jax.ShapeDtypeStruct((C, L1), f32),    # M (attention-pooled bag features)
        jax.ShapeDtypeStruct((C, 1), f32),     # logits (column layout inside the kernel)
        jax.ShapeDtypeStruct((C, 1), f32),     # Y_prob
    )
    out_specs = [
        pl.BlockSpec((C, tile_n), lambda i: (0, i)),
        pl.BlockSpec((C, 1), lambda i: (0, 0)),
        pl.BlockSpec((C, 1), lambda i: (0, 0)),
        pl.BlockSpec((C, L1), lambda i: (0, 0)),
        pl.BlockSpec((C, 1), lambda i: (0, 0)),
        pl.BlockSpec((C, 1), lambda i: (0, 0)),
    ]
    scratch_shapes = [
        pltpu.VMEM((C, 1), f32),               # running max
        pltpu.VMEM((C, 1), f32),               # running sum
        pltpu.VMEM((C, L1), f32),              # un-normalized M accumulator
    ]

    sum_d = sum(int(x.shape[1]) for x in xs)
    x_bytes = sum(int(x.size) * x.dtype.itemsize for x in xs)
    weight_bytes = sum(int(a.size) * a.dtype.itemsize for a in weights)
    cost = pl.CostEstimate(
        flops=int(2 * n * (sum_d * L1 + 2 * L1 * D + D * C + C * L1)),
        transcendentals=int(n * (sum_d + 2 * D + C)),
        bytes_accessed=int(x_bytes + weight_bytes + 4 * (C * n + C * L1 + 8 * C)),
    )

    attn_raw, m_fin, l_fin, M, logits_c1, yprob_c1 = pl.pallas_call(
        _make_kernel(nb, tile_n, n),
        out_shape=out_shape,
        grid_spec=pltpu.PrefetchScalarGridSpec(
            num_scalar_prefetch=0,
            grid=(num_tiles,),
            in_specs=in_specs,
            out_specs=out_specs,
            scratch_shapes=scratch_shapes,
        ),
        compiler_params=pltpu.CompilerParams(
            dimension_semantics=("arbitrary",),       # instance axis carries reduction state
            vmem_limit_bytes=48 * 1024 * 1024,
        ),
        cost_estimate=cost,
    )(*args)

    # Exact instance softmax from the kernel's own statistics: no second full max/exp/sum pass
    # over (C, n), and A is exactly consistent with M (M == A_sm @ h1).
    A_sm = jnp.exp(attn_raw - m_fin) / l_fin          # (C, n)
    logits = logits_c1.T                              # (1, C)
    Y_prob = yprob_c1.T                               # (1, C)
    Y_hat = jnp.argmax(logits, axis=1).reshape(1, 1)  # matches torch.topk(logits, 1, dim=1)[1]
    return {"logits": logits, "Y_prob": Y_prob, "Y_hat": Y_hat, "A": A_sm, "M": M}


# ----------------------------------------------------------------------------- reference


def clam_mb_mil_fusion_reference(feature_list, params):
    """Pure-JAX f32 reference mirroring the torch forward (eval mode)."""
    xs = [jnp.asarray(f, jnp.float32)[0] for f in feature_list]
    projs = [jax.nn.sigmoid(x) @ w + b
             for x, w, b in zip(xs, params["proj_w"], params["proj_b"])]
    h = jnp.concatenate(projs, axis=-1)
    h1 = jax.nn.relu(h @ params["fc_w"] + params["fc_b"])
    a = jnp.tanh(h1 @ params["attn_a_w"] + params["attn_a_b"])
    g = jax.nn.sigmoid(h1 @ params["attn_b_w"] + params["attn_b_b"])
    A = (a * g) @ params["attn_c_w"] + params["attn_c_b"]     # (n, C)
    A_sm = jax.nn.softmax(A.T, axis=-1)                        # (C, n)
    M = A_sm @ h1                                              # (C, L1)
    logits = (jnp.sum(M * params["cls_w"], axis=-1, keepdims=True) + params["cls_b"]).T  # (1, C)
    Y_prob = jax.nn.softmax(logits, axis=1)
    Y_hat = jnp.argmax(logits, axis=1).reshape(1, 1)
    return {"logits": logits, "Y_prob": Y_prob, "Y_hat": Y_hat, "A": A_sm, "M": M}


# ----------------------------------------------------------------------------- demo


if __name__ == "__main__":
    key = jax.random.PRNGKey(0)
    # Small, module-consistent shapes: 4 branches with differing feature dims.
    in_dims = [128, 128, 256, 128]
    embed_dim = 32
    num_classes = 2
    n = 300            # ragged vs tile_n -> exercises masked tail tiles

    k_feat, k_params = jax.random.split(key)
    fkeys = jax.random.split(k_feat, len(in_dims))
    # Features in bf16 (recommended upstream dtype): halves the dominant HBM x stream.
    feature_list = [jax.random.normal(fkeys[i], (1, n, in_dims[i]),
                                      jnp.float32).astype(jnp.bfloat16)
                    for i in range(len(in_dims))]
    params = init_params(k_params, in_dims, embed_dim=embed_dim, num_classes=num_classes)
    prepared = prepare_params(params)                 # one-time weight fold / cast / transpose

    ref = clam_mb_mil_fusion_reference(feature_list, params)

    # Run twice: tile_n=128 (3 grid steps, ragged tail -> multi-tile online softmax) and the
    # production default tile_n=1024 (clamps to a single padded tile for this small bag).
    for tn in (128, 1024):
        out = clam_mb_mil_fusion_forward(feature_list, prepared, tile_n=tn)
        jax.block_until_ready(out)

        # Correctness vs the f32 reference (bf16 streaming + bf16 MXU operands -> relaxed tol).
        assert bool(jnp.all(jnp.isfinite(out["logits"])))
        assert bool(jnp.all(jnp.isfinite(out["A"])))                # ragged-n: no -inf leaks
        assert jnp.allclose(jnp.sum(out["A"], axis=-1), 1.0, atol=1e-4)
        assert jnp.allclose(out["Y_prob"], ref["Y_prob"], atol=2e-2, rtol=2e-2)
        assert jnp.allclose(out["logits"], ref["logits"], atol=2e-2, rtol=2e-2)
        assert jnp.allclose(out["M"], ref["M"], atol=2e-2, rtol=2e-2)
        assert jnp.allclose(out["A"], ref["A"], atol=2e-3, rtol=3e-2)

    print("KERNEL_OK")
</pallas_src>

<mosaic_0001>
module attributes {stable_mosaic.version = 11 : i64} {
  func.func @kernel(%arg0: i32, %arg1: memref<128x128xbf16, #tpu.memory_space<vmem>>, %arg2: memref<128x128xbf16, #tpu.memory_space<vmem>>, %arg3: memref<128x256xbf16, #tpu.memory_space<vmem>>, %arg4: memref<128x128xbf16, #tpu.memory_space<vmem>>, %arg5: memref<128x512xbf16, #tpu.memory_space<vmem>>, %arg6: memref<128x512xbf16, #tpu.memory_space<vmem>>, %arg7: memref<256x512xbf16, #tpu.memory_space<vmem>>, %arg8: memref<128x512xbf16, #tpu.memory_space<vmem>>, %arg9: memref<1x512xf32, #tpu.memory_space<vmem>>, %arg10: memref<512x256xbf16, #tpu.memory_space<vmem>>, %arg11: memref<1x256xf32, #tpu.memory_space<vmem>>, %arg12: memref<512x256xbf16, #tpu.memory_space<vmem>>, %arg13: memref<1x256xf32, #tpu.memory_space<vmem>>, %arg14: memref<2x256xbf16, #tpu.memory_space<vmem>>, %arg15: memref<2x1xf32, #tpu.memory_space<vmem>>, %arg16: memref<2x512xf32, #tpu.memory_space<vmem>>, %arg17: memref<2x1xf32, #tpu.memory_space<vmem>>, %arg18: memref<2x128xf32, #tpu.memory_space<vmem>>, %arg19: memref<2x1xf32, #tpu.memory_space<vmem>>, %arg20: memref<2x1xf32, #tpu.memory_space<vmem>>, %arg21: memref<2x512xf32, #tpu.memory_space<vmem>>, %arg22: memref<2x1xf32, #tpu.memory_space<vmem>>, %arg23: memref<2x1xf32, #tpu.memory_space<vmem>>, %arg24: memref<2x1xf32, #tpu.memory_space<vmem>>, %arg25: memref<2x1xf32, #tpu.memory_space<vmem>>, %arg26: memref<2x512xf32, #tpu.memory_space<vmem>>) attributes {dimension_semantics = [#tpu.dimension_semantics<arbitrary>], iteration_bounds = array<i64: 3>, scalar_prefetch = 0 : i64, scratch_operands = 3 : i64, tpu.core_type = #tpu.core_type<tc>, window_params = [{transform_indices = @transform_0, window_bounds = array<i64: 128, 128>}, {transform_indices = @transform_1, window_bounds = array<i64: 128, 128>}, {transform_indices = @transform_2, window_bounds = array<i64: 128, 256>}, {transform_indices = @transform_3, window_bounds = array<i64: 128, 128>}, {pipeline_mode = #tpu.pipeline_mode<synchronous>, transform_indices = @transform_4, window_bounds = array<i64: 128, 512>}, {pipeline_mode = #tpu.pipeline_mode<synchronous>, transform_indices = @transform_5, window_bounds = array<i64: 128, 512>}, {pipeline_mode = #tpu.pipeline_mode<synchronous>, transform_indices = @transform_6, window_bounds = array<i64: 256, 512>}, {pipeline_mode = #tpu.pipeline_mode<synchronous>, transform_indices = @transform_7, window_bounds = array<i64: 128, 512>}, {pipeline_mode = #tpu.pipeline_mode<synchronous>, transform_indices = @transform_8, window_bounds = array<i64: 1, 512>}, {pipeline_mode = #tpu.pipeline_mode<synchronous>, transform_indices = @transform_9, window_bounds = array<i64: 512, 256>}, {pipeline_mode = #tpu.pipeline_mode<synchronous>, transform_indices = @transform_10, window_bounds = array<i64: 1, 256>}, {pipeline_mode = #tpu.pipeline_mode<synchronous>, transform_indices = @transform_11, window_bounds = array<i64: 512, 256>}, {pipeline_mode = #tpu.pipeline_mode<synchronous>, transform_indices = @transform_12, window_bounds = array<i64: 1, 256>}, {pipeline_mode = #tpu.pipeline_mode<synchronous>, transform_indices = @transform_13, window_bounds = array<i64: 2, 256>}, {pipeline_mode = #tpu.pipeline_mode<synchronous>, transform_indices = @transform_14, window_bounds = array<i64: 2, 1>}, {pipeline_mode = #tpu.pipeline_mode<synchronous>, transform_indices = @transform_15, window_bounds = array<i64: 2, 512>}, {pipeline_mode = #tpu.pipeline_mode<synchronous>, transform_indices = @transform_16, window_bounds = array<i64: 2, 1>}, {transform_indices = @transform_17, window_bounds = array<i64: 2, 128>}, {pipeline_mode = #tpu.pipeline_mode<synchronous>, transform_indices = @transform_18, window_bounds = array<i64: 2, 1>}, {pipeline_mode = #tpu.pipeline_mode<synchronous>, transform_indices = @transform_19, window_bounds = array<i64: 2, 1>}, {pipeline_mode = #tpu.pipeline_mode<synchronous>, transform_indices = @transform_20, window_bounds = array<i64: 2, 512>}, {pipeline_mode = #tpu.pipeline_mode<synchronous>, transform_indices = @transform_21, window_bounds = array<i64: 2, 1>}, {pipeline_mode = #tpu.pipeline_mode<synchronous>, transform_indices = @transform_22, window_bounds = array<i64: 2, 1>}]} {
    %c128_i32 = arith.constant 128 : i32
    %0 = arith.muli %arg0, %c128_i32 : i32
    %c0_i32 = arith.constant 0 : i32
    %1 = arith.cmpi eq, %arg0, %c0_i32 : i32
    %2 = arith.extui %1 : i1 to i32
    %c0_i32_0 = arith.constant 0 : i32
    %3 = arith.cmpi ne, %2, %c0_i32_0 : i32
    scf.if %3 {
      %cst_75 = arith.constant 0xFF800000 : f32
      %132 = vector.broadcast %cst_75 : f32 to vector<2x1xf32>
      %c0_76 = arith.constant 0 : index
      %c0_77 = arith.constant 0 : index
      %133 = vector.load %arg24[%c0_76, %c0_77] : memref<2x1xf32, #tpu.memory_space<vmem>>, vector<2x1xf32>
      tpu.vector_store %arg24[%c0_76, %c0_77], %132 {strides = array<i32>} : memref<2x1xf32, #tpu.memory_space<vmem>>, vector<2x1xf32>,
      %cst_78 = arith.constant 0.000000e+00 : f32
      %134 = vector.broadcast %cst_78 : f32 to vector<2x1xf32>
      %c0_79 = arith.constant 0 : index
      %c0_80 = arith.constant 0 : index
      %135 = vector.load %arg25[%c0_79, %c0_80] : memref<2x1xf32, #tpu.memory_space<vmem>>, vector<2x1xf32>
      tpu.vector_store %arg25[%c0_79, %c0_80], %134 {strides = array<i32>} : memref<2x1xf32, #tpu.memory_space<vmem>>, vector<2x1xf32>,
      %cst_81 = arith.constant 0.000000e+00 : f32
      %136 = vector.broadcast %cst_81 : f32 to vector<2x512xf32>
      %c0_82 = arith.constant 0 : index
      %c0_83 = arith.constant 0 : index
      %137 = vector.load %arg26[%c0_82, %c0_83] : memref<2x512xf32, #tpu.memory_space<vmem>>, vector<2x512xf32>
      tpu.vector_store %arg26[%c0_82, %c0_83], %136 {strides = array<i32>} : memref<2x512xf32, #tpu.memory_space<vmem>>, vector<2x512xf32>,
    } else {
    }
    %4 = tpu.iota {dimensions = array<i32: 0>} : vector<128x1xi32>
    %5 = vector.broadcast %0 : i32 to vector<128x1xi32>
    %6 = arith.addi %4, %5 : vector<128x1xi32>
    %c300_i32 = arith.constant 300 : i32
    %7 = vector.broadcast %c300_i32 : i32 to vector<128x1xi32>
    %8 = arith.cmpi slt, %6, %7 : vector<128x1xi32>
    %9 = tpu.iota {dimensions = array<i32: 1>} : vector<1x128xi32>
    %10 = vector.broadcast %0 : i32 to vector<1x128xi32>
    %11 = arith.addi %9, %10 : vector<1x128xi32>
    %c300_i32_1 = arith.constant 300 : i32
    %12 = vector.broadcast %c300_i32_1 : i32 to vector<1x128xi32>
    %13 = arith.cmpi slt, %11, %12 : vector<1x128xi32>
    %c0 = arith.constant 0 : index
    %c0_2 = arith.constant 0 : index
    %14 = vector.load %arg1[%c0, %c0_2] : memref<128x128xbf16, #tpu.memory_space<vmem>>, vector<128x128xbf16>
    %15 = arith.extf %14 : vector<128x128xbf16> to vector<128x128xf32>
    %cst = arith.constant 5.000000e-01 : f32
    %16 = vector.broadcast %cst : f32 to vector<128x128xf32>
    %17 = arith.mulf %16, %15 : vector<128x128xf32>
    %18 = math.tanh %17 : vector<128x128xf32>
    %cst_3 = arith.constant 5.000000e-01 : f32
    %19 = vector.broadcast %cst_3 : f32 to vector<128x128xf32>
    %20 = arith.mulf %19, %18 : vector<128x128xf32>
    %cst_4 = arith.constant 5.000000e-01 : f32
    %21 = vector.broadcast %cst_4 : f32 to vector<128x128xf32>
    %22 = arith.addf %20, %21 : vector<128x128xf32>
    %23 = arith.truncf %22 : vector<128x128xf32> to vector<128x128xbf16>
    %c0_5 = arith.constant 0 : index
    %c0_6 = arith.constant 0 : index
    %24 = vector.load %arg5[%c0_5, %c0_6] : memref<128x512xbf16, #tpu.memory_space<vmem>>, vector<128x512xbf16>
    %cst_7 = arith.constant dense<0.000000e+00> : vector<128x512xf32>
    %25 = tpu.matmul %23, %24, %cst_7 {dimension_numbers = #tpu.dot_dimension_numbers<[1], [0], [0], [1], [0, 0, 1, 1], [], []>} : vector<128x128xbf16>, vector<128x512xbf16>, vector<128x512xf32> -> vector<128x512xf32>
    %c0_8 = arith.constant 0 : index
    %c0_9 = arith.constant 0 : index
    %26 = vector.load %arg2[%c0_8, %c0_9] : memref<128x128xbf16, #tpu.memory_space<vmem>>, vector<128x128xbf16>
    %27 = arith.extf %26 : vector<128x128xbf16> to vector<128x128xf32>
    %cst_10 = arith.constant 5.000000e-01 : f32
    %28 = vector.broadcast %cst_10 : f32 to vector<128x128xf32>
    %29 = arith.mulf %28, %27 : vector<128x128xf32>
    %30 = math.tanh %29 : vector<128x128xf32>
    %cst_11 = arith.constant 5.000000e-01 : f32
    %31 = vector.broadcast %cst_11 : f32 to vector<128x128xf32>
    %32 = arith.mulf %31, %30 : vector<128x128xf32>
    %cst_12 = arith.constant 5.000000e-01 : f32
    %33 = vector.broadcast %cst_12 : f32 to vector<128x128xf32>
    %34 = arith.addf %32, %33 : vector<128x128xf32>
    %35 = arith.truncf %34 : vector<128x128xf32> to vector<128x128xbf16>
    %c0_13 = arith.constant 0 : index
    %c0_14 = arith.constant 0 : index
    %36 = vector.load %arg6[%c0_13, %c0_14] : memref<128x512xbf16, #tpu.memory_space<vmem>>, vector<128x512xbf16>
    %cst_15 = arith.constant dense<0.000000e+00> : vector<128x512xf32>
    %37 = tpu.matmul %35, %36, %cst_15 {dimension_numbers = #tpu.dot_dimension_numbers<[1], [0], [0], [1], [0, 0, 1, 1], [], []>} : vector<128x128xbf16>, vector<128x512xbf16>, vector<128x512xf32> -> vector<128x512xf32>
    %38 = arith.addf %25, %37 : vector<128x512xf32>
    %c0_16 = arith.constant 0 : index
    %c0_17 = arith.constant 0 : index
    %39 = vector.load %arg3[%c0_16, %c0_17] : memref<128x256xbf16, #tpu.memory_space<vmem>>, vector<128x256xbf16>
    %40 = arith.extf %39 : vector<128x256xbf16> to vector<128x256xf32>
    %cst_18 = arith.constant 5.000000e-01 : f32
    %41 = vector.broadcast %cst_18 : f32 to vector<128x256xf32>
    %42 = arith.mulf %41, %40 : vector<128x256xf32>
    %43 = math.tanh %42 : vector<128x256xf32>
    %cst_19 = arith.constant 5.000000e-01 : f32
    %44 = vector.broadcast %cst_19 : f32 to vector<128x256xf32>
    %45 = arith.mulf %44, %43 : vector<128x256xf32>
    %cst_20 = arith.constant 5.000000e-01 : f32
    %46 = vector.broadcast %cst_20 : f32 to vector<128x256xf32>
    %47 = arith.addf %45, %46 : vector<128x256xf32>
    %48 = arith.truncf %47 : vector<128x256xf32> to vector<128x256xbf16>
    %c0_21 = arith.constant 0 : index
    %c0_22 = arith.constant 0 : index
    %49 = vector.load %arg7[%c0_21, %c0_22] : memref<256x512xbf16, #tpu.memory_space<vmem>>, vector<256x512xbf16>
    %cst_23 = arith.constant dense<0.000000e+00> : vector<128x512xf32>
    %50 = tpu.matmul %48, %49, %cst_23 {dimension_numbers = #tpu.dot_dimension_numbers<[1], [0], [0], [1], [0, 0, 1, 1], [], []>} : vector<128x256xbf16>, vector<256x512xbf16>, vector<128x512xf32> -> vector<128x512xf32>
    %51 = arith.addf %38, %50 : vector<128x512xf32>
    %c0_24 = arith.constant 0 : index
    %c0_25 = arith.constant 0 : index
    %52 = vector.load %arg4[%c0_24, %c0_25] : memref<128x128xbf16, #tpu.memory_space<vmem>>, vector<128x128xbf16>
    %53 = arith.extf %52 : vector<128x128xbf16> to vector<128x128xf32>
    %cst_26 = arith.constant 5.000000e-01 : f32
    %54 = vector.broadcast %cst_26 : f32 to vector<128x128xf32>
    %55 = arith.mulf %54, %53 : vector<128x128xf32>
    %56 = math.tanh %55 : vector<128x128xf32>
    %cst_27 = arith.constant 5.000000e-01 : f32
    %57 = vector.broadcast %cst_27 : f32 to vector<128x128xf32>
    %58 = arith.mulf %57, %56 : vector<128x128xf32>
    %cst_28 = arith.constant 5.000000e-01 : f32
    %59 = vector.broadcast %cst_28 : f32 to vector<128x128xf32>
    %60 = arith.addf %58, %59 : vector<128x128xf32>
    %61 = arith.truncf %60 : vector<128x128xf32> to vector<128x128xbf16>
    %c0_29 = arith.constant 0 : index
    %c0_30 = arith.constant 0 : index
    %62 = vector.load %arg8[%c0_29, %c0_30] : memref<128x512xbf16, #tpu.memory_space<vmem>>, vector<128x512xbf16>
    %cst_31 = arith.constant dense<0.000000e+00> : vector<128x512xf32>
    %63 = tpu.matmul %61, %62, %cst_31 {dimension_numbers = #tpu.dot_dimension_numbers<[1], [0], [0], [1], [0, 0, 1, 1], [], []>} : vector<128x128xbf16>, vector<128x512xbf16>, vector<128x512xf32> -> vector<128x512xf32>
    %64 = arith.addf %51, %63 : vector<128x512xf32>
    %c0_32 = arith.constant 0 : index
    %c0_33 = arith.constant 0 : index
    %65 = vector.load %arg9[%c0_32, %c0_33] : memref<1x512xf32, #tpu.memory_space<vmem>>, vector<1x512xf32>
    %66 = vector.broadcast %65 : vector<1x512xf32> to vector<128x512xf32>
    %67 = arith.addf %64, %66 : vector<128x512xf32>
    %cst_34 = arith.constant 0.000000e+00 : f32
    %68 = vector.broadcast %cst_34 : f32 to vector<128x512xf32>
    %69 = arith.maximumf %67, %68 : vector<128x512xf32>
    %cst_35 = arith.constant 0.000000e+00 : f32
    %70 = vector.shape_cast %8 : vector<128x1xi1> to vector<128x1xi1>
    %71 = vector.broadcast %70 : vector<128x1xi1> to vector<128x512xi1>
    %72 = vector.broadcast %cst_35 : f32 to vector<128x512xf32>
    %73 = arith.select %71, %69, %72 : vector<128x512xi1>, vector<128x512xf32>
    %74 = arith.truncf %73 : vector<128x512xf32> to vector<128x512xbf16>
    %c0_36 = arith.constant 0 : index
    %c0_37 = arith.constant 0 : index
    %75 = vector.load %arg10[%c0_36, %c0_37] : memref<512x256xbf16, #tpu.memory_space<vmem>>, vector<512x256xbf16>
    %cst_38 = arith.constant dense<0.000000e+00> : vector<128x256xf32>
    %76 = tpu.matmul %74, %75, %cst_38 {dimension_numbers = #tpu.dot_dimension_numbers<[1], [0], [0], [1], [0, 0, 1, 1], [], []>} : vector<128x512xbf16>, vector<512x256xbf16>, vector<128x256xf32> -> vector<128x256xf32>
    %c0_39 = arith.constant 0 : index
    %c0_40 = arith.constant 0 : index
    %77 = vector.load %arg11[%c0_39, %c0_40] : memref<1x256xf32, #tpu.memory_space<vmem>>, vector<1x256xf32>
    %78 = vector.broadcast %77 : vector<1x256xf32> to vector<128x256xf32>
    %79 = arith.addf %76, %78 : vector<128x256xf32>
    %80 = math.tanh %79 : vector<128x256xf32>
    %c0_41 = arith.constant 0 : index
    %c0_42 = arith.constant 0 : index
    %81 = vector.load %arg12[%c0_41, %c0_42] : memref<512x256xbf16, #tpu.memory_space<vmem>>, vector<512x256xbf16>
    %cst_43 = arith.constant dense<0.000000e+00> : vector<128x256xf32>
    %82 = tpu.matmul %74, %81, %cst_43 {dimension_numbers = #tpu.dot_dimension_numbers<[1], [0], [0], [1], [0, 0, 1, 1], [], []>} : vector<128x512xbf16>, vector<512x256xbf16>, vector<128x256xf32> -> vector<128x256xf32>
    %c0_44 = arith.constant 0 : index
    %c0_45 = arith.constant 0 : index
    %83 = vector.load %arg13[%c0_44, %c0_45] : memref<1x256xf32, #tpu.memory_space<vmem>>, vector<1x256xf32>
    %84 = vector.broadcast %83 : vector<1x256xf32> to vector<128x256xf32>
    %85 = arith.addf %82, %84 : vector<128x256xf32>
    %cst_46 = arith.constant 5.000000e-01 : f32
    %86 = vector.broadcast %cst_46 : f32 to vector<128x256xf32>
    %87 = arith.mulf %86, %85 : vector<128x256xf32>
    %88 = math.tanh %87 : vector<128x256xf32>
    %cst_47 = arith.constant 5.000000e-01 : f32
    %89 = vector.broadcast %cst_47 : f32 to vector<128x256xf32>
    %90 = arith.mulf %89, %88 : vector<128x256xf32>
    %cst_48 = arith.constant 5.000000e-01 : f32
    %91 = vector.broadcast %cst_48 : f32 to vector<128x256xf32>
    %92 = arith.addf %90, %91 : vector<128x256xf32>
    %93 = arith.mulf %80, %92 : vector<128x256xf32>
    %94 = arith.truncf %93 : vector<128x256xf32> to vector<128x256xbf16>
    %c0_49 = arith.constant 0 : index
    %c0_50 = arith.constant 0 : index
    %95 = vector.load %arg14[%c0_49, %c0_50] : memref<2x256xbf16, #tpu.memory_space<vmem>>, vector<2x256xbf16>
    %cst_51 = arith.constant dense<0.000000e+00> : vector<2x128xf32>
    %96 = tpu.matmul %95, %94, %cst_51 {dimension_numbers = #tpu.dot_dimension_numbers<[1], [1], [0], [0], [0, 0, 1, 0], [], []>} : vector<2x256xbf16>, vector<128x256xbf16>, vector<2x128xf32> -> vector<2x128xf32>
    %c0_52 = arith.constant 0 : index
    %c0_53 = arith.constant 0 : index
    %97 = vector.load %arg15[%c0_52, %c0_53] : memref<2x1xf32, #tpu.memory_space<vmem>>, vector<2x1xf32>
    %98 = vector.broadcast %97 : vector<2x1xf32> to vector<2x128xf32>
    %99 = arith.addf %96, %98 : vector<2x128xf32>
    %cst_54 = arith.constant 0xFF800000 : f32
    %100 = vector.shape_cast %13 : vector<1x128xi1> to vector<1x128xi1>
    %101 = vector.broadcast %100 : vector<1x128xi1> to vector<2x128xi1>
    %102 = vector.broadcast %cst_54 : f32 to vector<2x128xf32>
    %103 = arith.select %101, %99, %102 : vector<2x128xi1>, vector<2x128xf32>
    %c0_55 = arith.constant 0 : index
    %c0_56 = arith.constant 0 : index
    %104 = vector.load %arg18[%c0_55, %c0_56] : memref<2x128xf32, #tpu.memory_space<vmem>>, vector<2x128xf32>
    tpu.vector_store %arg18[%c0_55, %c0_56], %103 {strides = array<i32>} : memref<2x128xf32, #tpu.memory_space<vmem>>, vector<2x128xf32>,
    %cst_57 = arith.constant dense<0xFF800000> : vector<2xf32>
    %105 = vector.multi_reduction <maximumf>, %103, %cst_57 [1] : vector<2x128xf32> to vector<2xf32>
    %106 = vector.shape_cast %105 : vector<2xf32> to vector<2x1xf32>
    %c0_58 = arith.constant 0 : index
    %c0_59 = arith.constant 0 : index
    %107 = vector.load %arg24[%c0_58, %c0_59] : memref<2x1xf32, #tpu.memory_space<vmem>>, vector<2x1xf32>
    %108 = arith.maximumf %107, %106 : vector<2x1xf32>
    %c0_60 = arith.constant 0 : index
    %c0_61 = arith.constant 0 : index
    %109 = vector.load %arg24[%c0_60, %c0_61] : memref<2x1xf32, #tpu.memory_space<vmem>>, vector<2x1xf32>
    %110 = arith.subf %109, %108 : vector<2x1xf32>
    %111 = math.exp %110 : vector<2x1xf32>
    %112 = vector.broadcast %108 : vector<2x1xf32> to vector<2x128xf32>
    %113 = arith.subf %103, %112 : vector<2x128xf32>
    %114 = math.exp %113 : vector<2x128xf32>
    %c0_62 = arith.constant 0 : index
    %c0_63 = arith.constant 0 : index
    %115 = vector.load %arg25[%c0_62, %c0_63] : memref<2x1xf32, #tpu.memory_space<vmem>>, vector<2x1xf32>
    %116 = arith.mulf %111, %115 : vector<2x1xf32>
    %cst_64 = arith.constant dense<0.000000e+00> : vector<2xf32>
    %117 = vector.multi_reduction <add>, %114, %cst_64 [1] : vector<2x128xf32> to vector<2xf32>
    %118 = vector.shape_cast %117 : vector<2xf32> to vector<2x1xf32>
    %119 = arith.addf %116, %118 : vector<2x1xf32>
    %c0_65 = arith.constant 0 : index
    %c0_66 = arith.constant 0 : index
    %120 = vector.load %arg25[%c0_65, %c0_66] : memref<2x1xf32, #tpu.memory_space<vmem>>, vector<2x1xf32>
    tpu.vector_store %arg25[%c0_65, %c0_66], %119 {strides = array<i32>} : memref<2x1xf32, #tpu.memory_space<vmem>>, vector<2x1xf32>,
    %c0_67 = arith.constant 0 : index
    %c0_68 = arith.constant 0 : index
    %121 = vector.load %arg26[%c0_67, %c0_68] : memref<2x512xf32, #tpu.memory_space<vmem>>, vector<2x512xf32>
    %122 = vector.broadcast %111 : vector<2x1xf32> to vector<2x512xf32>
    %123 = arith.mulf %122, %121 : vector<2x512xf32>
    %124 = arith.truncf %114 : vector<2x128xf32> to vector<2x128xbf16>
    %cst_69 = arith.constant dense<0.000000e+00> : vector<2x512xf32>
    %125 = tpu.matmul %124, %74, %cst_69 {dimension_numbers = #tpu.dot_dimension_numbers<[1], [0], [0], [1], [0, 0, 1, 1], [], []>} : vector<2x128xbf16>, vector<128x512xbf16>, vector<2x512xf32> -> vector<2x512xf32>
    %126 = arith.addf %123, %125 : vector<2x512xf32>
    %c0_70 = arith.constant 0 : index
    %c0_71 = arith.constant 0 : index
    %127 = vector.load %arg26[%c0_70, %c0_71] : memref<2x512xf32, #tpu.memory_space<vmem>>, vector<2x512xf32>
    tpu.vector_store %arg26[%c0_70, %c0_71], %126 {strides = array<i32>} : memref<2x512xf32, #tpu.memory_space<vmem>>, vector<2x512xf32>,
    %c0_72 = arith.constant 0 : index
    %c0_73 = arith.constant 0 : index
    %128 = vector.load %arg24[%c0_72, %c0_73] : memref<2x1xf32, #tpu.memory_space<vmem>>, vector<2x1xf32>
    tpu.vector_store %arg24[%c0_72, %c0_73], %108 {strides = array<i32>} : memref<2x1xf32, #tpu.memory_space<vmem>>, vector<2x1xf32>,
    %c2_i32 = arith.constant 2 : i32
    %129 = arith.cmpi eq, %arg0, %c2_i32 : i32
    %130 = arith.extui %129 : i1 to i32
    %c0_i32_74 = arith.constant 0 : i32
    %131 = arith.cmpi ne, %130, %c0_i32_74 : i32
    scf.if %131 {
      %c0_75 = arith.constant 0 : index
      %c0_76 = arith.constant 0 : index
      %132 = vector.load %arg25[%c0_75, %c0_76] : memref<2x1xf32, #tpu.memory_space<vmem>>, vector<2x1xf32>
      %c0_77 = arith.constant 0 : index
      %c0_78 = arith.constant 0 : index
      %133 = vector.load %arg26[%c0_77, %c0_78] : memref<2x512xf32, #tpu.memory_space<vmem>>, vector<2x512xf32>
      %134 = vector.broadcast %132 : vector<2x1xf32> to vector<2x512xf32>
      %135 = arith.divf %133, %134 : vector<2x512xf32>
      %c0_79 = arith.constant 0 : index
      %c0_80 = arith.constant 0 : index
      %136 = vector.load %arg21[%c0_79, %c0_80] : memref<2x512xf32, #tpu.memory_space<vmem>>, vector<2x512xf32>
      tpu.vector_store %arg21[%c0_79, %c0_80], %135 {strides = array<i32>} : memref<2x512xf32, #tpu.memory_space<vmem>>, vector<2x512xf32>,
      %c0_81 = arith.constant 0 : index
      %c0_82 = arith.constant 0 : index
      %137 = vector.load %arg24[%c0_81, %c0_82] : memref<2x1xf32, #tpu.memory_space<vmem>>, vector<2x1xf32>
      %c0_83 = arith.constant 0 : index
      %c0_84 = arith.constant 0 : index
      %138 = vector.load %arg19[%c0_83, %c0_84] : memref<2x1xf32, #tpu.memory_space<vmem>>, vector<2x1xf32>
      tpu.vector_store %arg19[%c0_83, %c0_84], %137 {strides = array<i32>} : memref<2x1xf32, #tpu.memory_space<vmem>>, vector<2x1xf32>,
      %c0_85 = arith.constant 0 : index
      %c0_86 = arith.constant 0 : index
      %139 = vector.load %arg20[%c0_85, %c0_86] : memref<2x1xf32, #tpu.memory_space<vmem>>, vector<2x1xf32>
      tpu.vector_store %arg20[%c0_85, %c0_86], %132 {strides = array<i32>} : memref<2x1xf32, #tpu.memory_space<vmem>>, vector<2x1xf32>,
      %c0_87 = arith.constant 0 : index
      %c0_88 = arith.constant 0 : index
      %140 = vector.load %arg16[%c0_87, %c0_88] : memref<2x512xf32, #tpu.memory_space<vmem>>, vector<2x512xf32>
      %141 = arith.mulf %135, %140 : vector<2x512xf32>
      %cst_89 = arith.constant dense<0.000000e+00> : vector<2xf32>
      %142 = vector.multi_reduction <add>, %141, %cst_89 [1] : vector<2x512xf32> to vector<2xf32>
      %143 = vector.shape_cast %142 : vector<2xf32> to vector<2x1xf32>
      %c0_90 = arith.constant 0 : index
      %c0_91 = arith.constant 0 : index
      %144 = vector.load %arg17[%c0_90, %c0_91] : memref<2x1xf32, #tpu.memory_space<vmem>>, vector<2x1xf32>
      %145 = arith.addf %143, %144 : vector<2x1xf32>
      %c0_92 = arith.constant 0 : index
      %c0_93 = arith.constant 0 : index
      %146 = vector.load %arg22[%c0_92, %c0_93] : memref<2x1xf32, #tpu.memory_space<vmem>>, vector<2x1xf32>
      tpu.vector_store %arg22[%c0_92, %c0_93], %145 {strides = array<i32>} : memref<2x1xf32, #tpu.memory_space<vmem>>, vector<2x1xf32>,
      %cst_94 = arith.constant dense<0xFF800000> : vector<1xf32>
      %147 = vector.multi_reduction <maximumf>, %145, %cst_94 [0] : vector<2x1xf32> to vector<1xf32>
      %148 = vector.shape_cast %147 : vector<1xf32> to vector<1x1xf32>
      %149 = vector.broadcast %148 : vector<1x1xf32> to vector<2x1xf32>
      %150 = arith.subf %145, %149 : vector<2x1xf32>
      %151 = math.exp %150 : vector<2x1xf32>
      %cst_95 = arith.constant dense<0.000000e+00> : vector<1xf32>
      %152 = vector.multi_reduction <add>, %151, %cst_95 [0] : vector<2x1xf32> to vector<1xf32>
      %153 = vector.shape_cast %152 : vector<1xf32> to vector<1x1xf32>
      %154 = vector.broadcast %153 : vector<1x1xf32> to vector<2x1xf32>
      %155 = arith.divf %151, %154 : vector<2x1xf32>
      %c0_96 = arith.constant 0 : index
      %c0_97 = arith.constant 0 : index
      %156 = vector.load %arg23[%c0_96, %c0_97] : memref<2x1xf32, #tpu.memory_space<vmem>>, vector<2x1xf32>
      tpu.vector_store %arg23[%c0_96, %c0_97], %155 {strides = array<i32>} : memref<2x1xf32, #tpu.memory_space<vmem>>, vector<2x1xf32>,
    } else {
    }
    return
  }
  func.func @transform_0(%arg0: i32) -> (i32, i32) {
    %c0_i32 = arith.constant 0 : i32
    %c0_i32_0 = arith.constant 0 : i32
    return %arg0, %c0_i32 : i32, i32
  }
  func.func @transform_1(%arg0: i32) -> (i32, i32) {
    %c0_i32 = arith.constant 0 : i32
    %c0_i32_0 = arith.constant 0 : i32
    return %arg0, %c0_i32 : i32, i32
  }
  func.func @transform_2(%arg0: i32) -> (i32, i32) {
    %c0_i32 = arith.constant 0 : i32
    %c0_i32_0 = arith.constant 0 : i32
    return %arg0, %c0_i32 : i32, i32
  }
  func.func @transform_3(%arg0: i32) -> (i32, i32) {
    %c0_i32 = arith.constant 0 : i32
    %c0_i32_0 = arith.constant 0 : i32
    return %arg0, %c0_i32 : i32, i32
  }
  func.func @transform_4(%arg0: i32) -> (i32, i32) {
    %c0_i32 = arith.constant 0 : i32
    %c0_i32_0 = arith.constant 0 : i32
    %c0_i32_1 = arith.constant 0 : i32
    return %c0_i32, %c0_i32_0 : i32, i32
  }
  func.func @transform_5(%arg0: i32) -> (i32, i32) {
    %c0_i32 = arith.constant 0 : i32
    %c0_i32_0 = arith.constant 0 : i32
    %c0_i32_1 = arith.constant 0 : i32
    return %c0_i32, %c0_i32_0 : i32, i32
  }
  func.func @transform_6(%arg0: i32) -> (i32, i32) {
    %c0_i32 = arith.constant 0 : i32
    %c0_i32_0 = arith.constant 0 : i32
    %c0_i32_1 = arith.constant 0 : i32
    return %c0_i32, %c0_i32_0 : i32, i32
  }
  func.func @transform_7(%arg0: i32) -> (i32, i32) {
    %c0_i32 = arith.constant 0 : i32
    %c0_i32_0 = arith.constant 0 : i32
    %c0_i32_1 = arith.constant 0 : i32
    return %c0_i32, %c0_i32_0 : i32, i32
  }
  func.func @transform_8(%arg0: i32) -> (i32, i32) {
    %c0_i32 = arith.constant 0 : i32
    %c0_i32_0 = arith.constant 0 : i32
    %c0_i32_1 = arith.constant 0 : i32
    return %c0_i32, %c0_i32_0 : i32, i32
  }
  func.func @transform_9(%arg0: i32) -> (i32, i32) {
    %c0_i32 = arith.constant 0 : i32
    %c0_i32_0 = arith.constant 0 : i32
    %c0_i32_1 = arith.constant 0 : i32
    return %c0_i32, %c0_i32_0 : i32, i32
  }
  func.func @transform_10(%arg0: i32) -> (i32, i32) {
    %c0_i32 = arith.constant 0 : i32
    %c0_i32_0 = arith.constant 0 : i32
    %c0_i32_1 = arith.constant 0 : i32
    return %c0_i32, %c0_i32_0 : i32, i32
  }
  func.func @transform_11(%arg0: i32) -> (i32, i32) {
    %c0_i32 = arith.constant 0 : i32
    %c0_i32_0 = arith.constant 0 : i32
    %c0_i32_1 = arith.constant 0 : i32
    return %c0_i32, %c0_i32_0 : i32, i32
  }
  func.func @transform_12(%arg0: i32) -> (i32, i32) {
    %c0_i32 = arith.constant 0 : i32
    %c0_i32_0 = arith.constant 0 : i32
    %c0_i32_1 = arith.constant 0 : i32
    return %c0_i32, %c0_i32_0 : i32, i32
  }
  func.func @transform_13(%arg0: i32) -> (i32, i32) {
    %c0_i32 = arith.constant 0 : i32
    %c0_i32_0 = arith.constant 0 : i32
    %c0_i32_1 = arith.constant 0 : i32
    return %c0_i32, %c0_i32_0 : i32, i32
  }
  func.func @transform_14(%arg0: i32) -> (i32, i32) {
    %c0_i32 = arith.constant 0 : i32
    %c0_i32_0 = arith.constant 0 : i32
    %c0_i32_1 = arith.constant 0 : i32
    return %c0_i32, %c0_i32_0 : i32, i32
  }
  func.func @transform_15(%arg0: i32) -> (i32, i32) {
    %c0_i32 = arith.constant 0 : i32
    %c0_i32_0 = arith.constant 0 : i32
    %c0_i32_1 = arith.constant 0 : i32
    return %c0_i32, %c0_i32_0 : i32, i32
  }
  func.func @transform_16(%arg0: i32) -> (i32, i32) {
    %c0_i32 = arith.constant 0 : i32
    %c0_i32_0 = arith.constant 0 : i32
    %c0_i32_1 = arith.constant 0 : i32
    return %c0_i32, %c0_i32_0 : i32, i32
  }
  func.func @transform_17(%arg0: i32) -> (i32, i32) {
    %c0_i32 = arith.constant 0 : i32
    %c0_i32_0 = arith.constant 0 : i32
    return %c0_i32, %arg0 : i32, i32
  }
  func.func @transform_18(%arg0: i32) -> (i32, i32) {
    %c0_i32 = arith.constant 0 : i32
    %c0_i32_0 = arith.constant 0 : i32
    %c0_i32_1 = arith.constant 0 : i32
    return %c0_i32, %c0_i32_0 : i32, i32
  }
  func.func @transform_19(%arg0: i32) -> (i32, i32) {
    %c0_i32 = arith.constant 0 : i32
    %c0_i32_0 = arith.constant 0 : i32
    %c0_i32_1 = arith.constant 0 : i32
    return %c0_i32, %c0_i32_0 : i32, i32
  }
  func.func @transform_20(%arg0: i32) -> (i32, i32) {
    %c0_i32 = arith.constant 0 : i32
    %c0_i32_0 = arith.constant 0 : i32
    %c0_i32_1 = arith.constant 0 : i32
    return %c0_i32, %c0_i32_0 : i32, i32
  }
  func.func @transform_21(%arg0: i32) -> (i32, i32) {
    %c0_i32 = arith.constant 0 : i32
    %c0_i32_0 = arith.constant 0 : i32
    %c0_i32_1 = arith.constant 0 : i32
    return %c0_i32, %c0_i32_0 : i32, i32
  }
  func.func @transform_22(%arg0: i32) -> (i32, i32) {
    %c0_i32 = arith.constant 0 : i32
    %c0_i32_0 = arith.constant 0 : i32
    %c0_i32_1 = arith.constant 0 : i32
    return %c0_i32, %c0_i32_0 : i32, i32
  }
}

</mosaic_0001>

<llo_original>
// kernel: tpu_custom_call.1
$region0: #{tpu_custom_call.1}
  #allocation0 [shape = 'u32[]', space=smem, size = 0x4, offset = 0x4, fixed_abs, tag = 'smem constant byte address 0x4 - core index']
  #allocation1 [shape = 'u32[144,128]{1,0:T(1,128)}', space=vmem, size = 0x12000, scoped, tag = 'internal scratch']
  #allocation2 [shape = 'f32[2,1]{1,0:T(2,128)}', space=vmem, size = 0x400, scoped, tag = 'scratch operand']
  #allocation3 [shape = 'f32[2,1]{1,0:T(2,128)}', space=vmem, size = 0x400, scoped, tag = 'scratch operand']
  #allocation4 [shape = 'f32[2,512]{1,0:T(2,128)}', space=vmem, size = 0x1000, scoped, tag = 'scratch operand']
  %s0 = inlined_call_operand.hbm [shape: bf16[300,128], index: 0, kind: input, shape index: {}]
  %s1 = inlined_call_operand.hbm [shape: bf16[300,128], index: 1, kind: input, shape index: {}]
  %s2 = inlined_call_operand.hbm [shape: bf16[300,256], index: 2, kind: input, shape index: {}]
  %s3 = inlined_call_operand.hbm [shape: bf16[300,128], index: 3, kind: input, shape index: {}]
  %s4 = inlined_call_operand.hbm [shape: bf16[128,512], index: 4, kind: input, shape index: {}]
  %s5 = inlined_call_operand.hbm [shape: bf16[128,512], index: 5, kind: input, shape index: {}]
  %s6 = inlined_call_operand.hbm [shape: bf16[256,512], index: 6, kind: input, shape index: {}]
  %s7 = inlined_call_operand.hbm [shape: bf16[128,512], index: 7, kind: input, shape index: {}]
  %s8 = inlined_call_operand.vmem [shape: f32[1,512], index: 8, kind: input, shape index: {}]
  %s9 = inlined_call_operand.hbm [shape: bf16[512,256], index: 9, kind: input, shape index: {}]
  %s10 = inlined_call_operand.vmem [shape: f32[1,256], index: 10, kind: input, shape index: {}]
  %s11 = inlined_call_operand.hbm [shape: bf16[512,256], index: 11, kind: input, shape index: {}]
  %s12 = inlined_call_operand.vmem [shape: f32[1,256], index: 12, kind: input, shape index: {}]
  %s13 = inlined_call_operand.vmem [shape: bf16[2,256], index: 13, kind: input, shape index: {}]
  %s14 = inlined_call_operand.vmem [shape: f32[2,1], index: 14, kind: input, shape index: {}]
  %s15 = inlined_call_operand.vmem [shape: f32[2,512], index: 15, kind: input, shape index: {}]
  %s16 = inlined_call_operand.vmem [shape: f32[2,1], index: 16, kind: input, shape index: {}]
  %s17 = inlined_call_operand.hbm [shape: f32[2,300], index: 17, kind: output, shape index: {0}]
  %s18 = inlined_call_operand.vmem [shape: f32[2,1], index: 18, kind: output, shape index: {1}]
  %s19 = inlined_call_operand.vmem [shape: f32[2,1], index: 19, kind: output, shape index: {2}]
  %s20 = inlined_call_operand.hbm [shape: f32[2,512], index: 20, kind: output, shape index: {3}]
  %s21 = inlined_call_operand.vmem [shape: f32[2,1], index: 21, kind: output, shape index: {4}]
  %s22 = inlined_call_operand.vmem [shape: f32[2,1], index: 22, kind: output, shape index: {5}]
  %23 = xla_tuple %s17, %s18, %s19, %s20, %s21, %s22
  %s24 = sld [smem:[#allocation0]]
  $region189: #{tpu_custom_call.1} parent=0
    _
  %s26 = ssub.s32 1, %s24
  %s27 = scalar_select 0, %s26, %s24
  $region1: #{tpu_custom_call.1} parent=0
    #allocation5 [shape = 'u8[65536]{0}', space=vmem, size = 0x10000, scoped, tag = 'input window, operand 0']
    #allocation6 [shape = 's32[2]{0}', space=sflag, size = 0x8, scoped, tag = 'scoped memory for tpu_custom_call.1']
    #allocation7 [shape = 's32[2]{0}', space=sflag, size = 0x8, scoped, tag = 'scoped memory for tpu_custom_call.1']
    #allocation8 [shape = 'u8[65536]{0}', space=vmem, size = 0x10000, scoped, tag = 'input window, operand 1']
    #allocation9 [shape = 's32[2]{0}', space=sflag, size = 0x8, scoped, tag = 'scoped memory for tpu_custom_call.1']
    #allocation10 [shape = 'u8[131072]{0}', space=vmem, size = 0x20000, scoped, tag = 'input window, operand 2']
    #allocation11 [shape = 'u8[65536]{0}', space=vmem, size = 0x10000, scoped, tag = 'input window, operand 3']
    #allocation12 [shape = 's32[2]{0}', space=sflag, size = 0x8, scoped, tag = 'scoped memory for tpu_custom_call.1']
    #allocation13 [shape = 'u8[131072]{0}', space=vmem, size = 0x20000, scoped, tag = 'input window, operand 4, single buffered']
    #allocation14 [shape = 'u8[131072]{0}', space=vmem, size = 0x20000, scoped, tag = 'input window, operand 5, single buffered']
    #allocation15 [shape = 's32[1]{0}', space=sflag, size = 0x4, scoped, tag = 'scoped memory for tpu_custom_call.1']
    #allocation16 [shape = 'u8[262144]{0}', space=vmem, size = 0x40000, scoped, tag = 'input window, operand 6, single buffered']
    #allocation17 [shape = 'u8[131072]{0}', space=vmem, size = 0x20000, scoped, tag = 'input window, operand 7, single buffered']
    #allocation18 [shape = 's32[1]{0}', space=sflag, size = 0x4, scoped, tag = 'scoped memory for tpu_custom_call.1']
    #allocation19 [shape = 'u8[262144]{0}', space=vmem, size = 0x40000, scoped, tag = 'input window, operand 9, single buffered']
    #allocation20 [shape = 'u8[262144]{0}', space=vmem, size = 0x40000, scoped, tag = 'input window, operand 11, single buffered']
    #allocation21 [shape = 's32[1]{0}', space=sflag, size = 0x4, scoped, tag = 'scoped memory for tpu_custom_call.1']
    #allocation22 [shape = 'u8[2048]{0}', space=vmem, size = 0x800, scoped, tag = 'output window, operand 0']
    #allocation23 [shape = 'u8[4096]{0}', space=vmem, size = 0x1000, scoped, tag = 'output window, operand 3, single buffered']
    #allocation24 [shape = 's32[1]{0}', space=sflag, size = 0x4, scoped, tag = 'scoped memory for tpu_custom_call.1']
    %28 = vsyncpa [#allocation6], 0
    %s29 = scalar_lea.sflag [#allocation6], 1
    %30 = vsyncpa %s29, 0
    %31 = vsyncpa [#allocation9], 0
    %s32 = scalar_lea.sflag [#allocation9], 1
    %33 = vsyncpa %s32, 0
    %34 = vsyncpa [#allocation12], 0
    %s35 = scalar_lea.sflag [#allocation12], 1
    %36 = vsyncpa %s35, 0
    %37 = vsyncpa [#allocation15], 0
    %38 = vsyncpa [#allocation18], 0
    %39 = vsyncpa [#allocation21], 0
    %40 = vsyncpa [#allocation7], 0
    %s41 = scalar_lea.sflag [#allocation7], 1
    %42 = vsyncpa %s41, 0
    %43 = vsyncpa [#allocation24], 0
    loop: start=0, step=1, limit=5
    $region2: #{tpu_custom_call.1} parent=1 // loop_pre_header
      _
    $region3: #{tpu_custom_call.1} parent=1 // loop_header
      %s45 = sphi 0, %s49
      %p46 = scmp.ge.s32.totalorder %s45, 5
      %s55 = sphi 0, %s57
      %s58 = sphi 0, %s55
      %s59 = sphi 0, %s58
      %s75 = sphi 0, %s59
      %s81 = sphi 0, %s83
      %s84 = sphi 0, %s81
      %s85 = sphi 0, %s84
      %s101 = sphi 0, %s85
      %s107 = sphi 0, %s109
      %s110 = sphi 0, %s107
      %s111 = sphi 0, %s110
      %s127 = sphi 0, %s111
      %s133 = sphi 0, %s135
      %s136 = sphi 0, %s133
      %s137 = sphi 0, %s136
      %s153 = sphi 0, %s137
      %s157 = sphi 0, %s157
      %s159 = sphi 0, %s157
      %s160 = sphi 0, %s159
      %s174 = sphi 0, %s160
      %s178 = sphi 0, %s178
      %s180 = sphi 0, %s178
      %s181 = sphi 0, %s180
      %s195 = sphi 0, %s181
      %s199 = sphi 0, %s199
      %s201 = sphi 0, %s199
      %s202 = sphi 0, %s201
      %s216 = sphi 0, %s202
      %s220 = sphi 0, %s220
      %s222 = sphi 0, %s220
      %s223 = sphi 0, %s222
      %s237 = sphi 0, %s223
      %s241 = sphi 0, %s241
      %s243 = sphi 0, %s241
      %s244 = sphi 0, %s243
      %s258 = sphi 0, %s244
      %s262 = sphi 0, %s262
      %s264 = sphi 0, %s262
      %s265 = sphi 0, %s264
      %s279 = sphi 0, %s265
      %s283 = sphi 0, %s283
      %s285 = sphi 0, %s283
      %s286 = sphi 0, %s285
      %s300 = sphi 0, %s286
      %s304 = sphi 0, %s304
      %s306 = sphi 0, %s304
      %s307 = sphi 0, %s306
      %s321 = sphi 0, %s307
      %s325 = sphi 0, %s325
      %s327 = sphi 0, %s325
      %s328 = sphi 0, %s327
      %s342 = sphi 0, %s328
      %s346 = sphi 0, %s346
      %s348 = sphi 0, %s346
      %s349 = sphi 0, %s348
      %s363 = sphi 0, %s349
      %s367 = sphi 0, %s367
      %s369 = sphi 0, %s367
      %s370 = sphi 0, %s369
      %s384 = sphi 0, %s370
      %s388 = sphi 0, %s388
      %s390 = sphi 0, %s388
      %s391 = sphi 0, %s390
      %s405 = sphi 0, %s391
      %s409 = sphi 0, %s409
      %s411 = sphi 0, %s409
      %s412 = sphi 0, %s411
      %s426 = sphi 0, %s412
      %s432 = sphi 0, %s434
      %s435 = sphi 0, %s432
      %s436 = sphi 0, %s435
      %s452 = sphi 0, %s436
      %s456 = sphi 0, %s456
      %s458 = sphi 0, %s456
      %s459 = sphi 0, %s458
      %s473 = sphi 0, %s459
      %s477 = sphi 0, %s477
      %s479 = sphi 0, %s477
      %s480 = sphi 0, %s479
      %s494 = sphi 0, %s480
      %s498 = sphi 0, %s498
      %s500 = sphi 0, %s498
      %s501 = sphi 0, %s500
      %s515 = sphi 0, %s501
      %s519 = sphi 0, %s519
      %s521 = sphi 0, %s519
      %s522 = sphi 0, %s521
      %s536 = sphi 0, %s522
      %s540 = sphi 0, %s540
      %s542 = sphi 0, %s540
      %s543 = sphi 0, %s542
      %s557 = sphi 0, %s543
    $region4: #{tpu_custom_call.1} parent=1 // loop_header_branch
      %48 = sbr.rel (%p46) target = $region8
    $region5: #{tpu_custom_call.1} parent=1 // loop_body
      %s50 = ssub.s32 %s45, 1
      %s51 = ssub.s32 %s45, 2
      %s52 = sadd.s32 %s45, 1
      %s53 = ssub.s32 %s45, %s52
      %p54 = scmp.eq.s32.totalorder %s53, 0
      %s56 = sadd.s32 %s55, 1
      %s57 = scalar_select %p54, %s55, %s56
      %p60 = pneg %p54
      %p61 = scmp.eq.s32.totalorder %s45, 2
      %p62 = por %p60, %p61
      %p63 = scmp.ne.s32.totalorder %s55, %s58
      %p64 = scmp.eq.s32.totalorder %s45, 0
      %p65 = por %p63, %p64
      %p66 = scmp.ne.s32.totalorder %s55, %s58
      %p67 = scmp.eq.s32.totalorder %s50, 2
      %p68 = por %p66, %p67
      %p69 = scmp.ne.s32.totalorder %s58, %s59
      %p70 = scmp.eq.s32.totalorder %s50, 0
      %p71 = por %p69, %p70
      %p72 = scmp.ne.s32.totalorder %s58, %s59
      %p73 = scmp.eq.s32.totalorder %s51, 2
      %p74 = por %p72, %p73
      %p76 = scmp.ne.s32.totalorder %s59, %s75
      %p77 = scmp.eq.s32.totalorder %s51, 0
      %p78 = por %p76, %p77
      %s79 = ssub.s32 %s45, %s52
      %p80 = scmp.eq.s32.totalorder %s79, 0
      %s82 = sadd.s32 %s81, 1
      %s83 = scalar_select %p80, %s81, %s82
      %p86 = pneg %p80
      %p87 = scmp.eq.s32.totalorder %s45, 2
      %p88 = por %p86, %p87
      %p89 = scmp.ne.s32.totalorder %s81, %s84
      %p90 = scmp.eq.s32.totalorder %s45, 0
      %p91 = por %p89, %p90
      %p92 = scmp.ne.s32.totalorder %s81, %s84
      %p93 = scmp.eq.s32.totalorder %s50, 2
      %p94 = por %p92, %p93
      %p95 = scmp.ne.s32.totalorder %s84, %s85
      %p96 = scmp.eq.s32.totalorder %s50, 0
      %p97 = por %p95, %p96
      %p98 = scmp.ne.s32.totalorder %s84, %s85
      %p99 = scmp.eq.s32.totalorder %s51, 2
      %p100 = por %p98, %p99
      %p102 = scmp.ne.s32.totalorder %s85, %s101
      %p103 = scmp.eq.s32.totalorder %s51, 0
      %p104 = por %p102, %p103
      %s105 = ssub.s32 %s45, %s52
      %p106 = scmp.eq.s32.totalorder %s105, 0
      %s108 = sadd.s32 %s107, 1
      %s109 = scalar_select %p106, %s107, %s108
      %p112 = pneg %p106
      %p113 = scmp.eq.s32.totalorder %s45, 2
      %p114 = por %p112, %p113
      %p115 = scmp.ne.s32.totalorder %s107, %s110
      %p116 = scmp.eq.s32.totalorder %s45, 0
      %p117 = por %p115, %p116
      %p118 = scmp.ne.s32.totalorder %s107, %s110
      %p119 = scmp.eq.s32.totalorder %s50, 2
      %p120 = por %p118, %p119
      %p121 = scmp.ne.s32.totalorder %s110, %s111
      %p122 = scmp.eq.s32.totalorder %s50, 0
      %p123 = por %p121, %p122
      %p124 = scmp.ne.s32.totalorder %s110, %s111
      %p125 = scmp.eq.s32.totalorder %s51, 2
      %p126 = por %p124, %p125
      %p128 = scmp.ne.s32.totalorder %s111, %s127
      %p129 = scmp.eq.s32.totalorder %s51, 0
      %p130 = por %p128, %p129
      %s131 = ssub.s32 %s45, %s52
      %p132 = scmp.eq.s32.totalorder %s131, 0
      %s134 = sadd.s32 %s133, 1
      %s135 = scalar_select %p132, %s133, %s134
      %p138 = pneg %p132
      %p139 = scmp.eq.s32.totalorder %s45, 2
      %p140 = por %p138, %p139
      %p141 = scmp.ne.s32.totalorder %s133, %s136
      %p142 = scmp.eq.s32.totalorder %s45, 0
      %p143 = por %p141, %p142
      %p144 = scmp.ne.s32.totalorder %s133, %s136
      %p145 = scmp.eq.s32.totalorder %s50, 2
      %p146 = por %p144, %p145
      %p147 = scmp.ne.s32.totalorder %s136, %s137
      %p148 = scmp.eq.s32.totalorder %s50, 0
      %p149 = por %p147, %p148
      %p150 = scmp.ne.s32.totalorder %s136, %s137
      %p151 = scmp.eq.s32.totalorder %s51, 2
      %p152 = por %p150, %p151
      %p154 = scmp.ne.s32.totalorder %s137, %s153
      %p155 = scmp.eq.s32.totalorder %s51, 0
      %p156 = por %p154, %p155
      %s158 = sadd.s32 %s157, 1
      %p161 = scmp.eq.s32.totalorder %s45, 2
      %p162 = scmp.ne.s32.totalorder %s157, %s159
      %p163 = scmp.eq.s32.totalorder %s45, 0
      %p164 = por %p162, %p163
      %p165 = scmp.ne.s32.totalorder %s157, %s159
      %p166 = scmp.eq.s32.totalorder %s50, 2
      %p167 = por %p165, %p166
      %p168 = scmp.ne.s32.totalorder %s159, %s160
      %p169 = scmp.eq.s32.totalorder %s50, 0
      %p170 = por %p168, %p169
      %p171 = scmp.ne.s32.totalorder %s159, %s160
      %p172 = scmp.eq.s32.totalorder %s51, 2
      %p173 = por %p171, %p172
      %p175 = scmp.ne.s32.totalorder %s160, %s174
      %p176 = scmp.eq.s32.totalorder %s51, 0
      %p177 = por %p175, %p176
      %s179 = sadd.s32 %s178, 1
      %p182 = scmp.eq.s32.totalorder %s45, 2
      %p183 = scmp.ne.s32.totalorder %s178, %s180
      %p184 = scmp.eq.s32.totalorder %s45, 0
      %p185 = por %p183, %p184
      %p186 = scmp.ne.s32.totalorder %s178, %s180
      %p187 = scmp.eq.s32.totalorder %s50, 2
      %p188 = por %p186, %p187
      %p189 = scmp.ne.s32.totalorder %s180, %s181
      %p190 = scmp.eq.s32.totalorder %s50, 0
      %p191 = por %p189, %p190
      %p192 = scmp.ne.s32.totalorder %s180, %s181
      %p193 = scmp.eq.s32.totalorder %s51, 2
      %p194 = por %p192, %p193
      %p196 = scmp.ne.s32.totalorder %s181, %s195
      %p197 = scmp.eq.s32.totalorder %s51, 0
      %p198 = por %p196, %p197
      %s200 = sadd.s32 %s199, 1
      %p203 = scmp.eq.s32.totalorder %s45, 2
      %p204 = scmp.ne.s32.totalorder %s199, %s201
      %p205 = scmp.eq.s32.totalorder %s45, 0
      %p206 = por %p204, %p205
      %p207 = scmp.ne.s32.totalorder %s199, %s201
      %p208 = scmp.eq.s32.totalorder %s50, 2
      %p209 = por %p207, %p208
      %p210 = scmp.ne.s32.totalorder %s201, %s202
      %p211 = scmp.eq.s32.totalorder %s50, 0
      %p212 = por %p210, %p211
      %p213 = scmp.ne.s32.totalorder %s201, %s202
      %p214 = scmp.eq.s32.totalorder %s51, 2
      %p215 = por %p213, %p214
      %p217 = scmp.ne.s32.totalorder %s202, %s216
      %p218 = scmp.eq.s32.totalorder %s51, 0
      %p219 = por %p217, %p218
      %s221 = sadd.s32 %s220, 1
      %p224 = scmp.eq.s32.totalorder %s45, 2
      %p225 = scmp.ne.s32.totalorder %s220, %s222
      %p226 = scmp.eq.s32.totalorder %s45, 0
      %p227 = por %p225, %p226
      %p228 = scmp.ne.s32.totalorder %s220, %s222
      %p229 = scmp.eq.s32.totalorder %s50, 2
      %p230 = por %p228, %p229
      %p231 = scmp.ne.s32.totalorder %s222, %s223
      %p232 = scmp.eq.s32.totalorder %s50, 0
      %p233 = por %p231, %p232
      %p234 = scmp.ne.s32.totalorder %s222, %s223
      %p235 = scmp.eq.s32.totalorder %s51, 2
      %p236 = por %p234, %p235
      %p238 = scmp.ne.s32.totalorder %s223, %s237
      %p239 = scmp.eq.s32.totalorder %s51, 0
      %p240 = por %p238, %p239
      %s242 = sadd.s32 %s241, 1
      %p245 = scmp.eq.s32.totalorder %s45, 2
      %p246 = scmp.ne.s32.totalorder %s241, %s243
      %p247 = scmp.eq.s32.totalorder %s45, 0
      %p248 = por %p246, %p247
      %p249 = scmp.ne.s32.totalorder %s241, %s243
      %p250 = scmp.eq.s32.totalorder %s50, 2
      %p251 = por %p249, %p250
      %p252 = scmp.ne.s32.totalorder %s243, %s244
      %p253 = scmp.eq.s32.totalorder %s50, 0
      %p254 = por %p252, %p253
      %p255 = scmp.ne.s32.totalorder %s243, %s244
      %p256 = scmp.eq.s32.totalorder %s51, 2
      %p257 = por %p255, %p256
      %p259 = scmp.ne.s32.totalorder %s244, %s258
      %p260 = scmp.eq.s32.totalorder %s51, 0
      %p261 = por %p259, %p260
      %s263 = sadd.s32 %s262, 1
      %p266 = scmp.eq.s32.totalorder %s45, 2
      %p267 = scmp.ne.s32.totalorder %s262, %s264
      %p268 = scmp.eq.s32.totalorder %s45, 0
      %p269 = por %p267, %p268
      %p270 = scmp.ne.s32.totalorder %s262, %s264
      %p271 = scmp.eq.s32.totalorder %s50, 2
      %p272 = por %p270, %p271
      %p273 = scmp.ne.s32.totalorder %s264, %s265
      %p274 = scmp.eq.s32.totalorder %s50, 0
      %p275 = por %p273, %p274
      %p276 = scmp.ne.s32.totalorder %s264, %s265
      %p277 = scmp.eq.s32.totalorder %s51, 2
      %p278 = por %p276, %p277
      %p280 = scmp.ne.s32.totalorder %s265, %s279
      %p281 = scmp.eq.s32.totalorder %s51, 0
      %p282 = por %p280, %p281
      %s284 = sadd.s32 %s283, 1
      %p287 = scmp.eq.s32.totalorder %s45, 2
      %p288 = scmp.ne.s32.totalorder %s283, %s285
      %p289 = scmp.eq.s32.totalorder %s45, 0
      %p290 = por %p288, %p289
      %p291 = scmp.ne.s32.totalorder %s283, %s285
      %p292 = scmp.eq.s32.totalorder %s50, 2
      %p293 = por %p291, %p292
      %p294 = scmp.ne.s32.totalorder %s285, %s286
      %p295 = scmp.eq.s32.totalorder %s50, 0
      %p296 = por %p294, %p295
      %p297 = scmp.ne.s32.totalorder %s285, %s286
      %p298 = scmp.eq.s32.totalorder %s51, 2
      %p299 = por %p297, %p298
      %p301 = scmp.ne.s32.totalorder %s286, %s300
      %p302 = scmp.eq.s32.totalorder %s51, 0
      %p303 = por %p301, %p302
      %s305 = sadd.s32 %s304, 1
      %p308 = scmp.eq.s32.totalorder %s45, 2
      %p309 = scmp.ne.s32.totalorder %s304, %s306
      %p310 = scmp.eq.s32.totalorder %s45, 0
      %p311 = por %p309, %p310
      %p312 = scmp.ne.s32.totalorder %s304, %s306
      %p313 = scmp.eq.s32.totalorder %s50, 2
      %p314 = por %p312, %p313
      %p315 = scmp.ne.s32.totalorder %s306, %s307
      %p316 = scmp.eq.s32.totalorder %s50, 0
      %p317 = por %p315, %p316
      %p318 = scmp.ne.s32.totalorder %s306, %s307
      %p319 = scmp.eq.s32.totalorder %s51, 2
      %p320 = por %p318, %p319
      %p322 = scmp.ne.s32.totalorder %s307, %s321
      %p323 = scmp.eq.s32.totalorder %s51, 0
      %p324 = por %p322, %p323
      %s326 = sadd.s32 %s325, 1
      %p329 = scmp.eq.s32.totalorder %s45, 2
      %p330 = scmp.ne.s32.totalorder %s325, %s327
      %p331 = scmp.eq.s32.totalorder %s45, 0
      %p332 = por %p330, %p331
      %p333 = scmp.ne.s32.totalorder %s325, %s327
      %p334 = scmp.eq.s32.totalorder %s50, 2
      %p335 = por %p333, %p334
      %p336 = scmp.ne.s32.totalorder %s327, %s328
      %p337 = scmp.eq.s32.totalorder %s50, 0
      %p338 = por %p336, %p337
      %p339 = scmp.ne.s32.totalorder %s327, %s328
      %p340 = scmp.eq.s32.totalorder %s51, 2
      %p341 = por %p339, %p340
      %p343 = scmp.ne.s32.totalorder %s328, %s342
      %p344 = scmp.eq.s32.totalorder %s51, 0
      %p345 = por %p343, %p344
      %s347 = sadd.s32 %s346, 1
      %p350 = scmp.eq.s32.totalorder %s45, 2
      %p351 = scmp.ne.s32.totalorder %s346, %s348
      %p352 = scmp.eq.s32.totalorder %s45, 0
      %p353 = por %p351, %p352
      %p354 = scmp.ne.s32.totalorder %s346, %s348
      %p355 = scmp.eq.s32.totalorder %s50, 2
      %p356 = por %p354, %p355
      %p357 = scmp.ne.s32.totalorder %s348, %s349
      %p358 = scmp.eq.s32.totalorder %s50, 0
      %p359 = por %p357, %p358
      %p360 = scmp.ne.s32.totalorder %s348, %s349
      %p361 = scmp.eq.s32.totalorder %s51, 2
      %p362 = por %p360, %p361
      %p364 = scmp.ne.s32.totalorder %s349, %s363
      %p365 = scmp.eq.s32.totalorder %s51, 0
      %p366 = por %p364, %p365
      %s368 = sadd.s32 %s367, 1
      %p371 = scmp.eq.s32.totalorder %s45, 2
      %p372 = scmp.ne.s32.totalorder %s367, %s369
      %p373 = scmp.eq.s32.totalorder %s45, 0
      %p374 = por %p372, %p373
      %p375 = scmp.ne.s32.totalorder %s367, %s369
      %p376 = scmp.eq.s32.totalorder %s50, 2
      %p377 = por %p375, %p376
      %p378 = scmp.ne.s32.totalorder %s369, %s370
      %p379 = scmp.eq.s32.totalorder %s50, 0
      %p380 = por %p378, %p379
      %p381 = scmp.ne.s32.totalorder %s369, %s370
      %p382 = scmp.eq.s32.totalorder %s51, 2
      %p383 = por %p381, %p382
      %p385 = scmp.ne.s32.totalorder %s370, %s384
      %p386 = scmp.eq.s32.totalorder %s51, 0
      %p387 = por %p385, %p386
      %s389 = sadd.s32 %s388, 1
      %p392 = scmp.eq.s32.totalorder %s45, 2
      %p393 = scmp.ne.s32.totalorder %s388, %s390
      %p394 = scmp.eq.s32.totalorder %s45, 0
      %p395 = por %p393, %p394
      %p396 = scmp.ne.s32.totalorder %s388, %s390
      %p397 = scmp.eq.s32.totalorder %s50, 2
      %p398 = por %p396, %p397
      %p399 = scmp.ne.s32.totalorder %s390, %s391
      %p400 = scmp.eq.s32.totalorder %s50, 0
      %p401 = por %p399, %p400
      %p402 = scmp.ne.s32.totalorder %s390, %s391
      %p403 = scmp.eq.s32.totalorder %s51, 2
      %p404 = por %p402, %p403
      %p406 = scmp.ne.s32.totalorder %s391, %s405
      %p407 = scmp.eq.s32.totalorder %s51, 0
      %p408 = por %p406, %p407
      %s410 = sadd.s32 %s409, 1
      %p413 = scmp.eq.s32.totalorder %s45, 2
      %p414 = scmp.ne.s32.totalorder %s409, %s411
      %p415 = scmp.eq.s32.totalorder %s45, 0
      %p416 = por %p414, %p415
      %p417 = scmp.ne.s32.totalorder %s409, %s411
      %p418 = scmp.eq.s32.totalorder %s50, 2
      %p419 = por %p417, %p418
      %p420 = scmp.ne.s32.totalorder %s411, %s412
      %p421 = scmp.eq.s32.totalorder %s50, 0
      %p422 = por %p420, %p421
      %p423 = scmp.ne.s32.totalorder %s411, %s412
      %p424 = scmp.eq.s32.totalorder %s51, 2
      %p425 = por %p423, %p424
      %p427 = scmp.ne.s32.totalorder %s412, %s426
      %p428 = scmp.eq.s32.totalorder %s51, 0
      %p429 = por %p427, %p428
      %s430 = ssub.s32 %s45, %s52
      %p431 = scmp.eq.s32.totalorder %s430, 0
      %s433 = sadd.s32 %s432, 1
      %s434 = scalar_select %p431, %s432, %s433
      %p437 = pneg %p431
      %p438 = scmp.eq.s32.totalorder %s45, 2
      %p439 = por %p437, %p438
      %p440 = scmp.ne.s32.totalorder %s432, %s435
      %p441 = scmp.eq.s32.totalorder %s45, 0
      %p442 = por %p440, %p441
      %p443 = scmp.ne.s32.totalorder %s432, %s435
      %p444 = scmp.eq.s32.totalorder %s50, 2
      %p445 = por %p443, %p444
      %p446 = scmp.ne.s32.totalorder %s435, %s436
      %p447 = scmp.eq.s32.totalorder %s50, 0
      %p448 = por %p446, %p447
      %p449 = scmp.ne.s32.totalorder %s435, %s436
      %p450 = scmp.eq.s32.totalorder %s51, 2
      %p451 = por %p449, %p450
      %p453 = scmp.ne.s32.totalorder %s436, %s452
      %p454 = scmp.eq.s32.totalorder %s51, 0
      %p455 = por %p453, %p454
      %s457 = sadd.s32 %s456, 1
      %p460 = scmp.eq.s32.totalorder %s45, 2
      %p461 = scmp.ne.s32.totalorder %s456, %s458
      %p462 = scmp.eq.s32.totalorder %s45, 0
      %p463 = por %p461, %p462
      %p464 = scmp.ne.s32.totalorder %s456, %s458
      %p465 = scmp.eq.s32.totalorder %s50, 2
      %p466 = por %p464, %p465
      %p467 = scmp.ne.s32.totalorder %s458, %s459
      %p468 = scmp.eq.s32.totalorder %s50, 0
      %p469 = por %p467, %p468
      %p470 = scmp.ne.s32.totalorder %s458, %s459
      %p471 = scmp.eq.s32.totalorder %s51, 2
      %p472 = por %p470, %p471
      %p474 = scmp.ne.s32.totalorder %s459, %s473
      %p475 = scmp.eq.s32.totalorder %s51, 0
      %p476 = por %p474, %p475
      %s478 = sadd.s32 %s477, 1
      %p481 = scmp.eq.s32.totalorder %s45, 2
      %p482 = scmp.ne.s32.totalorder %s477, %s479
      %p483 = scmp.eq.s32.totalorder %s45, 0
      %p484 = por %p482, %p483
      %p485 = scmp.ne.s32.totalorder %s477, %s479
      %p486 = scmp.eq.s32.totalorder %s50, 2
      %p487 = por %p485, %p486
      %p488 = scmp.ne.s32.totalorder %s479, %s480
      %p489 = scmp.eq.s32.totalorder %s50, 0
      %p490 = por %p488, %p489
      %p491 = scmp.ne.s32.totalorder %s479, %s480
      %p492 = scmp.eq.s32.totalorder %s51, 2
      %p493 = por %p491, %p492
      %p495 = scmp.ne.s32.totalorder %s480, %s494
      %p496 = scmp.eq.s32.totalorder %s51, 0
      %p497 = por %p495, %p496
      %s499 = sadd.s32 %s498, 1
      %p502 = scmp.eq.s32.totalorder %s45, 2
      %p503 = scmp.ne.s32.totalorder %s498, %s500
      %p504 = scmp.eq.s32.totalorder %s45, 0
      %p505 = por %p503, %p504
      %p506 = scmp.ne.s32.totalorder %s498, %s500
      %p507 = scmp.eq.s32.totalorder %s50, 2
      %p508 = por %p506, %p507
      %p509 = scmp.ne.s32.totalorder %s500, %s501
      %p510 = scmp.eq.s32.totalorder %s50, 0
      %p511 = por %p509, %p510
      %p512 = scmp.ne.s32.totalorder %s500, %s501
      %p513 = scmp.eq.s32.totalorder %s51, 2
      %p514 = por %p512, %p513
      %p516 = scmp.ne.s32.totalorder %s501, %s515
      %p517 = scmp.eq.s32.totalorder %s51, 0
      %p518 = por %p516, %p517
      %s520 = sadd.s32 %s519, 1
      %p523 = scmp.eq.s32.totalorder %s45, 2
      %p524 = scmp.ne.s32.totalorder %s519, %s521
      %p525 = scmp.eq.s32.totalorder %s45, 0
      %p526 = por %p524, %p525
      %p527 = scmp.ne.s32.totalorder %s519, %s521
      %p528 = scmp.eq.s32.totalorder %s50, 2
      %p529 = por %p527, %p528
      %p530 = scmp.ne.s32.totalorder %s521, %s522
      %p531 = scmp.eq.s32.totalorder %s50, 0
      %p532 = por %p530, %p531
      %p533 = scmp.ne.s32.totalorder %s521, %s522
      %p534 = scmp.eq.s32.totalorder %s51, 2
      %p535 = por %p533, %p534
      %p537 = scmp.ne.s32.totalorder %s522, %s536
      %p538 = scmp.eq.s32.totalorder %s51, 0
      %p539 = por %p537, %p538
      %s541 = sadd.s32 %s540, 1
      %p544 = scmp.eq.s32.totalorder %s45, 2
      %p545 = scmp.ne.s32.totalorder %s540, %s542
      %p546 = scmp.eq.s32.totalorder %s45, 0
      %p547 = por %p545, %p546
      %p548 = scmp.ne.s32.totalorder %s540, %s542
      %p549 = scmp.eq.s32.totalorder %s50, 2
      %p550 = por %p548, %p549
      %p551 = scmp.ne.s32.totalorder %s542, %s543
      %p552 = scmp.eq.s32.totalorder %s50, 0
      %p553 = por %p551, %p552
      %p554 = scmp.ne.s32.totalorder %s542, %s543
      %p555 = scmp.eq.s32.totalorder %s51, 2
      %p556 = por %p554, %p555
      %p558 = scmp.ne.s32.totalorder %s543, %s557
      %p559 = scmp.eq.s32.totalorder %s51, 0
      %p560 = por %p558, %p559
      %p561 = scmp.le.s32.totalorder 1, %s45
      %p562 = scmp.lt.s32.totalorder %s45, 4
      %p563 = pnand %p561, %p562
      %p564 = pneg %p563
      // Predicated region
      $region9: #{tpu_custom_call.1} parent=5 // pred_check
        _
      $region10: #{tpu_custom_call.1} parent=5 // pred_check_branch
        %566 = sbr.rel (%p563) target = $region12
      $region11: #{tpu_custom_call.1} parent=5 // pred_region
        %s567 = ssub.s32 %s45, 1
        // Predicated region
        $region13: #{tpu_custom_call.1} parent=11 // pred_check
          %p568 = pneg %p170
        $region14: #{tpu_custom_call.1} parent=11 // pred_check_branch
          %570 = sbr.rel (%p568) target = $region16
        $region15: #{tpu_custom_call.1} parent=11 // pred_region
          %s572 = ssub.s32 4096, 4096
          %573 = vsyncadd [#allocation12], %s572
          %s574 = sshll.u32 [#allocation13], 4
          %s575 = int_to_ptr.vmem [resolvable:$true] %s574
          %580 = dma.hbm_to_vmem [thread:$0]  %s4, 4096, %s575, [#allocation12], 256, 256, 16
        $region16: #{tpu_custom_call.1} parent=11 // pred_fallthru
          _
        // Predicated region
        $region17: #{tpu_custom_call.1} parent=11 // pred_check
          %p581 = pneg %p191
        $region18: #{tpu_custom_call.1} parent=11 // pred_check_branch
          %583 = sbr.rel (%p581) target = $region20
        $region19: #{tpu_custom_call.1} parent=11 // pred_region
          %s585 = ssub.s32 4096, 4096
          %586 = vsyncadd [#allocation15], %s585
          %s587 = sshll.u32 [#allocation14], 4
          %s588 = int_to_ptr.vmem [resolvable:$true] %s587
          %593 = dma.hbm_to_vmem [thread:$0]  %s5, 4096, %s588, [#allocation15], 256, 256, 16
        $region20: #{tpu_custom_call.1} parent=11 // pred_fallthru
          _
        // Predicated region
        $region21: #{tpu_custom_call.1} parent=11 // pred_check
          %p594 = pneg %p212
        $region22: #{tpu_custom_call.1} parent=11 // pred_check_branch
          %596 = sbr.rel (%p594) target = $region24
        $region23: #{tpu_custom_call.1} parent=11 // pred_region
          %s598 = ssub.s32 8192, 8192
          %599 = vsyncadd [#allocation15], %s598
          %s600 = sshll.u32 [#allocation16], 4
          %s601 = int_to_ptr.vmem [resolvable:$true] %s600
          %606 = dma.hbm_to_vmem [thread:$0]  %s6, 8192, %s601, [#allocation15], 256, 256, 16
        $region24: #{tpu_custom_call.1} parent=11 // pred_fallthru
          _
        // Predicated region
        $region25: #{tpu_custom_call.1} parent=11 // pred_check
          %p607 = pneg %p233
        $region26: #{tpu_custom_call.1} parent=11 // pred_check_branch
          %609 = sbr.rel (%p607) target = $region28
        $region27: #{tpu_custom_call.1} parent=11 // pred_region
          %s611 = ssub.s32 4096, 4096
          %612 = vsyncadd [#allocation18], %s611
          %s613 = sshll.u32 [#allocation17], 4
          %s614 = int_to_ptr.vmem [resolvable:$true] %s613
          %619 = dma.hbm_to_vmem [thread:$0]  %s7, 4096, %s614, [#allocation18], 256, 256, 16
        $region28: #{tpu_custom_call.1} parent=11 // pred_fallthru
          _
        // Predicated region
        $region29: #{tpu_custom_call.1} parent=11 // pred_check
          %p620 = pneg %p254
        $region30: #{tpu_custom_call.1} parent=11 // pred_check_branch
          %622 = sbr.rel (%p620) target = $region32
        $region31: #{tpu_custom_call.1} parent=11 // pred_region
          _
        $region32: #{tpu_custom_call.1} parent=11 // pred_fallthru
          _
        // Predicated region
        $region33: #{tpu_custom_call.1} parent=11 // pred_check
          %p623 = pneg %p275
        $region34: #{tpu_custom_call.1} parent=11 // pred_check_branch
          %625 = sbr.rel (%p623) target = $region36
        $region35: #{tpu_custom_call.1} parent=11 // pred_region
          %s627 = ssub.s32 8192, 8192
          %628 = vsyncadd [#allocation18], %s627
          %s629 = sshll.u32 [#allocation19], 4
          %s630 = int_to_ptr.vmem [resolvable:$true] %s629
          %635 = dma.hbm_to_vmem [thread:$0]  %s9, 8192, %s630, [#allocation18], 128, 128, 8
        $region36: #{tpu_custom_call.1} parent=11 // pred_fallthru
          _
        // Predicated region
        $region37: #{tpu_custom_call.1} parent=11 // pred_check
          %p636 = pneg %p296
        $region38: #{tpu_custom_call.1} parent=11 // pred_check_branch
          %638 = sbr.rel (%p636) target = $region40
        $region39: #{tpu_custom_call.1} parent=11 // pred_region
          _
        $region40: #{tpu_custom_call.1} parent=11 // pred_fallthru
          _
        // Predicated region
        $region41: #{tpu_custom_call.1} parent=11 // pred_check
          %p639 = pneg %p317
        $region42: #{tpu_custom_call.1} parent=11 // pred_check_branch
          %641 = sbr.rel (%p639) target = $region44
        $region43: #{tpu_custom_call.1} parent=11 // pred_region
          %s643 = ssub.s32 8192, 8192
          %644 = vsyncadd [#allocation21], %s643
          %s645 = sshll.u32 [#allocation20], 4
          %s646 = int_to_ptr.vmem [resolvable:$true] %s645
          %651 = dma.hbm_to_vmem [thread:$0]  %s11, 8192, %s646, [#allocation21], 128, 128, 8
        $region44: #{tpu_custom_call.1} parent=11 // pred_fallthru
          _
        // Predicated region
        $region45: #{tpu_custom_call.1} parent=11 // pred_check
          %p652 = pneg %p338
        $region46: #{tpu_custom_call.1} parent=11 // pred_check_branch
          %654 = sbr.rel (%p652) target = $region48
        $region47: #{tpu_custom_call.1} parent=11 // pred_region
          _
        $region48: #{tpu_custom_call.1} parent=11 // pred_fallthru
          _
        // Predicated region
        $region49: #{tpu_custom_call.1} parent=11 // pred_check
          %p655 = pneg %p359
        $region50: #{tpu_custom_call.1} parent=11 // pred_check_branch
          %657 = sbr.rel (%p655) target = $region52
        $region51: #{tpu_custom_call.1} parent=11 // pred_region
          _
        $region52: #{tpu_custom_call.1} parent=11 // pred_fallthru
          _
        // Predicated region
        $region53: #{tpu_custom_call.1} parent=11 // pred_check
          %p658 = pneg %p380
        $region54: #{tpu_custom_call.1} parent=11 // pred_check_branch
          %660 = sbr.rel (%p658) target = $region56
        $region55: #{tpu_custom_call.1} parent=11 // pred_region
          _
        $region56: #{tpu_custom_call.1} parent=11 // pred_fallthru
          _
        // Predicated region
        $region57: #{tpu_custom_call.1} parent=11 // pred_check
          %p661 = pneg %p401
        $region58: #{tpu_custom_call.1} parent=11 // pred_check_branch
          %663 = sbr.rel (%p661) target = $region60
        $region59: #{tpu_custom_call.1} parent=11 // pred_region
          _
        $region60: #{tpu_custom_call.1} parent=11 // pred_fallthru
          _
        // Predicated region
        $region61: #{tpu_custom_call.1} parent=11 // pred_check
          %p664 = pneg %p422
        $region62: #{tpu_custom_call.1} parent=11 // pred_check_branch
          %666 = sbr.rel (%p664) target = $region64
        $region63: #{tpu_custom_call.1} parent=11 // pred_region
          _
        $region64: #{tpu_custom_call.1} parent=11 // pred_fallthru
          _
      $region12: #{tpu_custom_call.1} parent=5 // pred_fallthru
        _
      %p667 = scmp.lt.s32.totalorder %s45, 3
      // Predicated region
      $region65: #{tpu_custom_call.1} parent=5 // pred_check
        %p668 = pneg %p667
      $region66: #{tpu_custom_call.1} parent=5 // pred_check_branch
        %670 = sbr.rel (%p668) target = $region68
      $region67: #{tpu_custom_call.1} parent=5 // pred_region
        // Predicated region
        $region69: #{tpu_custom_call.1} parent=67 // pred_check
          %p671 = pneg %p65
        $region70: #{tpu_custom_call.1} parent=67 // pred_check_branch
          %673 = sbr.rel (%p671) target = $region72
        $region71: #{tpu_custom_call.1} parent=67 // pred_region
          %s674 = sand.u32 %s55, 1
          %s675 = scalar_lea.sflag [#allocation6], %s674
          %s676 = sand.u32 %s55, 1
          %s677 = smul.addr %s676, 64
          %s678 = scalar_lea.vmem [#allocation5], %s677
          %s679 = smul.u32 16, %s45
          %s680 = ssub.s32 38, %s679
          %p681 = scmp.lt.s32.totalorder %s680, 16
          %s682 = scalar_select %p681, %s680, 16
          %s683 = smul.u32 64, %s682
          %s685 = ssub.s32 1024, %s683
          %686 = vsyncadd %s675, %s685
          %p687 = scmp.ne.s32.totalorder 0, %s683
          %s688 = smul.addr %s679, 64
          %s689 = scalar_lea.hbm %s0, %s688
          %s690 = smul.u32 4, %s682
          %s691 = sshll.u32 %s678, 4
          %s692 = int_to_ptr.vmem [resolvable:$true] %s691
          %s693 = sshll.u32 %s690, 4
          %697 = dma.hbm_to_vmem [thread:$0]  (%p687), %s689, %s693, %s692, %s675, 64, 64, 4
        $region72: #{tpu_custom_call.1} parent=67 // pred_fallthru
          _
        // Predicated region
        $region73: #{tpu_custom_call.1} parent=67 // pred_check
          %p698 = pneg %p91
        $region74: #{tpu_custom_call.1} parent=67 // pred_check_branch
          %700 = sbr.rel (%p698) target = $region76
        $region75: #{tpu_custom_call.1} parent=67 // pred_region
          %s701 = sand.u32 %s45, 1
          %s702 = scalar_lea.sflag [#allocation9], %s701
          %s703 = sand.u32 %s81, 1
          %s704 = smul.addr %s703, 64
          %s705 = scalar_lea.vmem [#allocation8], %s704
          %s706 = smul.u32 16, %s45
          %s707 = ssub.s32 38, %s706
          %p708 = scmp.lt.s32.totalorder %s707, 16
          %s709 = scalar_select %p708, %s707, 16
          %s710 = smul.u32 64, %s709
          %s712 = ssub.s32 1024, %s710
          %713 = vsyncadd %s702, %s712
          %p714 = scmp.ne.s32.totalorder 0, %s710
          %s715 = smul.addr %s706, 64
          %s716 = scalar_lea.hbm %s1, %s715
          %s717 = smul.u32 4, %s709
          %s718 = sshll.u32 %s705, 4
          %s719 = int_to_ptr.vmem [resolvable:$true] %s718
          %s720 = sshll.u32 %s717, 4
          %724 = dma.hbm_to_vmem [thread:$0]  (%p714), %s716, %s720, %s719, %s702, 64, 64, 4
        $region76: #{tpu_custom_call.1} parent=67 // pred_fallthru
          _
        // Predicated region
        $region77: #{tpu_custom_call.1} parent=67 // pred_check
          %p725 = pneg %p117
        $region78: #{tpu_custom_call.1} parent=67 // pred_check_branch
          %727 = sbr.rel (%p725) target = $region80
        $region79: #{tpu_custom_call.1} parent=67 // pred_region
          %s728 = sand.u32 %s45, 1
          %s729 = scalar_lea.sflag [#allocation9], %s728
          %s730 = sand.u32 %s107, 1
          %s731 = smul.addr %s730, 128
          %s732 = scalar_lea.vmem [#allocation10], %s731
          %s733 = smul.u32 16, %s45
          %s734 = ssub.s32 38, %s733
          %p735 = scmp.lt.s32.totalorder %s734, 16
          %s736 = scalar_select %p735, %s734, 16
          %s737 = smul.u32 64, %s736
          %s738 = smul.u32 %s737, 2
          %s740 = ssub.s32 2048, %s738
          %741 = vsyncadd %s729, %s740
          %p742 = scmp.ne.s32.totalorder 0, %s738
          %s743 = smul.addr %s733, 2
          %s744 = smul.addr %s743, 64
          %s745 = scalar_lea.hbm %s2, %s744
          %s746 = smul.u32 8, %s736
          %s747 = sshll.u32 %s732, 4
          %s748 = int_to_ptr.vmem [resolvable:$true] %s747
          %s749 = sshll.u32 %s746, 4
          %753 = dma.hbm_to_vmem [thread:$0]  (%p742), %s745, %s749, %s748, %s729, 128, 128, 8
        $region80: #{tpu_custom_call.1} parent=67 // pred_fallthru
          _
        // Predicated region
        $region81: #{tpu_custom_call.1} parent=67 // pred_check
          %p754 = pneg %p143
        $region82: #{tpu_custom_call.1} parent=67 // pred_check_branch
          %756 = sbr.rel (%p754) target = $region84
        $region83: #{tpu_custom_call.1} parent=67 // pred_region
          %s757 = sand.u32 %s45, 1
          %s758 = scalar_lea.sflag [#allocation12], %s757
          %s759 = sand.u32 %s133, 1
          %s760 = smul.addr %s759, 64
          %s761 = scalar_lea.vmem [#allocation11], %s760
          %s762 = smul.u32 16, %s45
          %s763 = ssub.s32 38, %s762
          %p764 = scmp.lt.s32.totalorder %s763, 16
          %s765 = scalar_select %p764, %s763, 16
          %s766 = smul.u32 64, %s765
          %s768 = ssub.s32 1024, %s766
          %769 = vsyncadd %s758, %s768
          %p770 = scmp.ne.s32.totalorder 0, %s766
          %s771 = smul.addr %s762, 64
          %s772 = scalar_lea.hbm %s3, %s771
          %s773 = smul.u32 4, %s765
          %s774 = sshll.u32 %s761, 4
          %s775 = int_to_ptr.vmem [resolvable:$true] %s774
          %s776 = sshll.u32 %s773, 4
          %780 = dma.hbm_to_vmem [thread:$0]  (%p770), %s772, %s776, %s775, %s758, 64, 64, 4
        $region84: #{tpu_custom_call.1} parent=67 // pred_fallthru
          _
      $region68: #{tpu_custom_call.1} parent=5 // pred_fallthru
        _
      %p781 = scmp.le.s32.totalorder 1, %s45
      %p782 = scmp.lt.s32.totalorder %s45, 4
      %p783 = pnand %p781, %p782
      %p784 = pneg %p783
      // Predicated region
      $region85: #{tpu_custom_call.1} parent=5 // pred_check
        _
      $region86: #{tpu_custom_call.1} parent=5 // pred_check_branch
        %786 = sbr.rel (%p783) target = $region88
      $region87: #{tpu_custom_call.1} parent=5 // pred_region
        %s787 = ssub.s32 %s45, 1
        %s788 = sand.u32 %s58, 1
        %s789 = scalar_lea.sflag [#allocation6], %s788
        %s790 = sand.u32 %s58, 1
        %s791 = smul.addr %s790, 64
        %s792 = scalar_lea.vmem [#allocation5], %s791
        // Predicated region
        $region89: #{tpu_custom_call.1} parent=87 // pred_check
          %p793 = pneg %p71
        $region90: #{tpu_custom_call.1} parent=87 // pred_check_branch
          %795 = sbr.rel (%p793) target = $region92
        $region91: #{tpu_custom_call.1} parent=87 // pred_region
          %796 = dma.done %s789, 1024
        $region92: #{tpu_custom_call.1} parent=87 // pred_fallthru
          _
        %s797 = sand.u32 %s50, 1
        %s798 = scalar_lea.sflag [#allocation9], %s797
        %s799 = sand.u32 %s84, 1
        %s800 = smul.addr %s799, 64
        %s801 = scalar_lea.vmem [#allocation8], %s800
        // Predicated region
        $region93: #{tpu_custom_call.1} parent=87 // pred_check
          %p802 = pneg %p97
        $region94: #{tpu_custom_call.1} parent=87 // pred_check_branch
          %804 = sbr.rel (%p802) target = $region96
        $region95: #{tpu_custom_call.1} parent=87 // pred_region
          %805 = dma.done %s798, 1024
        $region96: #{tpu_custom_call.1} parent=87 // pred_fallthru
          _
        %s806 = sand.u32 %s50, 1
        %s807 = scalar_lea.sflag [#allocation9], %s806
        %s808 = sand.u32 %s110, 1
        %s809 = smul.addr %s808, 128
        %s810 = scalar_lea.vmem [#allocation10], %s809
        // Predicated region
        $region97: #{tpu_custom_call.1} parent=87 // pred_check
          %p811 = pneg %p123
        $region98: #{tpu_custom_call.1} parent=87 // pred_check_branch
          %813 = sbr.rel (%p811) target = $region100
        $region99: #{tpu_custom_call.1} parent=87 // pred_region
          %814 = dma.done %s807, 2048
        $region100: #{tpu_custom_call.1} parent=87 // pred_fallthru
          _
        %s815 = sand.u32 %s50, 1
        %s816 = scalar_lea.sflag [#allocation12], %s815
        %s817 = sand.u32 %s136, 1
        %s818 = smul.addr %s817, 64
        %s819 = scalar_lea.vmem [#allocation11], %s818
        // Predicated region
        $region101: #{tpu_custom_call.1} parent=87 // pred_check
          %p820 = pneg %p149
        $region102: #{tpu_custom_call.1} parent=87 // pred_check_branch
          %822 = sbr.rel (%p820) target = $region104
        $region103: #{tpu_custom_call.1} parent=87 // pred_region
          %823 = dma.done %s816, 1024
        $region104: #{tpu_custom_call.1} parent=87 // pred_fallthru
          _
        // Predicated region
        $region105: #{tpu_custom_call.1} parent=87 // pred_check
          %p824 = pneg %p170
        $region106: #{tpu_custom_call.1} parent=87 // pred_check_branch
          %826 = sbr.rel (%p824) target = $region108
        $region107: #{tpu_custom_call.1} parent=87 // pred_region
          %827 = dma.done [#allocation12], 4096
        $region108: #{tpu_custom_call.1} parent=87 // pred_fallthru
          _
        // Predicated region
        $region109: #{tpu_custom_call.1} parent=87 // pred_check
          %p828 = pneg %p191
        $region110: #{tpu_custom_call.1} parent=87 // pred_check_branch
          %830 = sbr.rel (%p828) target = $region112
        $region111: #{tpu_custom_call.1} parent=87 // pred_region
          %831 = dma.done [#allocation15], 4096
        $region112: #{tpu_custom_call.1} parent=87 // pred_fallthru
          _
        // Predicated region
        $region113: #{tpu_custom_call.1} parent=87 // pred_check
          %p832 = pneg %p212
        $region114: #{tpu_custom_call.1} parent=87 // pred_check_branch
          %834 = sbr.rel (%p832) target = $region116
        $region115: #{tpu_custom_call.1} parent=87 // pred_region
          %835 = dma.done [#allocation15], 8192
        $region116: #{tpu_custom_call.1} parent=87 // pred_fallthru
          _
        // Predicated region
        $region117: #{tpu_custom_call.1} parent=87 // pred_check
          %p836 = pneg %p233
        $region118: #{tpu_custom_call.1} parent=87 // pred_check_branch
          %838 = sbr.rel (%p836) target = $region120
        $region119: #{tpu_custom_call.1} parent=87 // pred_region
          %839 = dma.done [#allocation18], 4096
        $region120: #{tpu_custom_call.1} parent=87 // pred_fallthru
          _
        // Predicated region
        $region121: #{tpu_custom_call.1} parent=87 // pred_check
          %p840 = pneg %p275
        $region122: #{tpu_custom_call.1} parent=87 // pred_check_branch
          %842 = sbr.rel (%p840) target = $region124
        $region123: #{tpu_custom_call.1} parent=87 // pred_region
          %843 = dma.done [#allocation18], 8192
        $region124: #{tpu_custom_call.1} parent=87 // pred_fallthru
          _
        // Predicated region
        $region125: #{tpu_custom_call.1} parent=87 // pred_check
          %p844 = pneg %p317
        $region126: #{tpu_custom_call.1} parent=87 // pred_check_branch
          %846 = sbr.rel (%p844) target = $region128
        $region127: #{tpu_custom_call.1} parent=87 // pred_region
          %847 = dma.done [#allocation21], 8192
        $region128: #{tpu_custom_call.1} parent=87 // pred_fallthru
          _
        %s848 = sand.u32 %s58, 1
        %s849 = scalar_lea.sflag [#allocation6], %s848
        %s850 = sand.u32 %s58, 1
        %s851 = smul.addr %s850, 64
        %s852 = scalar_lea.vmem [#allocation5], %s851
        %p853 = pneg %p71
        %p854 = pneg %p68
        %s855 = sand.u32 %s50, 1
        %s856 = scalar_lea.sflag [#allocation9], %s855
        %s857 = sand.u32 %s84, 1
        %s858 = smul.addr %s857, 64
        %s859 = scalar_lea.vmem [#allocation8], %s858
        %p860 = pneg %p97
        %p861 = pneg %p94
        %s862 = sand.u32 %s50, 1
        %s863 = scalar_lea.sflag [#allocation9], %s862
        %s864 = sand.u32 %s110, 1
        %s865 = smul.addr %s864, 128
        %s866 = scalar_lea.vmem [#allocation10], %s865
        %p867 = pneg %p123
        %p868 = pneg %p120
        %s869 = sand.u32 %s50, 1
        %s870 = scalar_lea.sflag [#allocation12], %s869
        %s871 = sand.u32 %s136, 1
        %s872 = smul.addr %s871, 64
        %s873 = scalar_lea.vmem [#allocation11], %s872
        %p874 = pneg %p149
        %p875 = pneg %p146
        %p876 = pneg %p170
        %p877 = pneg %p167
        %p878 = pneg %p191
        %p879 = pneg %p188
        %p880 = pneg %p212
        %p881 = pneg %p209
        %p882 = pneg %p233
        %p883 = pneg %p230
        %p884 = pneg %p254
        %p885 = pneg %p251
        %p886 = pneg %p275
        %p887 = pneg %p272
        %p888 = pneg %p296
        %p889 = pneg %p293
        %p890 = pneg %p317
        %p891 = pneg %p314
        %p892 = pneg %p338
        %p893 = pneg %p335
        %p894 = pneg %p359
        %p895 = pneg %p356
        %p896 = pneg %p380
        %p897 = pneg %p377
        %p898 = pneg %p401
        %p899 = pneg %p398
        %p900 = pneg %p422
        %p901 = pneg %p419
        %p902 = pneg %p448
        %p903 = pneg %p445
        %s904 = sand.u32 %s435, 1
        %s905 = scalar_lea.sflag [#allocation7], %s904
        %s906 = sand.u32 %s435, 1
        %s907 = smul.addr %s906, 2
        %s908 = scalar_lea.vmem [#allocation22], %s907
        %p909 = pneg %p469
        %p910 = pneg %p466
        %p911 = pneg %p490
        %p912 = pneg %p487
        %p913 = pneg %p511
        %p914 = pneg %p508
        %p915 = pneg %p532
        %p916 = pneg %p529
        %p917 = pneg %p553
        %p918 = pneg %p550
        %s919 = smul.u32 16, %s50
        %s920 = ssub.s32 38, %s919
        %p921 = scmp.lt.s32.totalorder %s920, 16
        %s922 = scalar_select %p921, %s920, 16
        %s923 = smul.u32 64, %s922
        %s924 = smul.u32 16, %s50
        %s925 = ssub.s32 38, %s924
        %p926 = scmp.lt.s32.totalorder %s925, 16
        %s927 = scalar_select %p926, %s925, 16
        %s928 = smul.u32 64, %s927
        %s929 = smul.u32 16, %s50
        %s930 = ssub.s32 38, %s929
        %p931 = scmp.lt.s32.totalorder %s930, 16
        %s932 = scalar_select %p931, %s930, 16
        %s933 = smul.u32 64, %s932
        %s934 = smul.u32 %s933, 2
        %s935 = smul.u32 16, %s50
        %s936 = ssub.s32 38, %s935
        %p937 = scmp.lt.s32.totalorder %s936, 16
        %s938 = scalar_select %p937, %s936, 16
        %s939 = smul.u32 64, %s938
        %s941 = smul.u32 %s50, 128
        %p942 = scmp.eq.s32.totalorder %s50, 0
        // Predicated region
        $region129: #{tpu_custom_call.1} parent=87 // pred_check
          %p943 = pneg %p942
        $region130: #{tpu_custom_call.1} parent=87 // pred_check_branch
          %945 = sbr.rel (%p943) target = $region132
        $region131: #{tpu_custom_call.1} parent=87 // pred_region
          %vm946 = vcmask 1024
          %947 = vst.msk [vmem:[#allocation2] sm:$0x3] %vm946, -inf
          %948 = vst.msk [vmem:[#allocation3] sm:$0x3] %vm946, 0.0
          %949 = vst [vmem:[#allocation4] sm:$0xff] 0.0
        $region132: #{tpu_custom_call.1} parent=87 // pred_fallthru
          _
        %v950 = vlaneseq
        %v951 = vshrl.u32 %v950, 7
        %v952 = vadd.s32 %v951, 8
        %v953 = vadd.s32 %v951, 16
        %v954 = vadd.s32 %v951, 24
        %v955 = vadd.s32 %v951, 32
        %v956 = vadd.s32 %v951, 40
        %v957 = vadd.s32 %v951, 48
        %v958 = vadd.s32 %v951, 56
        %v959 = vadd.s32 %v951, 64
        %v960 = vadd.s32 %v951, 72
        %v961 = vadd.s32 %v951, 80
        %v962 = vadd.s32 %v951, 88
        %v963 = vadd.s32 %v951, 96
        %v964 = vadd.s32 %v951, 104
        %v965 = vadd.s32 %v951, 112
        %v966 = vadd.s32 %v951, 120
        %v967 = vstv %s941
        %v968 = vadd.s32 %v951, %v967
        %v969 = vadd.s32 %v952, %v967
        %v970 = vadd.s32 %v953, %v967
        %v971 = vadd.s32 %v954, %v967
        %v972 = vadd.s32 %v955, %v967
        %v973 = vadd.s32 %v956, %v967
        %v974 = vadd.s32 %v957, %v967
        %v975 = vadd.s32 %v958, %v967
        %v976 = vadd.s32 %v959, %v967
        %v977 = vadd.s32 %v960, %v967
        %v978 = vadd.s32 %v961, %v967
        %v979 = vadd.s32 %v962, %v967
        %v980 = vadd.s32 %v963, %v967
        %v981 = vadd.s32 %v964, %v967
        %v982 = vadd.s32 %v965, %v967
        %v983 = vadd.s32 %v966, %v967
        %vm984 = vcmp.lt.s32.totalorder %v968, 300
        %vm985 = vcmp.lt.s32.totalorder %v969, 300
        %vm986 = vcmp.lt.s32.totalorder %v970, 300
        %vm987 = vcmp.lt.s32.totalorder %v971, 300
        %vm988 = vcmp.lt.s32.totalorder %v972, 300
        %vm989 = vcmp.lt.s32.totalorder %v973, 300
        %vm990 = vcmp.lt.s32.totalorder %v974, 300
        %vm991 = vcmp.lt.s32.totalorder %v975, 300
        %vm992 = vcmp.lt.s32.totalorder %v976, 300
        %vm993 = vcmp.lt.s32.totalorder %v977, 300
        %vm994 = vcmp.lt.s32.totalorder %v978, 300
        %vm995 = vcmp.lt.s32.totalorder %v979, 300
        %vm996 = vcmp.lt.s32.totalorder %v980, 300
        %vm997 = vcmp.lt.s32.totalorder %v981, 300
        %vm998 = vcmp.lt.s32.totalorder %v982, 300
        %vm999 = vcmp.lt.s32.totalorder %v983, 300
        %v1000 = vlaneseq
        %v1001 = vand.u32 %v1000, 127
        %v1002 = vadd.s32 %v1001, %v967
        %vm1003 = vcmp.lt.s32.totalorder %v1002, 300
        %v1004 = vld [vmem:[%s792] sm:$0xf]
        %v1005 = vld [vmem:[%s792 + $0x4] sm:$0xf]
        %v1006 = vld [vmem:[%s792 + $0x8] sm:$0xf]
        %v1007 = vld [vmem:[%s792 + $0xc] sm:$0xf]
        %v1008 = vld [vmem:[%s792 + $0x10] sm:$0xf]
        %v1009 = vld [vmem:[%s792 + $0x14] sm:$0xf]
        %v1010 = vld [vmem:[%s792 + $0x18] sm:$0xf]
        %v1011 = vld [vmem:[%s792 + $0x1c] sm:$0xf]
        %v1012 = vld [vmem:[%s792 + $0x20] sm:$0xf]
        %v1013 = vld [vmem:[%s792 + $0x24] sm:$0xf]
        %v1014 = vld [vmem:[%s792 + $0x28] sm:$0xf]
        %v1015 = vld [vmem:[%s792 + $0x2c] sm:$0xf]
        %v1016 = vld [vmem:[%s792 + $0x30] sm:$0xf]
        %v1017 = vld [vmem:[%s792 + $0x34] sm:$0xf]
        %v1018 = vld [vmem:[%s792 + $0x38] sm:$0xf]
        %v1019 = vld [vmem:[%s792 + $0x3c] sm:$0xf]
        %v1020 = vunpack.c.l.bf16 %v1004
        %v1021 = vunpack.c.l.bf16 %v1005
        %v1022 = vunpack.c.l.bf16 %v1006
        %v1023 = vunpack.c.l.bf16 %v1007
        %v1024 = vunpack.c.l.bf16 %v1008
        %v1025 = vunpack.c.l.bf16 %v1009
        %v1026 = vunpack.c.l.bf16 %v1010
        %v1027 = vunpack.c.l.bf16 %v1011
        %v1028 = vunpack.c.l.bf16 %v1012
        %v1029 = vunpack.c.l.bf16 %v1013
        %v1030 = vunpack.c.l.bf16 %v1014
        %v1031 = vunpack.c.l.bf16 %v1015
        %v1032 = vunpack.c.l.bf16 %v1016
        %v1033 = vunpack.c.l.bf16 %v1017
        %v1034 = vunpack.c.l.bf16 %v1018
        %v1035 = vunpack.c.l.bf16 %v1019
        %v1036 = vmul.f32 %v1020, 0.5
        %v1037 = vmul.f32 %v1021, 0.5
        %v1038 = vmul.f32 %v1022, 0.5
        %v1039 = vmul.f32 %v1023, 0.5
        %v1040 = vmul.f32 %v1024, 0.5
        %v1041 = vmul.f32 %v1025, 0.5
        %v1042 = vmul.f32 %v1026, 0.5
        %v1043 = vmul.f32 %v1027, 0.5
        %v1044 = vmul.f32 %v1028, 0.5
        %v1045 = vmul.f32 %v1029, 0.5
        %v1046 = vmul.f32 %v1030, 0.5
        %v1047 = vmul.f32 %v1031, 0.5
        %v1048 = vmul.f32 %v1032, 0.5
        %v1049 = vmul.f32 %v1033, 0.5
        %v1050 = vmul.f32 %v1034, 0.5
        %v1051 = vmul.f32 %v1035, 0.5
        %v1052 = vtanh.pop %v1036
        %v1053 = vtanh.pop %v1037
        %v1054 = vtanh.pop %v1038
        %v1055 = vtanh.pop %v1039
        %v1056 = vtanh.pop %v1040
        %v1057 = vtanh.pop %v1041
        %v1058 = vtanh.pop %v1042
        %v1059 = vtanh.pop %v1043
        %v1060 = vtanh.pop %v1044
        %v1061 = vtanh.pop %v1045
        %v1062 = vtanh.pop %v1046
        %v1063 = vtanh.pop %v1047
        %v1064 = vtanh.pop %v1048
        %v1065 = vtanh.pop %v1049
        %v1066 = vtanh.pop %v1050
        %v1067 = vtanh.pop %v1051
        %v1068 = vmul.f32 %v1052, 0.5
        %v1069 = vmul.f32 %v1053, 0.5
        %v1070 = vmul.f32 %v1054, 0.5
        %v1071 = vmul.f32 %v1055, 0.5
        %v1072 = vmul.f32 %v1056, 0.5
        %v1073 = vmul.f32 %v1057, 0.5
        %v1074 = vmul.f32 %v1058, 0.5
        %v1075 = vmul.f32 %v1059, 0.5
        %v1076 = vmul.f32 %v1060, 0.5
        %v1077 = vmul.f32 %v1061, 0.5
        %v1078 = vmul.f32 %v1062, 0.5
        %v1079 = vmul.f32 %v1063, 0.5
        %v1080 = vmul.f32 %v1064, 0.5
        %v1081 = vmul.f32 %v1065, 0.5
        %v1082 = vmul.f32 %v1066, 0.5
        %v1083 = vmul.f32 %v1067, 0.5
        %v1084 = vadd.f32 %v1068, 0.5
        %v1085 = vadd.f32 %v1069, 0.5
        %v1086 = vadd.f32 %v1070, 0.5
        %v1087 = vadd.f32 %v1071, 0.5
        %v1088 = vadd.f32 %v1072, 0.5
        %v1089 = vadd.f32 %v1073, 0.5
        %v1090 = vadd.f32 %v1074, 0.5
        %v1091 = vadd.f32 %v1075, 0.5
        %v1092 = vadd.f32 %v1076, 0.5
        %v1093 = vadd.f32 %v1077, 0.5
        %v1094 = vadd.f32 %v1078, 0.5
        %v1095 = vadd.f32 %v1079, 0.5
        %v1096 = vadd.f32 %v1080, 0.5
        %v1097 = vadd.f32 %v1081, 0.5
        %v1098 = vadd.f32 %v1082, 0.5
        %v1099 = vadd.f32 %v1083, 0.5
        %v1100 = vpack.c.bf16 %v1085, %v1084
        %v1101 = vpack.c.bf16 %v1087, %v1086
        %v1102 = vpack.c.bf16 %v1089, %v1088
        %v1103 = vpack.c.bf16 %v1091, %v1090
        %v1104 = vpack.c.bf16 %v1093, %v1092
        %v1105 = vpack.c.bf16 %v1095, %v1094
        %v1106 = vpack.c.bf16 %v1097, %v1096
        %v1107 = vpack.c.bf16 %v1099, %v1098
        %v1108 = vld [vmem:[#allocation13] sm:$0xff]
        %v1109 = vld [vmem:[#allocation13 + $0x8] sm:$0xff]
        %v1110 = vld [vmem:[#allocation13 + $0x10] sm:$0xff]
        %v1111 = vld [vmem:[#allocation13 + $0x18] sm:$0xff]
        %v1112 = vld [vmem:[#allocation13 + $0x20] sm:$0xff]
        %v1113 = vld [vmem:[#allocation13 + $0x28] sm:$0xff]
        %v1114 = vld [vmem:[#allocation13 + $0x30] sm:$0xff]
        %v1115 = vld [vmem:[#allocation13 + $0x38] sm:$0xff]
        %v1116 = vld [vmem:[#allocation13 + $0x40] sm:$0xff]
        %v1117 = vld [vmem:[#allocation13 + $0x48] sm:$0xff]
        %v1118 = vld [vmem:[#allocation13 + $0x50] sm:$0xff]
        %v1119 = vld [vmem:[#allocation13 + $0x58] sm:$0xff]
        %v1120 = vld [vmem:[#allocation13 + $0x60] sm:$0xff]
        %v1121 = vld [vmem:[#allocation13 + $0x68] sm:$0xff]
        %v1122 = vld [vmem:[#allocation13 + $0x70] sm:$0xff]
        %v1123 = vld [vmem:[#allocation13 + $0x78] sm:$0xff]
        %v1124 = vld [vmem:[#allocation13 + $0x80] sm:$0xff]
        %v1125 = vld [vmem:[#allocation13 + $0x88] sm:$0xff]
        %v1126 = vld [vmem:[#allocation13 + $0x90] sm:$0xff]
        %v1127 = vld [vmem:[#allocation13 + $0x98] sm:$0xff]
        %v1128 = vld [vmem:[#allocation13 + $0xa0] sm:$0xff]
        %v1129 = vld [vmem:[#allocation13 + $0xa8] sm:$0xff]
        %v1130 = vld [vmem:[#allocation13 + $0xb0] sm:$0xff]
        %v1131 = vld [vmem:[#allocation13 + $0xb8] sm:$0xff]
        %v1132 = vld [vmem:[#allocation13 + $0xc0] sm:$0xff]
        %v1133 = vld [vmem:[#allocation13 + $0xc8] sm:$0xff]
        %v1134 = vld [vmem:[#allocation13 + $0xd0] sm:$0xff]
        %v1135 = vld [vmem:[#allocation13 + $0xd8] sm:$0xff]
        %v1136 = vld [vmem:[#allocation13 + $0xe0] sm:$0xff]
        %v1137 = vld [vmem:[#allocation13 + $0xe8] sm:$0xff]
        %v1138 = vld [vmem:[#allocation13 + $0xf0] sm:$0xff]
        %v1139 = vld [vmem:[#allocation13 + $0xf8] sm:$0xff]
        %v1140 = vld [vmem:[%s801] sm:$0xf]
        %v1141 = vld [vmem:[%s801 + $0x4] sm:$0xf]
        %v1142 = vld [vmem:[%s801 + $0x8] sm:$0xf]
        %v1143 = vld [vmem:[%s801 + $0xc] sm:$0xf]
        %v1144 = vld [vmem:[%s801 + $0x10] sm:$0xf]
        %v1145 = vld [vmem:[%s801 + $0x14] sm:$0xf]
        %v1146 = vld [vmem:[%s801 + $0x18] sm:$0xf]
        %v1147 = vld [vmem:[%s801 + $0x1c] sm:$0xf]
        %v1148 = vld [vmem:[%s801 + $0x20] sm:$0xf]
        %v1149 = vld [vmem:[%s801 + $0x24] sm:$0xf]
        %v1150 = vld [vmem:[%s801 + $0x28] sm:$0xf]
        %v1151 = vld [vmem:[%s801 + $0x2c] sm:$0xf]
        %v1152 = vld [vmem:[%s801 + $0x30] sm:$0xf]
        %v1153 = vld [vmem:[%s801 + $0x34] sm:$0xf]
        %v1154 = vld [vmem:[%s801 + $0x38] sm:$0xf]
        %v1155 = vld [vmem:[%s801 + $0x3c] sm:$0xf]
        %v1156 = vunpack.c.l.bf16 %v1140
        %v1157 = vunpack.c.l.bf16 %v1141
        %v1158 = vunpack.c.l.bf16 %v1142
        %v1159 = vunpack.c.l.bf16 %v1143
        %v1160 = vunpack.c.l.bf16 %v1144
        %v1161 = vunpack.c.l.bf16 %v1145
        %v1162 = vunpack.c.l.bf16 %v1146
        %v1163 = vunpack.c.l.bf16 %v1147
        %v1164 = vunpack.c.l.bf16 %v1148
        %v1165 = vunpack.c.l.bf16 %v1149
        %v1166 = vunpack.c.l.bf16 %v1150
        %v1167 = vunpack.c.l.bf16 %v1151
        %v1168 = vunpack.c.l.bf16 %v1152
        %v1169 = vunpack.c.l.bf16 %v1153
        %v1170 = vunpack.c.l.bf16 %v1154
        %v1171 = vunpack.c.l.bf16 %v1155
        %v1172 = vmul.f32 %v1156, 0.5
        %v1173 = vmul.f32 %v1157, 0.5
        %v1174 = vmul.f32 %v1158, 0.5
        %v1175 = vmul.f32 %v1159, 0.5
        %v1176 = vmul.f32 %v1160, 0.5
        %v1177 = vmul.f32 %v1161, 0.5
        %v1178 = vmul.f32 %v1162, 0.5
        %v1179 = vmul.f32 %v1163, 0.5
        %v1180 = vmul.f32 %v1164, 0.5
        %v1181 = vmul.f32 %v1165, 0.5
        %v1182 = vmul.f32 %v1166, 0.5
        %v1183 = vmul.f32 %v1167, 0.5
        %v1184 = vmul.f32 %v1168, 0.5
        %v1185 = vmul.f32 %v1169, 0.5
        %v1186 = vmul.f32 %v1170, 0.5
        %v1187 = vmul.f32 %v1171, 0.5
        %v1188 = vtanh.pop %v1172
        %v1189 = vtanh.pop %v1173
        %v1190 = vtanh.pop %v1174
        %v1191 = vtanh.pop %v1175
        %v1192 = vtanh.pop %v1176
        %v1193 = vtanh.pop %v1177
        %v1194 = vtanh.pop %v1178
        %v1195 = vtanh.pop %v1179
        %v1196 = vtanh.pop %v1180
        %v1197 = vtanh.pop %v1181
        %v1198 = vtanh.pop %v1182
        %v1199 = vtanh.pop %v1183
        %v1200 = vtanh.pop %v1184
        %v1201 = vtanh.pop %v1185
        %v1202 = vtanh.pop %v1186
        %v1203 = vtanh.pop %v1187
        %v1204 = vmul.f32 %v1188, 0.5
        %v1205 = vmul.f32 %v1189, 0.5
        %v1206 = vmul.f32 %v1190, 0.5
        %v1207 = vmul.f32 %v1191, 0.5
        %v1208 = vmul.f32 %v1192, 0.5
        %v1209 = vmul.f32 %v1193, 0.5
        %v1210 = vmul.f32 %v1194, 0.5
        %v1211 = vmul.f32 %v1195, 0.5
        %v1212 = vmul.f32 %v1196, 0.5
        %v1213 = vmul.f32 %v1197, 0.5
        %v1214 = vmul.f32 %v1198, 0.5
        %v1215 = vmul.f32 %v1199, 0.5
        %v1216 = vmul.f32 %v1200, 0.5
        %v1217 = vmul.f32 %v1201, 0.5
        %v1218 = vmul.f32 %v1202, 0.5
        %v1219 = vmul.f32 %v1203, 0.5
        %v1220 = vadd.f32 %v1204, 0.5
        %v1221 = vadd.f32 %v1205, 0.5
        %v1222 = vadd.f32 %v1206, 0.5
        %v1223 = vadd.f32 %v1207, 0.5
        %v1224 = vadd.f32 %v1208, 0.5
        %v1225 = vadd.f32 %v1209, 0.5
        %v1226 = vadd.f32 %v1210, 0.5
        %v1227 = vadd.f32 %v1211, 0.5
        %v1228 = vadd.f32 %v1212, 0.5
        %v1229 = vadd.f32 %v1213, 0.5
        %v1230 = vadd.f32 %v1214, 0.5
        %v1231 = vadd.f32 %v1215, 0.5
        %v1232 = vadd.f32 %v1216, 0.5
        %v1233 = vadd.f32 %v1217, 0.5
        %v1234 = vadd.f32 %v1218, 0.5
        %v1235 = vadd.f32 %v1219, 0.5
        %v1236 = vpack.c.bf16 %v1221, %v1220
        %v1237 = vpack.c.bf16 %v1223, %v1222
        %v1238 = vpack.c.bf16 %v1225, %v1224
        %v1239 = vpack.c.bf16 %v1227, %v1226
        %v1240 = vpack.c.bf16 %v1229, %v1228
        %v1241 = vpack.c.bf16 %v1231, %v1230
        %v1242 = vpack.c.bf16 %v1233, %v1232
        %v1243 = vpack.c.bf16 %v1235, %v1234
        %v1244 = vld [vmem:[#allocation14] sm:$0xff]
        %v1245 = vld [vmem:[#allocation14 + $0x8] sm:$0xff]
        %v1246 = vld [vmem:[#allocation14 + $0x10] sm:$0xff]
        %v1247 = vld [vmem:[#allocation14 + $0x18] sm:$0xff]
        %v1248 = vld [vmem:[#allocation14 + $0x20] sm:$0xff]
        %v1249 = vld [vmem:[#allocation14 + $0x28] sm:$0xff]
        %v1250 = vld [vmem:[#allocation14 + $0x30] sm:$0xff]
        %v1251 = vld [vmem:[#allocation14 + $0x38] sm:$0xff]
        %v1252 = vld [vmem:[#allocation14 + $0x40] sm:$0xff]
        %v1253 = vld [vmem:[#allocation14 + $0x48] sm:$0xff]
        %v1254 = vld [vmem:[#allocation14 + $0x50] sm:$0xff]
        %v1255 = vld [vmem:[#allocation14 + $0x58] sm:$0xff]
        %v1256 = vld [vmem:[#allocation14 + $0x60] sm:$0xff]
        %v1257 = vld [vmem:[#allocation14 + $0x68] sm:$0xff]
        %v1258 = vld [vmem:[#allocation14 + $0x70] sm:$0xff]
        %v1259 = vld [vmem:[#allocation14 + $0x78] sm:$0xff]
        %v1260 = vld [vmem:[#allocation14 + $0x80] sm:$0xff]
        %v1261 = vld [vmem:[#allocation14 + $0x88] sm:$0xff]
        %v1262 = vld [vmem:[#allocation14 + $0x90] sm:$0xff]
        %v1263 = vld [vmem:[#allocation14 + $0x98] sm:$0xff]
        %v1264 = vld [vmem:[#allocation14 + $0xa0] sm:$0xff]
        %v1265 = vld [vmem:[#allocation14 + $0xa8] sm:$0xff]
        %v1266 = vld [vmem:[#allocation14 + $0xb0] sm:$0xff]
        %v1267 = vld [vmem:[#allocation14 + $0xb8] sm:$0xff]
        %v1268 = vld [vmem:[#allocation14 + $0xc0] sm:$0xff]
        %v1269 = vld [vmem:[#allocation14 + $0xc8] sm:$0xff]
        %v1270 = vld [vmem:[#allocation14 + $0xd0] sm:$0xff]
        %v1271 = vld [vmem:[#allocation14 + $0xd8] sm:$0xff]
        %v1272 = vld [vmem:[#allocation14 + $0xe0] sm:$0xff]
        %v1273 = vld [vmem:[#allocation14 + $0xe8] sm:$0xff]
        %v1274 = vld [vmem:[#allocation14 + $0xf0] sm:$0xff]
        %v1275 = vld [vmem:[#allocation14 + $0xf8] sm:$0xff]
        %v1308 = vunpack.c.l.b16 %v1244
        %v1309 = vunpack.c.h.b16 %v1244
        %v1310 = vunpack.c.l.b16 %v1245
        %v1311 = vunpack.c.h.b16 %v1245
        %v1312 = vunpack.c.l.b16 %v1246
        %v1313 = vunpack.c.h.b16 %v1246
        %v1314 = vunpack.c.l.b16 %v1247
        %v1315 = vunpack.c.h.b16 %v1247
        %v1316 = vunpack.c.l.b16 %v1248
        %v1317 = vunpack.c.h.b16 %v1248
        %v1318 = vunpack.c.l.b16 %v1249
        %v1319 = vunpack.c.h.b16 %v1249
        %v1320 = vunpack.c.l.b16 %v1250
        %v1321 = vunpack.c.h.b16 %v1250
        %v1322 = vunpack.c.l.b16 %v1251
        %v1323 = vunpack.c.h.b16 %v1251
        %v1324 = vunpack.c.l.b16 %v1252
        %v1325 = vunpack.c.h.b16 %v1252
        %v1326 = vunpack.c.l.b16 %v1253
        %v1327 = vunpack.c.h.b16 %v1253
        %v1328 = vunpack.c.l.b16 %v1254
        %v1329 = vunpack.c.h.b16 %v1254
        %v1330 = vunpack.c.l.b16 %v1255
        %v1331 = vunpack.c.h.b16 %v1255
        %v1332 = vunpack.c.l.b16 %v1256
        %v1333 = vunpack.c.h.b16 %v1256
        %v1334 = vunpack.c.l.b16 %v1257
        %v1335 = vunpack.c.h.b16 %v1257
        %v1336 = vunpack.c.l.b16 %v1258
        %v1337 = vunpack.c.h.b16 %v1258
        %v1338 = vunpack.c.l.b16 %v1259
        %v1339 = vunpack.c.h.b16 %v1259
        %v1340 = vunpack.c.l.b16 %v1260
        %v1341 = vunpack.c.h.b16 %v1260
        %v1342 = vunpack.c.l.b16 %v1261
        %v1343 = vunpack.c.h.b16 %v1261
        %v1344 = vunpack.c.l.b16 %v1262
        %v1345 = vunpack.c.h.b16 %v1262
        %v1346 = vunpack.c.l.b16 %v1263
        %v1347 = vunpack.c.h.b16 %v1263
        %v1348 = vunpack.c.l.b16 %v1264
        %v1349 = vunpack.c.h.b16 %v1264
        %v1350 = vunpack.c.l.b16 %v1265
        %v1351 = vunpack.c.h.b16 %v1265
        %v1352 = vunpack.c.l.b16 %v1266
        %v1353 = vunpack.c.h.b16 %v1266
        %v1354 = vunpack.c.l.b16 %v1267
        %v1355 = vunpack.c.h.b16 %v1267
        %v1356 = vunpack.c.l.b16 %v1268
        %v1357 = vunpack.c.h.b16 %v1268
        %v1358 = vunpack.c.l.b16 %v1269
        %v1359 = vunpack.c.h.b16 %v1269
        %v1360 = vunpack.c.l.b16 %v1270
        %v1361 = vunpack.c.h.b16 %v1270
        %v1362 = vunpack.c.l.b16 %v1271
        %v1363 = vunpack.c.h.b16 %v1271
        %v1364 = vunpack.c.l.b16 %v1272
        %v1365 = vunpack.c.h.b16 %v1272
        %v1366 = vunpack.c.l.b16 %v1273
        %v1367 = vunpack.c.h.b16 %v1273
        %v1368 = vunpack.c.l.b16 %v1274
        %v1369 = vunpack.c.h.b16 %v1274
        %v1370 = vunpack.c.l.b16 %v1275
        %v1371 = vunpack.c.h.b16 %v1275
        %v1372 = vpack.c.b16 %v1312, %v1308
        %v1373 = vpack.c.b16 %v1313, %v1309
        %v1374 = vpack.c.b16 %v1314, %v1310
        %v1375 = vpack.c.b16 %v1315, %v1311
        %v1376 = vpack.c.b16 %v1320, %v1316
        %v1377 = vpack.c.b16 %v1321, %v1317
        %v1378 = vpack.c.b16 %v1322, %v1318
        %v1379 = vpack.c.b16 %v1323, %v1319
        %v1380 = vpack.c.b16 %v1328, %v1324
        %v1381 = vpack.c.b16 %v1329, %v1325
        %v1382 = vpack.c.b16 %v1330, %v1326
        %v1383 = vpack.c.b16 %v1331, %v1327
        %v1384 = vpack.c.b16 %v1336, %v1332
        %v1385 = vpack.c.b16 %v1337, %v1333
        %v1386 = vpack.c.b16 %v1338, %v1334
        %v1387 = vpack.c.b16 %v1339, %v1335
        %v1388 = vpack.c.b16 %v1344, %v1340
        %v1389 = vpack.c.b16 %v1345, %v1341
        %v1390 = vpack.c.b16 %v1346, %v1342
        %v1391 = vpack.c.b16 %v1347, %v1343
        %v1392 = vpack.c.b16 %v1352, %v1348
        %v1393 = vpack.c.b16 %v1353, %v1349
        %v1394 = vpack.c.b16 %v1354, %v1350
        %v1395 = vpack.c.b16 %v1355, %v1351
        %v1396 = vpack.c.b16 %v1360, %v1356
        %v1397 = vpack.c.b16 %v1361, %v1357
        %v1398 = vpack.c.b16 %v1362, %v1358
        %v1399 = vpack.c.b16 %v1363, %v1359
        %v1400 = vpack.c.b16 %v1368, %v1364
        %v1401 = vpack.c.b16 %v1369, %v1365
        %v1402 = vpack.c.b16 %v1370, %v1366
        %v1403 = vpack.c.b16 %v1371, %v1367
        %1436 = vmatprep.subr.bf16.mxu0 %v1401
        %1437 = vmatpush1.bf16.msra.mxu0 %v1400
        %1438 = vmatprep.subr.bf16.mxu0 %v1397
        %1439 = vmatpush1.bf16.msra.mxu0 %v1396
        %1440 = vmatprep.subr.bf16.mxu0 %v1393
        %1441 = vmatpush1.bf16.msra.mxu0 %v1392
        %1442 = vmatprep.subr.bf16.mxu0 %v1389
        %1443 = vmatpush1.bf16.msra.mxu0 %v1388
        %1444 = vmatprep.subr.bf16.mxu0 %v1385
        %1445 = vmatpush1.bf16.msra.mxu0 %v1384
        %1446 = vmatprep.subr.bf16.mxu0 %v1381
        %1447 = vmatpush1.bf16.msra.mxu0 %v1380
        %1448 = vmatprep.subr.bf16.mxu0 %v1377
        %1449 = vmatpush1.bf16.msra.mxu0 %v1376
        %1450 = vmatprep.subr.bf16.mxu0 %v1373
        %1451 = vmatpush1.bf16.msra.mxu0 %v1372
        %1452 = vmatprep.subr.bf16.mxu0 0
        %1453 = vmatpush2.bf16.msra.mxu0 0
        %1454 = vmatprep.subr.bf16.mxu0 0
        %1455 = vmatpush2.bf16.msra.mxu0 0
        %1456 = vmatprep.subr.bf16.mxu0 0
        %1457 = vmatpush2.bf16.msra.mxu0 0
        %1458 = vmatprep.subr.bf16.mxu0 0
        %1459 = vmatpush2.bf16.msra.mxu0 0
        %1460 = vmatprep.subr.bf16.mxu0 0
        %1461 = vmatpush2.bf16.msra.mxu0 0
        %1462 = vmatprep.subr.bf16.mxu0 0
        %1463 = vmatpush2.bf16.msra.mxu0 0
        %1464 = vmatprep.subr.bf16.mxu0 0
        %1465 = vmatpush2.bf16.msra.mxu0 0
        %1466 = vmatprep.subr.bf16.mxu0 0
        %1467 = vmatpush2.bf16.msra.mxu0 0
        %1468 = vmatprep.mubr.bf16.mxu0 0
        %1469 = vmatmul.mubr.bf16.gmra.mxu0 %v1236
        %v1470 = vpop.f32.mrf.mxu0
        %v1471 = vadd.f32 0.0, %v1470
        %v1472 = vpop.f32.mrf.mxu0
        %v1473 = vadd.f32 0.0, %v1472
        %v1474 = vpop.f32.mrf.mxu0
        %v1475 = vadd.f32 0.0, %v1474
        %v1476 = vpop.f32.mrf.mxu0
        %v1477 = vadd.f32 0.0, %v1476
        %1478 = vmatprep.mubr.bf16.mxu0 0
        %1479 = vmatmul.mubr.bf16.gmra.mxu0 %v1237
        %v1480 = vpop.f32.mrf.mxu0
        %v1481 = vadd.f32 0.0, %v1480
        %v1482 = vpop.f32.mrf.mxu0
        %v1483 = vadd.f32 0.0, %v1482
        %v1484 = vpop.f32.mrf.mxu0
        %v1485 = vadd.f32 0.0, %v1484
        %v1486 = vpop.f32.mrf.mxu0
        %v1487 = vadd.f32 0.0, %v1486
        %1488 = vmatprep.mubr.bf16.mxu0 0
        %1489 = vmatmul.mubr.bf16.gmra.mxu0 %v1238
        %v1490 = vpop.f32.mrf.mxu0
        %v1491 = vadd.f32 0.0, %v1490
        %v1492 = vpop.f32.mrf.mxu0
        %v1493 = vadd.f32 0.0, %v1492
        %v1494 = vpop.f32.mrf.mxu0
        %v1495 = vadd.f32 0.0, %v1494
        %v1496 = vpop.f32.mrf.mxu0
        %v1497 = vadd.f32 0.0, %v1496
        %1498 = vmatprep.mubr.bf16.mxu0 0
        %1499 = vmatmul.mubr.bf16.gmra.mxu0 %v1239
        %v1500 = vpop.f32.mrf.mxu0
        %v1501 = vadd.f32 0.0, %v1500
        %v1502 = vpop.f32.mrf.mxu0
        %v1503 = vadd.f32 0.0, %v1502
        %v1504 = vpop.f32.mrf.mxu0
        %v1505 = vadd.f32 0.0, %v1504
        %v1506 = vpop.f32.mrf.mxu0
        %v1507 = vadd.f32 0.0, %v1506
        %1508 = vmatprep.mubr.bf16.mxu0 0
        %1509 = vmatmul.mubr.bf16.gmra.mxu0 %v1240
        %v1510 = vpop.f32.mrf.mxu0
        %v1511 = vadd.f32 0.0, %v1510
        %v1512 = vpop.f32.mrf.mxu0
        %v1513 = vadd.f32 0.0, %v1512
        %v1514 = vpop.f32.mrf.mxu0
        %v1515 = vadd.f32 0.0, %v1514
        %v1516 = vpop.f32.mrf.mxu0
        %v1517 = vadd.f32 0.0, %v1516
        %1518 = vmatprep.mubr.bf16.mxu0 0
        %1519 = vmatmul.mubr.bf16.gmra.mxu0 %v1241
        %v1520 = vpop.f32.mrf.mxu0
        %v1521 = vadd.f32 0.0, %v1520
        %v1522 = vpop.f32.mrf.mxu0
        %v1523 = vadd.f32 0.0, %v1522
        %v1524 = vpop.f32.mrf.mxu0
        %v1525 = vadd.f32 0.0, %v1524
        %v1526 = vpop.f32.mrf.mxu0
        %v1527 = vadd.f32 0.0, %v1526
        %1528 = vmatprep.mubr.bf16.mxu0 0
        %1529 = vmatmul.mubr.bf16.gmra.mxu0 %v1242
        %v1530 = vpop.f32.mrf.mxu0
        %v1531 = vadd.f32 0.0, %v1530
        %v1532 = vpop.f32.mrf.mxu0
        %v1533 = vadd.f32 0.0, %v1532
        %v1534 = vpop.f32.mrf.mxu0
        %v1535 = vadd.f32 0.0, %v1534
        %v1536 = vpop.f32.mrf.mxu0
        %v1537 = vadd.f32 0.0, %v1536
        %1538 = vmatprep.mubr.bf16.mxu0 0
        %1539 = vmatmul.mubr.bf16.gmra.mxu0 %v1243
        %v1540 = vpop.f32.mrf.mxu0
        %v1541 = vadd.f32 0.0, %v1540
        %v1542 = vpop.f32.mrf.mxu0
        %v1543 = vadd.f32 0.0, %v1542
        %v1544 = vpop.f32.mrf.mxu0
        %v1545 = vadd.f32 0.0, %v1544
        %v1546 = vpop.f32.mrf.mxu0
        %v1547 = vadd.f32 0.0, %v1546
        %1548 = vdwg.mxu0
        %1549 = vmatprep.subr.bf16.mxu0 %v1403
        %1550 = vmatpush1.bf16.msra.mxu0 %v1402
        %1551 = vmatprep.subr.bf16.mxu0 %v1399
        %1552 = vmatpush1.bf16.msra.mxu0 %v1398
        %1553 = vmatprep.subr.bf16.mxu0 %v1395
        %1554 = vmatpush1.bf16.msra.mxu0 %v1394
        %1555 = vmatprep.subr.bf16.mxu0 %v1391
        %1556 = vmatpush1.bf16.msra.mxu0 %v1390
        %1557 = vmatprep.subr.bf16.mxu0 %v1387
        %1558 = vmatpush1.bf16.msra.mxu0 %v1386
        %1559 = vmatprep.subr.bf16.mxu0 %v1383
        %1560 = vmatpush1.bf16.msra.mxu0 %v1382
        %1561 = vmatprep.subr.bf16.mxu0 %v1379
        %1562 = vmatpush1.bf16.msra.mxu0 %v1378
        %1563 = vmatprep.subr.bf16.mxu0 %v1375
        %1564 = vmatpush1.bf16.msra.mxu0 %v1374
        %1565 = vmatprep.subr.bf16.mxu0 0
        %1566 = vmatpush2.bf16.msra.mxu0 0
        %1567 = vmatprep.subr.bf16.mxu0 0
        %1568 = vmatpush2.bf16.msra.mxu0 0
        %1569 = vmatprep.subr.bf16.mxu0 0
        %1570 = vmatpush2.bf16.msra.mxu0 0
        %1571 = vmatprep.subr.bf16.mxu0 0
        %1572 = vmatpush2.bf16.msra.mxu0 0
        %1573 = vmatprep.subr.bf16.mxu0 0
        %1574 = vmatpush2.bf16.msra.mxu0 0
        %1575 = vmatprep.subr.bf16.mxu0 0
        %1576 = vmatpush2.bf16.msra.mxu0 0
        %1577 = vmatprep.subr.bf16.mxu0 0
        %1578 = vmatpush2.bf16.msra.mxu0 0
        %1579 = vmatprep.subr.bf16.mxu0 0
        %1580 = vmatpush2.bf16.msra.mxu0 0
        %1581 = vmatprep.mubr.bf16.mxu0 0
        %1582 = vmatmul.mubr.bf16.gmra.mxu0 %v1236
        %v1583 = vpop.f32.mrf.mxu0
        %v1584 = vadd.f32 0.0, %v1583
        %v1585 = vpop.f32.mrf.mxu0
        %v1586 = vadd.f32 0.0, %v1585
        %v1587 = vpop.f32.mrf.mxu0
        %v1588 = vadd.f32 0.0, %v1587
        %v1589 = vpop.f32.mrf.mxu0
        %v1590 = vadd.f32 0.0, %v1589
        %1591 = vmatprep.mubr.bf16.mxu0 0
        %1592 = vmatmul.mubr.bf16.gmra.mxu0 %v1237
        %v1593 = vpop.f32.mrf.mxu0
        %v1594 = vadd.f32 0.0, %v1593
        %v1595 = vpop.f32.mrf.mxu0
        %v1596 = vadd.f32 0.0, %v1595
        %v1597 = vpop.f32.mrf.mxu0
        %v1598 = vadd.f32 0.0, %v1597
        %v1599 = vpop.f32.mrf.mxu0
        %v1600 = vadd.f32 0.0, %v1599
        %1601 = vmatprep.mubr.bf16.mxu0 0
        %1602 = vmatmul.mubr.bf16.gmra.mxu0 %v1238
        %v1603 = vpop.f32.mrf.mxu0
        %v1604 = vadd.f32 0.0, %v1603
        %v1605 = vpop.f32.mrf.mxu0
        %v1606 = vadd.f32 0.0, %v1605
        %v1607 = vpop.f32.mrf.mxu0
        %v1608 = vadd.f32 0.0, %v1607
        %v1609 = vpop.f32.mrf.mxu0
        %v1610 = vadd.f32 0.0, %v1609
        %1611 = vmatprep.mubr.bf16.mxu0 0
        %1612 = vmatmul.mubr.bf16.gmra.mxu0 %v1239
        %v1613 = vpop.f32.mrf.mxu0
        %v1614 = vadd.f32 0.0, %v1613
        %v1615 = vpop.f32.mrf.mxu0
        %v1616 = vadd.f32 0.0, %v1615
        %v1617 = vpop.f32.mrf.mxu0
        %v1618 = vadd.f32 0.0, %v1617
        %v1619 = vpop.f32.mrf.mxu0
        %v1620 = vadd.f32 0.0, %v1619
        %1621 = vmatprep.mubr.bf16.mxu0 0
        %1622 = vmatmul.mubr.bf16.gmra.mxu0 %v1240
        %v1623 = vpop.f32.mrf.mxu0
        %v1624 = vadd.f32 0.0, %v1623
        %v1625 = vpop.f32.mrf.mxu0
        %v1626 = vadd.f32 0.0, %v1625
        %v1627 = vpop.f32.mrf.mxu0
        %v1628 = vadd.f32 0.0, %v1627
        %v1629 = vpop.f32.mrf.mxu0
        %v1630 = vadd.f32 0.0, %v1629
        %1631 = vmatprep.mubr.bf16.mxu0 0
        %1632 = vmatmul.mubr.bf16.gmra.mxu0 %v1241
        %v1633 = vpop.f32.mrf.mxu0
        %v1634 = vadd.f32 0.0, %v1633
        %v1635 = vpop.f32.mrf.mxu0
        %v1636 = vadd.f32 0.0, %v1635
        %v1637 = vpop.f32.mrf.mxu0
        %v1638 = vadd.f32 0.0, %v1637
        %v1639 = vpop.f32.mrf.mxu0
        %v1640 = vadd.f32 0.0, %v1639
        %1641 = vmatprep.mubr.bf16.mxu0 0
        %1642 = vmatmul.mubr.bf16.gmra.mxu0 %v1242
        %v1643 = vpop.f32.mrf.mxu0
        %v1644 = vadd.f32 0.0, %v1643
        %v1645 = vpop.f32.mrf.mxu0
        %v1646 = vadd.f32 0.0, %v1645
        %v1647 = vpop.f32.mrf.mxu0
        %v1648 = vadd.f32 0.0, %v1647
        %v1649 = vpop.f32.mrf.mxu0
        %v1650 = vadd.f32 0.0, %v1649
        %1651 = vmatprep.mubr.bf16.mxu0 0
        %1652 = vmatmul.mubr.bf16.gmra.mxu0 %v1243
        %v1653 = vpop.f32.mrf.mxu0
        %v1654 = vadd.f32 0.0, %v1653
        %v1655 = vpop.f32.mrf.mxu0
        %v1656 = vadd.f32 0.0, %v1655
        %v1657 = vpop.f32.mrf.mxu0
        %v1658 = vadd.f32 0.0, %v1657
        %v1659 = vpop.f32.mrf.mxu0
        %v1660 = vadd.f32 0.0, %v1659
        %1661 = vdwg.mxu0
        %v1694 = vunpack.c.l.b16 %v1108
        %v1695 = vunpack.c.h.b16 %v1108
        %v1696 = vunpack.c.l.b16 %v1109
        %v1697 = vunpack.c.h.b16 %v1109
        %v1698 = vunpack.c.l.b16 %v1110
        %v1699 = vunpack.c.h.b16 %v1110
        %v1700 = vunpack.c.l.b16 %v1111
        %v1701 = vunpack.c.h.b16 %v1111
        %v1702 = vunpack.c.l.b16 %v1112
        %v1703 = vunpack.c.h.b16 %v1112
        %v1704 = vunpack.c.l.b16 %v1113
        %v1705 = vunpack.c.h.b16 %v1113
        %v1706 = vunpack.c.l.b16 %v1114
        %v1707 = vunpack.c.h.b16 %v1114
        %v1708 = vunpack.c.l.b16 %v1115
        %v1709 = vunpack.c.h.b16 %v1115
        %v1710 = vunpack.c.l.b16 %v1116
        %v1711 = vunpack.c.h.b16 %v1116
        %v1712 = vunpack.c.l.b16 %v1117
        %v1713 = vunpack.c.h.b16 %v1117
        %v1714 = vunpack.c.l.b16 %v1118
        %v1715 = vunpack.c.h.b16 %v1118
        %v1716 = vunpack.c.l.b16 %v1119
        %v1717 = vunpack.c.h.b16 %v1119
        %v1718 = vunpack.c.l.b16 %v1120
        %v1719 = vunpack.c.h.b16 %v1120
        %v1720 = vunpack.c.l.b16 %v1121
        %v1721 = vunpack.c.h.b16 %v1121
        %v1722 = vunpack.c.l.b16 %v1122
        %v1723 = vunpack.c.h.b16 %v1122
        %v1724 = vunpack.c.l.b16 %v1123
        %v1725 = vunpack.c.h.b16 %v1123
        %v1726 = vunpack.c.l.b16 %v1124
        %v1727 = vunpack.c.h.b16 %v1124
        %v1728 = vunpack.c.l.b16 %v1125
        %v1729 = vunpack.c.h.b16 %v1125
        %v1730 = vunpack.c.l.b16 %v1126
        %v1731 = vunpack.c.h.b16 %v1126
        %v1732 = vunpack.c.l.b16 %v1127
        %v1733 = vunpack.c.h.b16 %v1127
        %v1734 = vunpack.c.l.b16 %v1128
        %v1735 = vunpack.c.h.b16 %v1128
        %v1736 = vunpack.c.l.b16 %v1129
        %v1737 = vunpack.c.h.b16 %v1129
        %v1738 = vunpack.c.l.b16 %v1130
        %v1739 = vunpack.c.h.b16 %v1130
        %v1740 = vunpack.c.l.b16 %v1131
        %v1741 = vunpack.c.h.b16 %v1131
        %v1742 = vunpack.c.l.b16 %v1132
        %v1743 = vunpack.c.h.b16 %v1132
        %v1744 = vunpack.c.l.b16 %v1133
        %v1745 = vunpack.c.h.b16 %v1133
        %v1746 = vunpack.c.l.b16 %v1134
        %v1747 = vunpack.c.h.b16 %v1134
        %v1748 = vunpack.c.l.b16 %v1135
        %v1749 = vunpack.c.h.b16 %v1135
        %v1750 = vunpack.c.l.b16 %v1136
        %v1751 = vunpack.c.h.b16 %v1136
        %v1752 = vunpack.c.l.b16 %v1137
        %v1753 = vunpack.c.h.b16 %v1137
        %v1754 = vunpack.c.l.b16 %v1138
        %v1755 = vunpack.c.h.b16 %v1138
        %v1756 = vunpack.c.l.b16 %v1139
        %v1757 = vunpack.c.h.b16 %v1139
        %v1758 = vpack.c.b16 %v1698, %v1694
        %v1759 = vpack.c.b16 %v1699, %v1695
        %v1760 = vpack.c.b16 %v1700, %v1696
        %v1761 = vpack.c.b16 %v1701, %v1697
        %v1762 = vpack.c.b16 %v1706, %v1702
        %v1763 = vpack.c.b16 %v1707, %v1703
        %v1764 = vpack.c.b16 %v1708, %v1704
        %v1765 = vpack.c.b16 %v1709, %v1705
        %v1766 = vpack.c.b16 %v1714, %v1710
        %v1767 = vpack.c.b16 %v1715, %v1711
        %v1768 = vpack.c.b16 %v1716, %v1712
        %v1769 = vpack.c.b16 %v1717, %v1713
        %v1770 = vpack.c.b16 %v1722, %v1718
        %v1771 = vpack.c.b16 %v1723, %v1719
        %v1772 = vpack.c.b16 %v1724, %v1720
        %v1773 = vpack.c.b16 %v1725, %v1721
        %v1774 = vpack.c.b16 %v1730, %v1726
        %v1775 = vpack.c.b16 %v1731, %v1727
        %v1776 = vpack.c.b16 %v1732, %v1728
        %v1777 = vpack.c.b16 %v1733, %v1729
        %v1778 = vpack.c.b16 %v1738, %v1734
        %v1779 = vpack.c.b16 %v1739, %v1735
        %v1780 = vpack.c.b16 %v1740, %v1736
        %v1781 = vpack.c.b16 %v1741, %v1737
        %v1782 = vpack.c.b16 %v1746, %v1742
        %v1783 = vpack.c.b16 %v1747, %v1743
        %v1784 = vpack.c.b16 %v1748, %v1744
        %v1785 = vpack.c.b16 %v1749, %v1745
        %v1786 = vpack.c.b16 %v1754, %v1750
        %v1787 = vpack.c.b16 %v1755, %v1751
        %v1788 = vpack.c.b16 %v1756, %v1752
        %v1789 = vpack.c.b16 %v1757, %v1753
        %1822 = vmatprep.subr.bf16.mxu0 %v1787
        %1823 = vmatpush1.bf16.msra.mxu0 %v1786
        %1824 = vmatprep.subr.bf16.mxu0 %v1783
        %1825 = vmatpush1.bf16.msra.mxu0 %v1782
        %1826 = vmatprep.subr.bf16.mxu0 %v1779
        %1827 = vmatpush1.bf16.msra.mxu0 %v1778
        %1828 = vmatprep.subr.bf16.mxu0 %v1775
        %1829 = vmatpush1.bf16.msra.mxu0 %v1774
        %1830 = vmatprep.subr.bf16.mxu0 %v1771
        %1831 = vmatpush1.bf16.msra.mxu0 %v1770
        %1832 = vmatprep.subr.bf16.mxu0 %v1767
        %1833 = vmatpush1.bf16.msra.mxu0 %v1766
        %1834 = vmatprep.subr.bf16.mxu0 %v1763
        %1835 = vmatpush1.bf16.msra.mxu0 %v1762
        %1836 = vmatprep.subr.bf16.mxu0 %v1759
        %1837 = vmatpush1.bf16.msra.mxu0 %v1758
        %1838 = vmatprep.subr.bf16.mxu0 0
        %1839 = vmatpush2.bf16.msra.mxu0 0
        %1840 = vmatprep.subr.bf16.mxu0 0
        %1841 = vmatpush2.bf16.msra.mxu0 0
        %1842 = vmatprep.subr.bf16.mxu0 0
        %1843 = vmatpush2.bf16.msra.mxu0 0
        %1844 = vmatprep.subr.bf16.mxu0 0
        %1845 = vmatpush2.bf16.msra.mxu0 0
        %1846 = vmatprep.subr.bf16.mxu0 0
        %1847 = vmatpush2.bf16.msra.mxu0 0
        %1848 = vmatprep.subr.bf16.mxu0 0
        %1849 = vmatpush2.bf16.msra.mxu0 0
        %1850 = vmatprep.subr.bf16.mxu0 0
        %1851 = vmatpush2.bf16.msra.mxu0 0
        %1852 = vmatprep.subr.bf16.mxu0 0
        %1853 = vmatpush2.bf16.msra.mxu0 0
        %1854 = vmatprep.mubr.bf16.mxu0 0
        %1855 = vmatmul.mubr.bf16.gmra.mxu0 %v1100
        %v1856 = vpop.f32.mrf.mxu0
        %v1857 = vadd.f32 %v1471, %v1856
        %v1858 = vpop.f32.mrf.mxu0
        %v1859 = vadd.f32 %v1473, %v1858
        %v1860 = vpop.f32.mrf.mxu0
        %v1861 = vadd.f32 %v1475, %v1860
        %v1862 = vpop.f32.mrf.mxu0
        %v1863 = vadd.f32 %v1477, %v1862
        %1864 = vmatprep.mubr.bf16.mxu0 0
        %1865 = vmatmul.mubr.bf16.gmra.mxu0 %v1101
        %v1866 = vpop.f32.mrf.mxu0
        %v1867 = vadd.f32 %v1481, %v1866
        %v1868 = vpop.f32.mrf.mxu0
        %v1869 = vadd.f32 %v1483, %v1868
        %v1870 = vpop.f32.mrf.mxu0
        %v1871 = vadd.f32 %v1485, %v1870
        %v1872 = vpop.f32.mrf.mxu0
        %v1873 = vadd.f32 %v1487, %v1872
        %1874 = vmatprep.mubr.bf16.mxu0 0
        %1875 = vmatmul.mubr.bf16.gmra.mxu0 %v1102
        %v1876 = vpop.f32.mrf.mxu0
        %v1877 = vadd.f32 %v1491, %v1876
        %v1878 = vpop.f32.mrf.mxu0
        %v1879 = vadd.f32 %v1493, %v1878
        %v1880 = vpop.f32.mrf.mxu0
        %v1881 = vadd.f32 %v1495, %v1880
        %v1882 = vpop.f32.mrf.mxu0
        %v1883 = vadd.f32 %v1497, %v1882
        %1884 = vmatprep.mubr.bf16.mxu0 0
        %1885 = vmatmul.mubr.bf16.gmra.mxu0 %v1103
        %v1886 = vpop.f32.mrf.mxu0
        %v1887 = vadd.f32 %v1501, %v1886
        %v1888 = vpop.f32.mrf.mxu0
        %v1889 = vadd.f32 %v1503, %v1888
        %v1890 = vpop.f32.mrf.mxu0
        %v1891 = vadd.f32 %v1505, %v1890
        %v1892 = vpop.f32.mrf.mxu0
        %v1893 = vadd.f32 %v1507, %v1892
        %1894 = vmatprep.mubr.bf16.mxu0 0
        %1895 = vmatmul.mubr.bf16.gmra.mxu0 %v1104
        %v1896 = vpop.f32.mrf.mxu0
        %v1897 = vadd.f32 %v1511, %v1896
        %v1898 = vpop.f32.mrf.mxu0
        %v1899 = vadd.f32 %v1513, %v1898
        %v1900 = vpop.f32.mrf.mxu0
        %v1901 = vadd.f32 %v1515, %v1900
        %v1902 = vpop.f32.mrf.mxu0
        %v1903 = vadd.f32 %v1517, %v1902
        %1904 = vmatprep.mubr.bf16.mxu0 0
        %1905 = vmatmul.mubr.bf16.gmra.mxu0 %v1105
        %v1906 = vpop.f32.mrf.mxu0
        %v1907 = vadd.f32 %v1521, %v1906
        %v1908 = vpop.f32.mrf.mxu0
        %v1909 = vadd.f32 %v1523, %v1908
        %v1910 = vpop.f32.mrf.mxu0
        %v1911 = vadd.f32 %v1525, %v1910
        %v1912 = vpop.f32.mrf.mxu0
        %v1913 = vadd.f32 %v1527, %v1912
        %1914 = vmatprep.mubr.bf16.mxu0 0
        %1915 = vmatmul.mubr.bf16.gmra.mxu0 %v1106
        %v1916 = vpop.f32.mrf.mxu0
        %v1917 = vadd.f32 %v1531, %v1916
        %v1918 = vpop.f32.mrf.mxu0
        %v1919 = vadd.f32 %v1533, %v1918
        %v1920 = vpop.f32.mrf.mxu0
        %v1921 = vadd.f32 %v1535, %v1920
        %v1922 = vpop.f32.mrf.mxu0
        %v1923 = vadd.f32 %v1537, %v1922
        %1924 = vmatprep.mubr.bf16.mxu0 0
        %1925 = vmatmul.mubr.bf16.gmra.mxu0 %v1107
        %v1926 = vpop.f32.mrf.mxu0
        %v1927 = vadd.f32 %v1541, %v1926
        %v1928 = vpop.f32.mrf.mxu0
        %v1929 = vadd.f32 %v1543, %v1928
        %v1930 = vpop.f32.mrf.mxu0
        %v1931 = vadd.f32 %v1545, %v1930
        %v1932 = vpop.f32.mrf.mxu0
        %v1933 = vadd.f32 %v1547, %v1932
        %1934 = vdwg.mxu0
        %1935 = vmatprep.subr.bf16.mxu0 %v1789
        %1936 = vmatpush1.bf16.msra.mxu0 %v1788
        %1937 = vmatprep.subr.bf16.mxu0 %v1785
        %1938 = vmatpush1.bf16.msra.mxu0 %v1784
        %1939 = vmatprep.subr.bf16.mxu0 %v1781
        %1940 = vmatpush1.bf16.msra.mxu0 %v1780
        %1941 = vmatprep.subr.bf16.mxu0 %v1777
        %1942 = vmatpush1.bf16.msra.mxu0 %v1776
        %1943 = vmatprep.subr.bf16.mxu0 %v1773
        %1944 = vmatpush1.bf16.msra.mxu0 %v1772
        %1945 = vmatprep.subr.bf16.mxu0 %v1769
        %1946 = vmatpush1.bf16.msra.mxu0 %v1768
        %1947 = vmatprep.subr.bf16.mxu0 %v1765
        %1948 = vmatpush1.bf16.msra.mxu0 %v1764
        %1949 = vmatprep.subr.bf16.mxu0 %v1761
        %1950 = vmatpush1.bf16.msra.mxu0 %v1760
        %1951 = vmatprep.subr.bf16.mxu0 0
        %1952 = vmatpush2.bf16.msra.mxu0 0
        %1953 = vmatprep.subr.bf16.mxu0 0
        %1954 = vmatpush2.bf16.msra.mxu0 0
        %1955 = vmatprep.subr.bf16.mxu0 0
        %1956 = vmatpush2.bf16.msra.mxu0 0
        %1957 = vmatprep.subr.bf16.mxu0 0
        %1958 = vmatpush2.bf16.msra.mxu0 0
        %1959 = vmatprep.subr.bf16.mxu0 0
        %1960 = vmatpush2.bf16.msra.mxu0 0
        %1961 = vmatprep.subr.bf16.mxu0 0
        %1962 = vmatpush2.bf16.msra.mxu0 0
        %1963 = vmatprep.subr.bf16.mxu0 0
        %1964 = vmatpush2.bf16.msra.mxu0 0
        %1965 = vmatprep.subr.bf16.mxu0 0
        %1966 = vmatpush2.bf16.msra.mxu0 0
        %1967 = vmatprep.mubr.bf16.mxu0 0
        %1968 = vmatmul.mubr.bf16.gmra.mxu0 %v1100
        %v1969 = vpop.f32.mrf.mxu0
        %v1970 = vadd.f32 %v1584, %v1969
        %v1971 = vpop.f32.mrf.mxu0
        %v1972 = vadd.f32 %v1586, %v1971
        %v1973 = vpop.f32.mrf.mxu0
        %v1974 = vadd.f32 %v1588, %v1973
        %v1975 = vpop.f32.mrf.mxu0
        %v1976 = vadd.f32 %v1590, %v1975
        %1977 = vmatprep.mubr.bf16.mxu0 0
        %1978 = vmatmul.mubr.bf16.gmra.mxu0 %v1101
        %v1979 = vpop.f32.mrf.mxu0
        %v1980 = vadd.f32 %v1594, %v1979
        %v1981 = vpop.f32.mrf.mxu0
        %v1982 = vadd.f32 %v1596, %v1981
        %v1983 = vpop.f32.mrf.mxu0
        %v1984 = vadd.f32 %v1598, %v1983
        %v1985 = vpop.f32.mrf.mxu0
        %v1986 = vadd.f32 %v1600, %v1985
        %1987 = vmatprep.mubr.bf16.mxu0 0
        %1988 = vmatmul.mubr.bf16.gmra.mxu0 %v1102
        %v1989 = vpop.f32.mrf.mxu0
        %v1990 = vadd.f32 %v1604, %v1989
        %v1991 = vpop.f32.mrf.mxu0
        %v1992 = vadd.f32 %v1606, %v1991
        %v1993 = vpop.f32.mrf.mxu0
        %v1994 = vadd.f32 %v1608, %v1993
        %v1995 = vpop.f32.mrf.mxu0
        %v1996 = vadd.f32 %v1610, %v1995
        %1997 = vmatprep.mubr.bf16.mxu0 0
        %1998 = vmatmul.mubr.bf16.gmra.mxu0 %v1103
        %v1999 = vpop.f32.mrf.mxu0
        %v2000 = vadd.f32 %v1614, %v1999
        %v2001 = vpop.f32.mrf.mxu0
        %v2002 = vadd.f32 %v1616, %v2001
        %v2003 = vpop.f32.mrf.mxu0
        %v2004 = vadd.f32 %v1618, %v2003
        %v2005 = vpop.f32.mrf.mxu0
        %v2006 = vadd.f32 %v1620, %v2005
        %2007 = vmatprep.mubr.bf16.mxu0 0
        %2008 = vmatmul.mubr.bf16.gmra.mxu0 %v1104
        %v2009 = vpop.f32.mrf.mxu0
        %v2010 = vadd.f32 %v1624, %v2009
        %v2011 = vpop.f32.mrf.mxu0
        %v2012 = vadd.f32 %v1626, %v2011
        %v2013 = vpop.f32.mrf.mxu0
        %v2014 = vadd.f32 %v1628, %v2013
        %v2015 = vpop.f32.mrf.mxu0
        %v2016 = vadd.f32 %v1630, %v2015
        %2017 = vmatprep.mubr.bf16.mxu0 0
        %2018 = vmatmul.mubr.bf16.gmra.mxu0 %v1105
        %v2019 = vpop.f32.mrf.mxu0
        %v2020 = vadd.f32 %v1634, %v2019
        %v2021 = vpop.f32.mrf.mxu0
        %v2022 = vadd.f32 %v1636, %v2021
        %v2023 = vpop.f32.mrf.mxu0
        %v2024 = vadd.f32 %v1638, %v2023
        %v2025 = vpop.f32.mrf.mxu0
        %v2026 = vadd.f32 %v1640, %v2025
        %2027 = vmatprep.mubr.bf16.mxu0 0
        %2028 = vmatmul.mubr.bf16.gmra.mxu0 %v1106
        %v2029 = vpop.f32.mrf.mxu0
        %v2030 = vadd.f32 %v1644, %v2029
        %v2031 = vpop.f32.mrf.mxu0
        %v2032 = vadd.f32 %v1646, %v2031
        %v2033 = vpop.f32.mrf.mxu0
        %v2034 = vadd.f32 %v1648, %v2033
        %v2035 = vpop.f32.mrf.mxu0
        %v2036 = vadd.f32 %v1650, %v2035
        %2037 = vmatprep.mubr.bf16.mxu0 0
        %2038 = vmatmul.mubr.bf16.gmra.mxu0 %v1107
        %v2039 = vpop.f32.mrf.mxu0
        %v2040 = vadd.f32 %v1654, %v2039
        %v2041 = vpop.f32.mrf.mxu0
        %v2042 = vadd.f32 %v1656, %v2041
        %v2043 = vpop.f32.mrf.mxu0
        %v2044 = vadd.f32 %v1658, %v2043
        %v2045 = vpop.f32.mrf.mxu0
        %v2046 = vadd.f32 %v1660, %v2045
        %2047 = vdwg.mxu0
        %v2048 = vld [vmem:[%s810] sm:$0xff]
        %v2049 = vld [vmem:[%s810 + $0x8] sm:$0xff]
        %v2050 = vld [vmem:[%s810 + $0x10] sm:$0xff]
        %v2051 = vld [vmem:[%s810 + $0x18] sm:$0xff]
        %v2052 = vld [vmem:[%s810 + $0x20] sm:$0xff]
        %v2053 = vld [vmem:[%s810 + $0x28] sm:$0xff]
        %v2054 = vld [vmem:[%s810 + $0x30] sm:$0xff]
        %v2055 = vld [vmem:[%s810 + $0x38] sm:$0xff]
        %v2056 = vld [vmem:[%s810 + $0x40] sm:$0xff]
        %v2057 = vld [vmem:[%s810 + $0x48] sm:$0xff]
        %v2058 = vld [vmem:[%s810 + $0x50] sm:$0xff]
        %v2059 = vld [vmem:[%s810 + $0x58] sm:$0xff]
        %v2060 = vld [vmem:[%s810 + $0x60] sm:$0xff]
        %v2061 = vld [vmem:[%s810 + $0x68] sm:$0xff]
        %v2062 = vld [vmem:[%s810 + $0x70] sm:$0xff]
        %v2063 = vld [vmem:[%s810 + $0x78] sm:$0xff]
        %v2064 = vunpack.c.l.bf16 %v2048
        %v2065 = vunpack.c.h.bf16 %v2048
        %v2066 = vunpack.c.l.bf16 %v2049
        %v2067 = vunpack.c.h.bf16 %v2049
        %v2068 = vunpack.c.l.bf16 %v2050
        %v2069 = vunpack.c.h.bf16 %v2050
        %v2070 = vunpack.c.l.bf16 %v2051
        %v2071 = vunpack.c.h.bf16 %v2051
        %v2072 = vunpack.c.l.bf16 %v2052
        %v2073 = vunpack.c.h.bf16 %v2052
        %v2074 = vunpack.c.l.bf16 %v2053
        %v2075 = vunpack.c.h.bf16 %v2053
        %v2076 = vunpack.c.l.bf16 %v2054
        %v2077 = vunpack.c.h.bf16 %v2054
        %v2078 = vunpack.c.l.bf16 %v2055
        %v2079 = vunpack.c.h.bf16 %v2055
        %v2080 = vunpack.c.l.bf16 %v2056
        %v2081 = vunpack.c.h.bf16 %v2056
        %v2082 = vunpack.c.l.bf16 %v2057
        %v2083 = vunpack.c.h.bf16 %v2057
        %v2084 = vunpack.c.l.bf16 %v2058
        %v2085 = vunpack.c.h.bf16 %v2058
        %v2086 = vunpack.c.l.bf16 %v2059
        %v2087 = vunpack.c.h.bf16 %v2059
        %v2088 = vunpack.c.l.bf16 %v2060
        %v2089 = vunpack.c.h.bf16 %v2060
        %v2090 = vunpack.c.l.bf16 %v2061
        %v2091 = vunpack.c.h.bf16 %v2061
        %v2092 = vunpack.c.l.bf16 %v2062
        %v2093 = vunpack.c.h.bf16 %v2062
        %v2094 = vunpack.c.l.bf16 %v2063
        %v2095 = vunpack.c.h.bf16 %v2063
        %v2096 = vmul.f32 %v2064, 0.5
        %v2097 = vmul.f32 %v2065, 0.5
        %v2098 = vmul.f32 %v2066, 0.5
        %v2099 = vmul.f32 %v2067, 0.5
        %v2100 = vmul.f32 %v2068, 0.5
        %v2101 = vmul.f32 %v2069, 0.5
        %v2102 = vmul.f32 %v2070, 0.5
        %v2103 = vmul.f32 %v2071, 0.5
        %v2104 = vmul.f32 %v2072, 0.5
        %v2105 = vmul.f32 %v2073, 0.5
        %v2106 = vmul.f32 %v2074, 0.5
        %v2107 = vmul.f32 %v2075, 0.5
        %v2108 = vmul.f32 %v2076, 0.5
        %v2109 = vmul.f32 %v2077, 0.5
        %v2110 = vmul.f32 %v2078, 0.5
        %v2111 = vmul.f32 %v2079, 0.5
        %v2112 = vmul.f32 %v2080, 0.5
        %v2113 = vmul.f32 %v2081, 0.5
        %v2114 = vmul.f32 %v2082, 0.5
        %v2115 = vmul.f32 %v2083, 0.5
        %v2116 = vmul.f32 %v2084, 0.5
        %v2117 = vmul.f32 %v2085, 0.5
        %v2118 = vmul.f32 %v2086, 0.5
        %v2119 = vmul.f32 %v2087, 0.5
        %v2120 = vmul.f32 %v2088, 0.5
        %v2121 = vmul.f32 %v2089, 0.5
        %v2122 = vmul.f32 %v2090, 0.5
        %v2123 = vmul.f32 %v2091, 0.5
        %v2124 = vmul.f32 %v2092, 0.5
        %v2125 = vmul.f32 %v2093, 0.5
        %v2126 = vmul.f32 %v2094, 0.5
        %v2127 = vmul.f32 %v2095, 0.5
        %v2128 = vtanh.pop %v2096
        %v2129 = vtanh.pop %v2097
        %v2130 = vtanh.pop %v2098
        %v2131 = vtanh.pop %v2099
        %v2132 = vtanh.pop %v2100
        %v2133 = vtanh.pop %v2101
        %v2134 = vtanh.pop %v2102
        %v2135 = vtanh.pop %v2103
        %v2136 = vtanh.pop %v2104
        %v2137 = vtanh.pop %v2105
        %v2138 = vtanh.pop %v2106
        %v2139 = vtanh.pop %v2107
        %v2140 = vtanh.pop %v2108
        %v2141 = vtanh.pop %v2109
        %v2142 = vtanh.pop %v2110
        %v2143 = vtanh.pop %v2111
        %v2144 = vtanh.pop %v2112
        %v2145 = vtanh.pop %v2113
        %v2146 = vtanh.pop %v2114
        %v2147 = vtanh.pop %v2115
        %v2148 = vtanh.pop %v2116
        %v2149 = vtanh.pop %v2117
        %v2150 = vtanh.pop %v2118
        %v2151 = vtanh.pop %v2119
        %v2152 = vtanh.pop %v2120
        %v2153 = vtanh.pop %v2121
        %v2154 = vtanh.pop %v2122
        %v2155 = vtanh.pop %v2123
        %v2156 = vtanh.pop %v2124
        %v2157 = vtanh.pop %v2125
        %v2158 = vtanh.pop %v2126
        %v2159 = vtanh.pop %v2127
        %v2160 = vmul.f32 %v2128, 0.5
        %v2161 = vmul.f32 %v2129, 0.5
        %v2162 = vmul.f32 %v2130, 0.5
        %v2163 = vmul.f32 %v2131, 0.5
        %v2164 = vmul.f32 %v2132, 0.5
        %v2165 = vmul.f32 %v2133, 0.5
        %v2166 = vmul.f32 %v2134, 0.5
        %v2167 = vmul.f32 %v2135, 0.5
        %v2168 = vmul.f32 %v2136, 0.5
        %v2169 = vmul.f32 %v2137, 0.5
        %v2170 = vmul.f32 %v2138, 0.5
        %v2171 = vmul.f32 %v2139, 0.5
        %v2172 = vmul.f32 %v2140, 0.5
        %v2173 = vmul.f32 %v2141, 0.5
        %v2174 = vmul.f32 %v2142, 0.5
        %v2175 = vmul.f32 %v2143, 0.5
        %v2176 = vmul.f32 %v2144, 0.5
        %v2177 = vmul.f32 %v2145, 0.5
        %v2178 = vmul.f32 %v2146, 0.5
        %v2179 = vmul.f32 %v2147, 0.5
        %v2180 = vmul.f32 %v2148, 0.5
        %v2181 = vmul.f32 %v2149, 0.5
        %v2182 = vmul.f32 %v2150, 0.5
        %v2183 = vmul.f32 %v2151, 0.5
        %v2184 = vmul.f32 %v2152, 0.5
        %v2185 = vmul.f32 %v2153, 0.5
        %v2186 = vmul.f32 %v2154, 0.5
        %v2187 = vmul.f32 %v2155, 0.5
        %v2188 = vmul.f32 %v2156, 0.5
        %v2189 = vmul.f32 %v2157, 0.5
        %v2190 = vmul.f32 %v2158, 0.5
        %v2191 = vmul.f32 %v2159, 0.5
        %v2192 = vadd.f32 %v2160, 0.5
        %v2193 = vadd.f32 %v2161, 0.5
        %v2194 = vadd.f32 %v2162, 0.5
        %v2195 = vadd.f32 %v2163, 0.5
        %v2196 = vadd.f32 %v2164, 0.5
        %v2197 = vadd.f32 %v2165, 0.5
        %v2198 = vadd.f32 %v2166, 0.5
        %v2199 = vadd.f32 %v2167, 0.5
        %v2200 = vadd.f32 %v2168, 0.5
        %v2201 = vadd.f32 %v2169, 0.5
        %v2202 = vadd.f32 %v2170, 0.5
        %v2203 = vadd.f32 %v2171, 0.5
        %v2204 = vadd.f32 %v2172, 0.5
        %v2205 = vadd.f32 %v2173, 0.5
        %v2206 = vadd.f32 %v2174, 0.5
        %v2207 = vadd.f32 %v2175, 0.5
        %v2208 = vadd.f32 %v2176, 0.5
        %v2209 = vadd.f32 %v2177, 0.5
        %v2210 = vadd.f32 %v2178, 0.5
        %v2211 = vadd.f32 %v2179, 0.5
        %v2212 = vadd.f32 %v2180, 0.5
        %v2213 = vadd.f32 %v2181, 0.5
        %v2214 = vadd.f32 %v2182, 0.5
        %v2215 = vadd.f32 %v2183, 0.5
        %v2216 = vadd.f32 %v2184, 0.5
        %v2217 = vadd.f32 %v2185, 0.5
        %v2218 = vadd.f32 %v2186, 0.5
        %v2219 = vadd.f32 %v2187, 0.5
        %v2220 = vadd.f32 %v2188, 0.5
        %v2221 = vadd.f32 %v2189, 0.5
        %v2222 = vadd.f32 %v2190, 0.5
        %v2223 = vadd.f32 %v2191, 0.5
        %v2224 = vpack.c.bf16 %v2194, %v2192
        %v2225 = vpack.c.bf16 %v2195, %v2193
        %v2226 = vpack.c.bf16 %v2198, %v2196
        %v2227 = vpack.c.bf16 %v2199, %v2197
        %v2228 = vpack.c.bf16 %v2202, %v2200
        %v2229 = vpack.c.bf16 %v2203, %v2201
        %v2230 = vpack.c.bf16 %v2206, %v2204
        %v2231 = vpack.c.bf16 %v2207, %v2205
        %v2232 = vpack.c.bf16 %v2210, %v2208
        %v2233 = vpack.c.bf16 %v2211, %v2209
        %v2234 = vpack.c.bf16 %v2214, %v2212
        %v2235 = vpack.c.bf16 %v2215, %v2213
        %v2236 = vpack.c.bf16 %v2218, %v2216
        %v2237 = vpack.c.bf16 %v2219, %v2217
        %v2238 = vpack.c.bf16 %v2222, %v2220
        %v2239 = vpack.c.bf16 %v2223, %v2221
        %v2240 = vld [vmem:[#allocation16] sm:$0xff]
        %v2241 = vld [vmem:[#allocation16 + $0x8] sm:$0xff]
        %v2242 = vld [vmem:[#allocation16 + $0x10] sm:$0xff]
        %v2243 = vld [vmem:[#allocation16 + $0x18] sm:$0xff]
        %v2244 = vld [vmem:[#allocation16 + $0x20] sm:$0xff]
        %v2245 = vld [vmem:[#allocation16 + $0x28] sm:$0xff]
        %v2246 = vld [vmem:[#allocation16 + $0x30] sm:$0xff]
        %v2247 = vld [vmem:[#allocation16 + $0x38] sm:$0xff]
        %v2248 = vld [vmem:[#allocation16 + $0x40] sm:$0xff]
        %v2249 = vld [vmem:[#allocation16 + $0x48] sm:$0xff]
        %v2250 = vld [vmem:[#allocation16 + $0x50] sm:$0xff]
        %v2251 = vld [vmem:[#allocation16 + $0x58] sm:$0xff]
        %v2252 = vld [vmem:[#allocation16 + $0x60] sm:$0xff]
        %v2253 = vld [vmem:[#allocation16 + $0x68] sm:$0xff]
        %v2254 = vld [vmem:[#allocation16 + $0x70] sm:$0xff]
        %v2255 = vld [vmem:[#allocation16 + $0x78] sm:$0xff]
        %v2256 = vld [vmem:[#allocation16 + $0x80] sm:$0xff]
        %v2257 = vld [vmem:[#allocation16 + $0x88] sm:$0xff]
        %v2258 = vld [vmem:[#allocation16 + $0x90] sm:$0xff]
        %v2259 = vld [vmem:[#allocation16 + $0x98] sm:$0xff]
        %v2260 = vld [vmem:[#allocation16 + $0xa0] sm:$0xff]
        %v2261 = vld [vmem:[#allocation16 + $0xa8] sm:$0xff]
        %v2262 = vld [vmem:[#allocation16 + $0xb0] sm:$0xff]
        %v2263 = vld [vmem:[#allocation16 + $0xb8] sm:$0xff]
        %v2264 = vld [vmem:[#allocation16 + $0xc0] sm:$0xff]
        %v2265 = vld [vmem:[#allocation16 + $0xc8] sm:$0xff]
        %v2266 = vld [vmem:[#allocation16 + $0xd0] sm:$0xff]
        %v2267 = vld [vmem:[#allocation16 + $0xd8] sm:$0xff]
        %v2268 = vld [vmem:[#allocation16 + $0xe0] sm:$0xff]
        %v2269 = vld [vmem:[#allocation16 + $0xe8] sm:$0xff]
        %v2270 = vld [vmem:[#allocation16 + $0xf0] sm:$0xff]
        %v2271 = vld [vmem:[#allocation16 + $0xf8] sm:$0xff]
        %v2272 = vld [vmem:[#allocation16 + $0x100] sm:$0xff]
        %v2273 = vld [vmem:[#allocation16 + $0x108] sm:$0xff]
        %v2274 = vld [vmem:[#allocation16 + $0x110] sm:$0xff]
        %v2275 = vld [vmem:[#allocation16 + $0x118] sm:$0xff]
        %v2276 = vld [vmem:[#allocation16 + $0x120] sm:$0xff]
        %v2277 = vld [vmem:[#allocation16 + $0x128] sm:$0xff]
        %v2278 = vld [vmem:[#allocation16 + $0x130] sm:$0xff]
        %v2279 = vld [vmem:[#allocation16 + $0x138] sm:$0xff]
        %v2280 = vld [vmem:[#allocation16 + $0x140] sm:$0xff]
        %v2281 = vld [vmem:[#allocation16 + $0x148] sm:$0xff]
        %v2282 = vld [vmem:[#allocation16 + $0x150] sm:$0xff]
        %v2283 = vld [vmem:[#allocation16 + $0x158] sm:$0xff]
        %v2284 = vld [vmem:[#allocation16 + $0x160] sm:$0xff]
        %v2285 = vld [vmem:[#allocation16 + $0x168] sm:$0xff]
        %v2286 = vld [vmem:[#allocation16 + $0x170] sm:$0xff]
        %v2287 = vld [vmem:[#allocation16 + $0x178] sm:$0xff]
        %v2288 = vld [vmem:[#allocation16 + $0x180] sm:$0xff]
        %v2289 = vld [vmem:[#allocation16 + $0x188] sm:$0xff]
        %v2290 = vld [vmem:[#allocation16 + $0x190] sm:$0xff]
        %v2291 = vld [vmem:[#allocation16 + $0x198] sm:$0xff]
        %v2292 = vld [vmem:[#allocation16 + $0x1a0] sm:$0xff]
        %v2293 = vld [vmem:[#allocation16 + $0x1a8] sm:$0xff]
        %v2294 = vld [vmem:[#allocation16 + $0x1b0] sm:$0xff]
        %v2295 = vld [vmem:[#allocation16 + $0x1b8] sm:$0xff]
        %v2296 = vld [vmem:[#allocation16 + $0x1c0] sm:$0xff]
        %v2297 = vld [vmem:[#allocation16 + $0x1c8] sm:$0xff]
        %v2298 = vld [vmem:[#allocation16 + $0x1d0] sm:$0xff]
        %v2299 = vld [vmem:[#allocation16 + $0x1d8] sm:$0xff]
        %v2300 = vld [vmem:[#allocation16 + $0x1e0] sm:$0xff]
        %v2301 = vld [vmem:[#allocation16 + $0x1e8] sm:$0xff]
        %v2302 = vld [vmem:[#allocation16 + $0x1f0] sm:$0xff]
        %v2303 = vld [vmem:[#allocation16 + $0x1f8] sm:$0xff]
        %v2368 = vunpack.c.l.b16 %v2240
        %v2369 = vunpack.c.h.b16 %v2240
        %v2370 = vunpack.c.l.b16 %v2241
        %v2371 = vunpack.c.h.b16 %v2241
        %v2372 = vunpack.c.l.b16 %v2242
        %v2373 = vunpack.c.h.b16 %v2242
        %v2374 = vunpack.c.l.b16 %v2243
        %v2375 = vunpack.c.h.b16 %v2243
        %v2376 = vunpack.c.l.b16 %v2244
        %v2377 = vunpack.c.h.b16 %v2244
        %v2378 = vunpack.c.l.b16 %v2245
        %v2379 = vunpack.c.h.b16 %v2245
        %v2380 = vunpack.c.l.b16 %v2246
        %v2381 = vunpack.c.h.b16 %v2246
        %v2382 = vunpack.c.l.b16 %v2247
        %v2383 = vunpack.c.h.b16 %v2247
        %v2384 = vunpack.c.l.b16 %v2248
        %v2385 = vunpack.c.h.b16 %v2248
        %v2386 = vunpack.c.l.b16 %v2249
        %v2387 = vunpack.c.h.b16 %v2249
        %v2388 = vunpack.c.l.b16 %v2250
        %v2389 = vunpack.c.h.b16 %v2250
        %v2390 = vunpack.c.l.b16 %v2251
        %v2391 = vunpack.c.h.b16 %v2251
        %v2392 = vunpack.c.l.b16 %v2252
        %v2393 = vunpack.c.h.b16 %v2252
        %v2394 = vunpack.c.l.b16 %v2253
        %v2395 = vunpack.c.h.b16 %v2253
        %v2396 = vunpack.c.l.b16 %v2254
        %v2397 = vunpack.c.h.b16 %v2254
        %v2398 = vunpack.c.l.b16 %v2255
        %v2399 = vunpack.c.h.b16 %v2255
        %v2400 = vunpack.c.l.b16 %v2256
        %v2401 = vunpack.c.h.b16 %v2256
        %v2402 = vunpack.c.l.b16 %v2257
        %v2403 = vunpack.c.h.b16 %v2257
        %v2404 = vunpack.c.l.b16 %v2258
        %v2405 = vunpack.c.h.b16 %v2258
        %v2406 = vunpack.c.l.b16 %v2259
        %v2407 = vunpack.c.h.b16 %v2259
        %v2408 = vunpack.c.l.b16 %v2260
        %v2409 = vunpack.c.h.b16 %v2260
        %v2410 = vunpack.c.l.b16 %v2261
        %v2411 = vunpack.c.h.b16 %v2261
        %v2412 = vunpack.c.l.b16 %v2262
        %v2413 = vunpack.c.h.b16 %v2262
        %v2414 = vunpack.c.l.b16 %v2263
        %v2415 = vunpack.c.h.b16 %v2263
        %v2416 = vunpack.c.l.b16 %v2264
        %v2417 = vunpack.c.h.b16 %v2264
        %v2418 = vunpack.c.l.b16 %v2265
        %v2419 = vunpack.c.h.b16 %v2265
        %v2420 = vunpack.c.l.b16 %v2266
        %v2421 = vunpack.c.h.b16 %v2266
        %v2422 = vunpack.c.l.b16 %v2267
        %v2423 = vunpack.c.h.b16 %v2267
        %v2424 = vunpack.c.l.b16 %v2268
        %v2425 = vunpack.c.h.b16 %v2268
        %v2426 = vunpack.c.l.b16 %v2269
        %v2427 = vunpack.c.h.b16 %v2269
        %v2428 = vunpack.c.l.b16 %v2270
        %v2429 = vunpack.c.h.b16 %v2270
        %v2430 = vunpack.c.l.b16 %v2271
        %v2431 = vunpack.c.h.b16 %v2271
        %v2432 = vunpack.c.l.b16 %v2272
        %v2433 = vunpack.c.h.b16 %v2272
        %v2434 = vunpack.c.l.b16 %v2273
        %v2435 = vunpack.c.h.b16 %v2273
        %v2436 = vunpack.c.l.b16 %v2274
        %v2437 = vunpack.c.h.b16 %v2274
        %v2438 = vunpack.c.l.b16 %v2275
        %v2439 = vunpack.c.h.b16 %v2275
        %v2440 = vunpack.c.l.b16 %v2276
        %v2441 = vunpack.c.h.b16 %v2276
        %v2442 = vunpack.c.l.b16 %v2277
        %v2443 = vunpack.c.h.b16 %v2277
        %v2444 = vunpack.c.l.b16 %v2278
        %v2445 = vunpack.c.h.b16 %v2278
        %v2446 = vunpack.c.l.b16 %v2279
        %v2447 = vunpack.c.h.b16 %v2279
        %v2448 = vunpack.c.l.b16 %v2280
        %v2449 = vunpack.c.h.b16 %v2280
        %v2450 = vunpack.c.l.b16 %v2281
        %v2451 = vunpack.c.h.b16 %v2281
        %v2452 = vunpack.c.l.b16 %v2282
        %v2453 = vunpack.c.h.b16 %v2282
        %v2454 = vunpack.c.l.b16 %v2283
        %v2455 = vunpack.c.h.b16 %v2283
        %v2456 = vunpack.c.l.b16 %v2284
        %v2457 = vunpack.c.h.b16 %v2284
        %v2458 = vunpack.c.l.b16 %v2285
        %v2459 = vunpack.c.h.b16 %v2285
        %v2460 = vunpack.c.l.b16 %v2286
        %v2461 = vunpack.c.h.b16 %v2286
        %v2462 = vunpack.c.l.b16 %v2287
        %v2463 = vunpack.c.h.b16 %v2287
        %v2464 = vunpack.c.l.b16 %v2288
        %v2465 = vunpack.c.h.b16 %v2288
        %v2466 = vunpack.c.l.b16 %v2289
        %v2467 = vunpack.c.h.b16 %v2289
        %v2468 = vunpack.c.l.b16 %v2290
        %v2469 = vunpack.c.h.b16 %v2290
        %v2470 = vunpack.c.l.b16 %v2291
        %v2471 = vunpack.c.h.b16 %v2291
        %v2472 = vunpack.c.l.b16 %v2292
        %v2473 = vunpack.c.h.b16 %v2292
        %v2474 = vunpack.c.l.b16 %v2293
        %v2475 = vunpack.c.h.b16 %v2293
        %v2476 = vunpack.c.l.b16 %v2294
        %v2477 = vunpack.c.h.b16 %v2294
        %v2478 = vunpack.c.l.b16 %v2295
        %v2479 = vunpack.c.h.b16 %v2295
        %v2480 = vunpack.c.l.b16 %v2296
        %v2481 = vunpack.c.h.b16 %v2296
        %v2482 = vunpack.c.l.b16 %v2297
        %v2483 = vunpack.c.h.b16 %v2297
        %v2484 = vunpack.c.l.b16 %v2298
        %v2485 = vunpack.c.h.b16 %v2298
        %v2486 = vunpack.c.l.b16 %v2299
        %v2487 = vunpack.c.h.b16 %v2299
        %v2488 = vunpack.c.l.b16 %v2300
        %v2489 = vunpack.c.h.b16 %v2300
        %v2490 = vunpack.c.l.b16 %v2301
        %v2491 = vunpack.c.h.b16 %v2301
        %v2492 = vunpack.c.l.b16 %v2302
        %v2493 = vunpack.c.h.b16 %v2302
        %v2494 = vunpack.c.l.b16 %v2303
        %v2495 = vunpack.c.h.b16 %v2303
        %v2496 = vpack.c.b16 %v2372, %v2368
        %v2497 = vpack.c.b16 %v2373, %v2369
        %v2498 = vpack.c.b16 %v2374, %v2370
        %v2499 = vpack.c.b16 %v2375, %v2371
        %v2500 = vpack.c.b16 %v2380, %v2376
        %v2501 = vpack.c.b16 %v2381, %v2377
        %v2502 = vpack.c.b16 %v2382, %v2378
        %v2503 = vpack.c.b16 %v2383, %v2379
        %v2504 = vpack.c.b16 %v2388, %v2384
        %v2505 = vpack.c.b16 %v2389, %v2385
        %v2506 = vpack.c.b16 %v2390, %v2386
        %v2507 = vpack.c.b16 %v2391, %v2387
        %v2508 = vpack.c.b16 %v2396, %v2392
        %v2509 = vpack.c.b16 %v2397, %v2393
        %v2510 = vpack.c.b16 %v2398, %v2394
        %v2511 = vpack.c.b16 %v2399, %v2395
        %v2512 = vpack.c.b16 %v2404, %v2400
        %v2513 = vpack.c.b16 %v2405, %v2401
        %v2514 = vpack.c.b16 %v2406, %v2402
        %v2515 = vpack.c.b16 %v2407, %v2403
        %v2516 = vpack.c.b16 %v2412, %v2408
        %v2517 = vpack.c.b16 %v2413, %v2409
        %v2518 = vpack.c.b16 %v2414, %v2410
        %v2519 = vpack.c.b16 %v2415, %v2411
        %v2520 = vpack.c.b16 %v2420, %v2416
        %v2521 = vpack.c.b16 %v2421, %v2417
        %v2522 = vpack.c.b16 %v2422, %v2418
        %v2523 = vpack.c.b16 %v2423, %v2419
        %v2524 = vpack.c.b16 %v2428, %v2424
        %v2525 = vpack.c.b16 %v2429, %v2425
        %v2526 = vpack.c.b16 %v2430, %v2426
        %v2527 = vpack.c.b16 %v2431, %v2427
        %v2528 = vpack.c.b16 %v2436, %v2432
        %v2529 = vpack.c.b16 %v2437, %v2433
        %v2530 = vpack.c.b16 %v2438, %v2434
        %v2531 = vpack.c.b16 %v2439, %v2435
        %v2532 = vpack.c.b16 %v2444, %v2440
        %v2533 = vpack.c.b16 %v2445, %v2441
        %v2534 = vpack.c.b16 %v2446, %v2442
        %v2535 = vpack.c.b16 %v2447, %v2443
        %v2536 = vpack.c.b16 %v2452, %v2448
        %v2537 = vpack.c.b16 %v2453, %v2449
        %v2538 = vpack.c.b16 %v2454, %v2450
        %v2539 = vpack.c.b16 %v2455, %v2451
        %v2540 = vpack.c.b16 %v2460, %v2456
        %v2541 = vpack.c.b16 %v2461, %v2457
        %v2542 = vpack.c.b16 %v2462, %v2458
        %v2543 = vpack.c.b16 %v2463, %v2459
        %v2544 = vpack.c.b16 %v2468, %v2464
        %v2545 = vpack.c.b16 %v2469, %v2465
        %v2546 = vpack.c.b16 %v2470, %v2466
        %v2547 = vpack.c.b16 %v2471, %v2467
        %v2548 = vpack.c.b16 %v2476, %v2472
        %v2549 = vpack.c.b16 %v2477, %v2473
        %v2550 = vpack.c.b16 %v2478, %v2474
        %v2551 = vpack.c.b16 %v2479, %v2475
        %v2552 = vpack.c.b16 %v2484, %v2480
        %v2553 = vpack.c.b16 %v2485, %v2481
        %v2554 = vpack.c.b16 %v2486, %v2482
        %v2555 = vpack.c.b16 %v2487, %v2483
        %v2556 = vpack.c.b16 %v2492, %v2488
        %v2557 = vpack.c.b16 %v2493, %v2489
        %v2558 = vpack.c.b16 %v2494, %v2490
        %v2559 = vpack.c.b16 %v2495, %v2491
        %2624 = vmatprep.subr.bf16.mxu0 %v2525
        %2625 = vmatpush1.bf16.msra.mxu0 %v2524
        %2626 = vmatprep.subr.bf16.mxu0 %v2521
        %2627 = vmatpush1.bf16.msra.mxu0 %v2520
        %2628 = vmatprep.subr.bf16.mxu0 %v2517
        %2629 = vmatpush1.bf16.msra.mxu0 %v2516
        %2630 = vmatprep.subr.bf16.mxu0 %v2513
        %2631 = vmatpush1.bf16.msra.mxu0 %v2512
        %2632 = vmatprep.subr.bf16.mxu0 %v2509
        %2633 = vmatpush1.bf16.msra.mxu0 %v2508
        %2634 = vmatprep.subr.bf16.mxu0 %v2505
        %2635 = vmatpush1.bf16.msra.mxu0 %v2504
        %2636 = vmatprep.subr.bf16.mxu0 %v2501
        %2637 = vmatpush1.bf16.msra.mxu0 %v2500
        %2638 = vmatprep.subr.bf16.mxu0 %v2497
        %2639 = vmatpush1.bf16.msra.mxu0 %v2496
        %2640 = vmatprep.subr.bf16.mxu0 %v2557
        %2641 = vmatpush2.bf16.msra.mxu0 %v2556
        %2642 = vmatprep.subr.bf16.mxu0 %v2553
        %2643 = vmatpush2.bf16.msra.mxu0 %v2552
        %2644 = vmatprep.subr.bf16.mxu0 %v2549
        %2645 = vmatpush2.bf16.msra.mxu0 %v2548
        %2646 = vmatprep.subr.bf16.mxu0 %v2545
        %2647 = vmatpush2.bf16.msra.mxu0 %v2544
        %2648 = vmatprep.subr.bf16.mxu0 %v2541
        %2649 = vmatpush2.bf16.msra.mxu0 %v2540
        %2650 = vmatprep.subr.bf16.mxu0 %v2537
        %2651 = vmatpush2.bf16.msra.mxu0 %v2536
        %2652 = vmatprep.subr.bf16.mxu0 %v2533
        %2653 = vmatpush2.bf16.msra.mxu0 %v2532
        %2654 = vmatprep.subr.bf16.mxu0 %v2529
        %2655 = vmatpush2.bf16.msra.mxu0 %v2528
        %2656 = vmatprep.mubr.bf16.mxu0 %v2225
        %2657 = vmatmul.mubr.bf16.gmra.mxu0 %v2224
        %v2658 = vpop.f32.mrf.mxu0
        %v2659 = vadd.f32 0.0, %v2658
        %v2660 = vpop.f32.mrf.mxu0
        %v2661 = vadd.f32 0.0, %v2660
        %v2662 = vpop.f32.mrf.mxu0
        %v2663 = vadd.f32 0.0, %v2662
        %v2664 = vpop.f32.mrf.mxu0
        %v2665 = vadd.f32 0.0, %v2664
        %2666 = vmatprep.mubr.bf16.mxu0 %v2227
        %2667 = vmatmul.mubr.bf16.gmra.mxu0 %v2226
        %v2668 = vpop.f32.mrf.mxu0
        %v2669 = vadd.f32 0.0, %v2668
        %v2670 = vpop.f32.mrf.mxu0
        %v2671 = vadd.f32 0.0, %v2670
        %v2672 = vpop.f32.mrf.mxu0
        %v2673 = vadd.f32 0.0, %v2672
        %v2674 = vpop.f32.mrf.mxu0
        %v2675 = vadd.f32 0.0, %v2674
        %2676 = vmatprep.mubr.bf16.mxu0 %v2229
        %2677 = vmatmul.mubr.bf16.gmra.mxu0 %v2228
        %v2678 = vpop.f32.mrf.mxu0
        %v2679 = vadd.f32 0.0, %v2678
        %v2680 = vpop.f32.mrf.mxu0
        %v2681 = vadd.f32 0.0, %v2680
        %v2682 = vpop.f32.mrf.mxu0
        %v2683 = vadd.f32 0.0, %v2682
        %v2684 = vpop.f32.mrf.mxu0
        %v2685 = vadd.f32 0.0, %v2684
        %2686 = vmatprep.mubr.bf16.mxu0 %v2231
        %2687 = vmatmul.mubr.bf16.gmra.mxu0 %v2230
        %v2688 = vpop.f32.mrf.mxu0
        %v2689 = vadd.f32 0.0, %v2688
        %v2690 = vpop.f32.mrf.mxu0
        %v2691 = vadd.f32 0.0, %v2690
        %v2692 = vpop.f32.mrf.mxu0
        %v2693 = vadd.f32 0.0, %v2692
        %v2694 = vpop.f32.mrf.mxu0
        %v2695 = vadd.f32 0.0, %v2694
        %2696 = vmatprep.mubr.bf16.mxu0 %v2233
        %2697 = vmatmul.mubr.bf16.gmra.mxu0 %v2232
        %v2698 = vpop.f32.mrf.mxu0
        %v2699 = vadd.f32 0.0, %v2698
        %v2700 = vpop.f32.mrf.mxu0
        %v2701 = vadd.f32 0.0, %v2700
        %v2702 = vpop.f32.mrf.mxu0
        %v2703 = vadd.f32 0.0, %v2702
        %v2704 = vpop.f32.mrf.mxu0
        %v2705 = vadd.f32 0.0, %v2704
        %2706 = vmatprep.mubr.bf16.mxu0 %v2235
        %2707 = vmatmul.mubr.bf16.gmra.mxu0 %v2234
        %v2708 = vpop.f32.mrf.mxu0
        %v2709 = vadd.f32 0.0, %v2708
        %v2710 = vpop.f32.mrf.mxu0
        %v2711 = vadd.f32 0.0, %v2710
        %v2712 = vpop.f32.mrf.mxu0
        %v2713 = vadd.f32 0.0, %v2712
        %v2714 = vpop.f32.mrf.mxu0
        %v2715 = vadd.f32 0.0, %v2714
        %2716 = vmatprep.mubr.bf16.mxu0 %v2237
        %2717 = vmatmul.mubr.bf16.gmra.mxu0 %v2236
        %v2718 = vpop.f32.mrf.mxu0
        %v2719 = vadd.f32 0.0, %v2718
        %v2720 = vpop.f32.mrf.mxu0
        %v2721 = vadd.f32 0.0, %v2720
        %v2722 = vpop.f32.mrf.mxu0
        %v2723 = vadd.f32 0.0, %v2722
        %v2724 = vpop.f32.mrf.mxu0
        %v2725 = vadd.f32 0.0, %v2724
        %2726 = vmatprep.mubr.bf16.mxu0 %v2239
        %2727 = vmatmul.mubr.bf16.gmra.mxu0 %v2238
        %v2728 = vpop.f32.mrf.mxu0
        %v2729 = vadd.f32 0.0, %v2728
        %v2730 = vpop.f32.mrf.mxu0
        %v2731 = vadd.f32 0.0, %v2730
        %v2732 = vpop.f32.mrf.mxu0
        %v2733 = vadd.f32 0.0, %v2732
        %v2734 = vpop.f32.mrf.mxu0
        %v2735 = vadd.f32 0.0, %v2734
        %2736 = vdwg.mxu0
        %2737 = vmatprep.subr.bf16.mxu0 %v2527
        %2738 = vmatpush1.bf16.msra.mxu0 %v2526
        %2739 = vmatprep.subr.bf16.mxu0 %v2523
        %2740 = vmatpush1.bf16.msra.mxu0 %v2522
        %2741 = vmatprep.subr.bf16.mxu0 %v2519
        %2742 = vmatpush1.bf16.msra.mxu0 %v2518
        %2743 = vmatprep.subr.bf16.mxu0 %v2515
        %2744 = vmatpush1.bf16.msra.mxu0 %v2514
        %2745 = vmatprep.subr.bf16.mxu0 %v2511
        %2746 = vmatpush1.bf16.msra.mxu0 %v2510
        %2747 = vmatprep.subr.bf16.mxu0 %v2507
        %2748 = vmatpush1.bf16.msra.mxu0 %v2506
        %2749 = vmatprep.subr.bf16.mxu0 %v2503
        %2750 = vmatpush1.bf16.msra.mxu0 %v2502
        %2751 = vmatprep.subr.bf16.mxu0 %v2499
        %2752 = vmatpush1.bf16.msra.mxu0 %v2498
        %2753 = vmatprep.subr.bf16.mxu0 %v2559
        %2754 = vmatpush2.bf16.msra.mxu0 %v2558
        %2755 = vmatprep.subr.bf16.mxu0 %v2555
        %2756 = vmatpush2.bf16.msra.mxu0 %v2554
        %2757 = vmatprep.subr.bf16.mxu0 %v2551
        %2758 = vmatpush2.bf16.msra.mxu0 %v2550
        %2759 = vmatprep.subr.bf16.mxu0 %v2547
        %2760 = vmatpush2.bf16.msra.mxu0 %v2546
        %2761 = vmatprep.subr.bf16.mxu0 %v2543
        %2762 = vmatpush2.bf16.msra.mxu0 %v2542
        %2763 = vmatprep.subr.bf16.mxu0 %v2539
        %2764 = vmatpush2.bf16.msra.mxu0 %v2538
        %2765 = vmatprep.subr.bf16.mxu0 %v2535
        %2766 = vmatpush2.bf16.msra.mxu0 %v2534
        %2767 = vmatprep.subr.bf16.mxu0 %v2531
        %2768 = vmatpush2.bf16.msra.mxu0 %v2530
        %2769 = vmatprep.mubr.bf16.mxu0 %v2225
        %2770 = vmatmul.mubr.bf16.gmra.mxu0 %v2224
        %v2771 = vpop.f32.mrf.mxu0
        %v2772 = vadd.f32 0.0, %v2771
        %v2773 = vpop.f32.mrf.mxu0
        %v2774 = vadd.f32 0.0, %v2773
        %v2775 = vpop.f32.mrf.mxu0
        %v2776 = vadd.f32 0.0, %v2775
        %v2777 = vpop.f32.mrf.mxu0
        %v2778 = vadd.f32 0.0, %v2777
        %2779 = vmatprep.mubr.bf16.mxu0 %v2227
        %2780 = vmatmul.mubr.bf16.gmra.mxu0 %v2226
        %v2781 = vpop.f32.mrf.mxu0
        %v2782 = vadd.f32 0.0, %v2781
        %v2783 = vpop.f32.mrf.mxu0
        %v2784 = vadd.f32 0.0, %v2783
        %v2785 = vpop.f32.mrf.mxu0
        %v2786 = vadd.f32 0.0, %v2785
        %v2787 = vpop.f32.mrf.mxu0
        %v2788 = vadd.f32 0.0, %v2787
        %2789 = vmatprep.mubr.bf16.mxu0 %v2229
        %2790 = vmatmul.mubr.bf16.gmra.mxu0 %v2228
        %v2791 = vpop.f32.mrf.mxu0
        %v2792 = vadd.f32 0.0, %v2791
        %v2793 = vpop.f32.mrf.mxu0
        %v2794 = vadd.f32 0.0, %v2793
        %v2795 = vpop.f32.mrf.mxu0
        %v2796 = vadd.f32 0.0, %v2795
        %v2797 = vpop.f32.mrf.mxu0
        %v2798 = vadd.f32 0.0, %v2797
        %2799 = vmatprep.mubr.bf16.mxu0 %v2231
        %2800 = vmatmul.mubr.bf16.gmra.mxu0 %v2230
        %v2801 = vpop.f32.mrf.mxu0
        %v2802 = vadd.f32 0.0, %v2801
        %v2803 = vpop.f32.mrf.mxu0
        %v2804 = vadd.f32 0.0, %v2803
        %v2805 = vpop.f32.mrf.mxu0
        %v2806 = vadd.f32 0.0, %v2805
        %v2807 = vpop.f32.mrf.mxu0
        %v2808 = vadd.f32 0.0, %v2807
        %2809 = vmatprep.mubr.bf16.mxu0 %v2233
        %2810 = vmatmul.mubr.bf16.gmra.mxu0 %v2232
        %v2811 = vpop.f32.mrf.mxu0
        %v2812 = vadd.f32 0.0, %v2811
        %v2813 = vpop.f32.mrf.mxu0
        %v2814 = vadd.f32 0.0, %v2813
        %v2815 = vpop.f32.mrf.mxu0
        %v2816 = vadd.f32 0.0, %v2815
        %v2817 = vpop.f32.mrf.mxu0
        %v2818 = vadd.f32 0.0, %v2817
        %2819 = vmatprep.mubr.bf16.mxu0 %v2235
        %2820 = vmatmul.mubr.bf16.gmra.mxu0 %v2234
        %v2821 = vpop.f32.mrf.mxu0
        %v2822 = vadd.f32 0.0, %v2821
        %v2823 = vpop.f32.mrf.mxu0
        %v2824 = vadd.f32 0.0, %v2823
        %v2825 = vpop.f32.mrf.mxu0
        %v2826 = vadd.f32 0.0, %v2825
        %v2827 = vpop.f32.mrf.mxu0
        %v2828 = vadd.f32 0.0, %v2827
        %2829 = vmatprep.mubr.bf16.mxu0 %v2237
        %2830 = vmatmul.mubr.bf16.gmra.mxu0 %v2236
        %v2831 = vpop.f32.mrf.mxu0
        %v2832 = vadd.f32 0.0, %v2831
        %v2833 = vpop.f32.mrf.mxu0
        %v2834 = vadd.f32 0.0, %v2833
        %v2835 = vpop.f32.mrf.mxu0
        %v2836 = vadd.f32 0.0, %v2835
        %v2837 = vpop.f32.mrf.mxu0
        %v2838 = vadd.f32 0.0, %v2837
        %2839 = vmatprep.mubr.bf16.mxu0 %v2239
        %2840 = vmatmul.mubr.bf16.gmra.mxu0 %v2238
        %v2841 = vpop.f32.mrf.mxu0
        %v2842 = vadd.f32 0.0, %v2841
        %v2843 = vpop.f32.mrf.mxu0
        %v2844 = vadd.f32 0.0, %v2843
        %v2845 = vpop.f32.mrf.mxu0
        %v2846 = vadd.f32 0.0, %v2845
        %v2847 = vpop.f32.mrf.mxu0
        %v2848 = vadd.f32 0.0, %v2847
        %2849 = vdwg.mxu0
        %v2850 = vadd.f32 %v1857, %v2659
        %v2851 = vadd.f32 %v1859, %v2661
        %v2852 = vadd.f32 %v1970, %v2772
        %v2853 = vadd.f32 %v1972, %v2774
        %v2854 = vadd.f32 %v1861, %v2663
        %v2855 = vadd.f32 %v1863, %v2665
        %v2856 = vadd.f32 %v1974, %v2776
        %v2857 = vadd.f32 %v1976, %v2778
        %v2858 = vadd.f32 %v1867, %v2669
        %v2859 = vadd.f32 %v1869, %v2671
        %v2860 = vadd.f32 %v1980, %v2782
        %v2861 = vadd.f32 %v1982, %v2784
        %v2862 = vadd.f32 %v1871, %v2673
        %v2863 = vadd.f32 %v1873, %v2675
        %v2864 = vadd.f32 %v1984, %v2786
        %v2865 = vadd.f32 %v1986, %v2788
        %v2866 = vadd.f32 %v1877, %v2679
        %v2867 = vadd.f32 %v1879, %v2681
        %v2868 = vadd.f32 %v1990, %v2792
        %v2869 = vadd.f32 %v1992, %v2794
        %v2870 = vadd.f32 %v1881, %v2683
        %v2871 = vadd.f32 %v1883, %v2685
        %v2872 = vadd.f32 %v1994, %v2796
        %v2873 = vadd.f32 %v1996, %v2798
        %v2874 = vadd.f32 %v1887, %v2689
        %v2875 = vadd.f32 %v1889, %v2691
        %v2876 = vadd.f32 %v2000, %v2802
        %v2877 = vadd.f32 %v2002, %v2804
        %v2878 = vadd.f32 %v1891, %v2693
        %v2879 = vadd.f32 %v1893, %v2695
        %v2880 = vadd.f32 %v2004, %v2806
        %v2881 = vadd.f32 %v2006, %v2808
        %v2882 = vadd.f32 %v1897, %v2699
        %v2883 = vadd.f32 %v1899, %v2701
        %v2884 = vadd.f32 %v2010, %v2812
        %v2885 = vadd.f32 %v2012, %v2814
        %v2886 = vadd.f32 %v1901, %v2703
        %v2887 = vadd.f32 %v1903, %v2705
        %v2888 = vadd.f32 %v2014, %v2816
        %v2889 = vadd.f32 %v2016, %v2818
        %v2890 = vadd.f32 %v1907, %v2709
        %v2891 = vadd.f32 %v1909, %v2711
        %v2892 = vadd.f32 %v2020, %v2822
        %v2893 = vadd.f32 %v2022, %v2824
        %v2894 = vadd.f32 %v1911, %v2713
        %v2895 = vadd.f32 %v1913, %v2715
        %v2896 = vadd.f32 %v2024, %v2826
        %v2897 = vadd.f32 %v2026, %v2828
        %v2898 = vadd.f32 %v1917, %v2719
        %v2899 = vadd.f32 %v1919, %v2721
        %v2900 = vadd.f32 %v2030, %v2832
        %v2901 = vadd.f32 %v2032, %v2834
        %v2902 = vadd.f32 %v1921, %v2723
        %v2903 = vadd.f32 %v1923, %v2725
        %v2904 = vadd.f32 %v2034, %v2836
        %v2905 = vadd.f32 %v2036, %v2838
        %v2906 = vadd.f32 %v1927, %v2729
        %v2907 = vadd.f32 %v1929, %v2731
        %v2908 = vadd.f32 %v2040, %v2842
        %v2909 = vadd.f32 %v2042, %v2844
        %v2910 = vadd.f32 %v1931, %v2733
        %v2911 = vadd.f32 %v1933, %v2735
        %v2912 = vadd.f32 %v2044, %v2846
        %v2913 = vadd.f32 %v2046, %v2848
        %v2914 = vld [vmem:[%s819] sm:$0xf]
        %v2915 = vld [vmem:[%s819 + $0x4] sm:$0xf]
        %v2916 = vld [vmem:[%s819 + $0x8] sm:$0xf]
        %v2917 = vld [vmem:[%s819 + $0xc] sm:$0xf]
        %v2918 = vld [vmem:[%s819 + $0x10] sm:$0xf]
        %v2919 = vld [vmem:[%s819 + $0x14] sm:$0xf]
        %v2920 = vld [vmem:[%s819 + $0x18] sm:$0xf]
        %v2921 = vld [vmem:[%s819 + $0x1c] sm:$0xf]
        %v2922 = vld [vmem:[%s819 + $0x20] sm:$0xf]
        %v2923 = vld [vmem:[%s819 + $0x24] sm:$0xf]
        %v2924 = vld [vmem:[%s819 + $0x28] sm:$0xf]
        %v2925 = vld [vmem:[%s819 + $0x2c] sm:$0xf]
        %v2926 = vld [vmem:[%s819 + $0x30] sm:$0xf]
        %v2927 = vld [vmem:[%s819 + $0x34] sm:$0xf]
        %v2928 = vld [vmem:[%s819 + $0x38] sm:$0xf]
        %v2929 = vld [vmem:[%s819 + $0x3c] sm:$0xf]
        %v2930 = vunpack.c.l.bf16 %v2914
        %v2931 = vunpack.c.l.bf16 %v2915
        %v2932 = vunpack.c.l.bf16 %v2916
        %v2933 = vunpack.c.l.bf16 %v2917
        %v2934 = vunpack.c.l.bf16 %v2918
        %v2935 = vunpack.c.l.bf16 %v2919
        %v2936 = vunpack.c.l.bf16 %v2920
        %v2937 = vunpack.c.l.bf16 %v2921
        %v2938 = vunpack.c.l.bf16 %v2922
        %v2939 = vunpack.c.l.bf16 %v2923
        %v2940 = vunpack.c.l.bf16 %v2924
        %v2941 = vunpack.c.l.bf16 %v2925
        %v2942 = vunpack.c.l.bf16 %v2926
        %v2943 = vunpack.c.l.bf16 %v2927
        %v2944 = vunpack.c.l.bf16 %v2928
        %v2945 = vunpack.c.l.bf16 %v2929
        %v2946 = vmul.f32 %v2930, 0.5
        %v2947 = vmul.f32 %v2931, 0.5
        %v2948 = vmul.f32 %v2932, 0.5
        %v2949 = vmul.f32 %v2933, 0.5
        %v2950 = vmul.f32 %v2934, 0.5
        %v2951 = vmul.f32 %v2935, 0.5
        %v2952 = vmul.f32 %v2936, 0.5
        %v2953 = vmul.f32 %v2937, 0.5
        %v2954 = vmul.f32 %v2938, 0.5
        %v2955 = vmul.f32 %v2939, 0.5
        %v2956 = vmul.f32 %v2940, 0.5
        %v2957 = vmul.f32 %v2941, 0.5
        %v2958 = vmul.f32 %v2942, 0.5
        %v2959 = vmul.f32 %v2943, 0.5
        %v2960 = vmul.f32 %v2944, 0.5
        %v2961 = vmul.f32 %v2945, 0.5
        %v2962 = vtanh.pop %v2946
        %v2963 = vtanh.pop %v2947
        %v2964 = vtanh.pop %v2948
        %v2965 = vtanh.pop %v2949
        %v2966 = vtanh.pop %v2950
        %v2967 = vtanh.pop %v2951
        %v2968 = vtanh.pop %v2952
        %v2969 = vtanh.pop %v2953
        %v2970 = vtanh.pop %v2954
        %v2971 = vtanh.pop %v2955
        %v2972 = vtanh.pop %v2956
        %v2973 = vtanh.pop %v2957
        %v2974 = vtanh.pop %v2958
        %v2975 = vtanh.pop %v2959
        %v2976 = vtanh.pop %v2960
        %v2977 = vtanh.pop %v2961
        %v2978 = vmul.f32 %v2962, 0.5
        %v2979 = vmul.f32 %v2963, 0.5
        %v2980 = vmul.f32 %v2964, 0.5
        %v2981 = vmul.f32 %v2965, 0.5
        %v2982 = vmul.f32 %v2966, 0.5
        %v2983 = vmul.f32 %v2967, 0.5
        %v2984 = vmul.f32 %v2968, 0.5
        %v2985 = vmul.f32 %v2969, 0.5
        %v2986 = vmul.f32 %v2970, 0.5
        %v2987 = vmul.f32 %v2971, 0.5
        %v2988 = vmul.f32 %v2972, 0.5
        %v2989 = vmul.f32 %v2973, 0.5
        %v2990 = vmul.f32 %v2974, 0.5
        %v2991 = vmul.f32 %v2975, 0.5
        %v2992 = vmul.f32 %v2976, 0.5
        %v2993 = vmul.f32 %v2977, 0.5
        %v2994 = vadd.f32 %v2978, 0.5
        %v2995 = vadd.f32 %v2979, 0.5
        %v2996 = vadd.f32 %v2980, 0.5
        %v2997 = vadd.f32 %v2981, 0.5
        %v2998 = vadd.f32 %v2982, 0.5
        %v2999 = vadd.f32 %v2983, 0.5
        %v3000 = vadd.f32 %v2984, 0.5
        %v3001 = vadd.f32 %v2985, 0.5
        %v3002 = vadd.f32 %v2986, 0.5
        %v3003 = vadd.f32 %v2987, 0.5
        %v3004 = vadd.f32 %v2988, 0.5
        %v3005 = vadd.f32 %v2989, 0.5
        %v3006 = vadd.f32 %v2990, 0.5
        %v3007 = vadd.f32 %v2991, 0.5
        %v3008 = vadd.f32 %v2992, 0.5
        %v3009 = vadd.f32 %v2993, 0.5
        %v3010 = vpack.c.bf16 %v2995, %v2994
        %v3011 = vpack.c.bf16 %v2997, %v2996
        %v3012 = vpack.c.bf16 %v2999, %v2998
        %v3013 = vpack.c.bf16 %v3001, %v3000
        %v3014 = vpack.c.bf16 %v3003, %v3002
        %v3015 = vpack.c.bf16 %v3005, %v3004
        %v3016 = vpack.c.bf16 %v3007, %v3006
        %v3017 = vpack.c.bf16 %v3009, %v3008
        %v3018 = vld [vmem:[#allocation17] sm:$0xff]
        %v3019 = vld [vmem:[#allocation17 + $0x8] sm:$0xff]
        %v3020 = vld [vmem:[#allocation17 + $0x10] sm:$0xff]
        %v3021 = vld [vmem:[#allocation17 + $0x18] sm:$0xff]
        %v3022 = vld [vmem:[#allocation17 + $0x20] sm:$0xff]
        %v3023 = vld [vmem:[#allocation17 + $0x28] sm:$0xff]
        %v3024 = vld [vmem:[#allocation17 + $0x30] sm:$0xff]
        %v3025 = vld [vmem:[#allocation17 + $0x38] sm:$0xff]
        %v3026 = vld [vmem:[#allocation17 + $0x40] sm:$0xff]
        %v3027 = vld [vmem:[#allocation17 + $0x48] sm:$0xff]
        %v3028 = vld [vmem:[#allocation17 + $0x50] sm:$0xff]
        %v3029 = vld [vmem:[#allocation17 + $0x58] sm:$0xff]
        %v3030 = vld [vmem:[#allocation17 + $0x60] sm:$0xff]
        %v3031 = vld [vmem:[#allocation17 + $0x68] sm:$0xff]
        %v3032 = vld [vmem:[#allocation17 + $0x70] sm:$0xff]
        %v3033 = vld [vmem:[#allocation17 + $0x78] sm:$0xff]
        %v3034 = vld [vmem:[#allocation17 + $0x80] sm:$0xff]
        %v3035 = vld [vmem:[#allocation17 + $0x88] sm:$0xff]
        %v3036 = vld [vmem:[#allocation17 + $0x90] sm:$0xff]
        %v3037 = vld [vmem:[#allocation17 + $0x98] sm:$0xff]
        %v3038 = vld [vmem:[#allocation17 + $0xa0] sm:$0xff]
        %v3039 = vld [vmem:[#allocation17 + $0xa8] sm:$0xff]
        %v3040 = vld [vmem:[#allocation17 + $0xb0] sm:$0xff]
        %v3041 = vld [vmem:[#allocation17 + $0xb8] sm:$0xff]
        %v3042 = vld [vmem:[#allocation17 + $0xc0] sm:$0xff]
        %v3043 = vld [vmem:[#allocation17 + $0xc8] sm:$0xff]
        %v3044 = vld [vmem:[#allocation17 + $0xd0] sm:$0xff]
        %v3045 = vld [vmem:[#allocation17 + $0xd8] sm:$0xff]
        %v3046 = vld [vmem:[#allocation17 + $0xe0] sm:$0xff]
        %v3047 = vld [vmem:[#allocation17 + $0xe8] sm:$0xff]
        %v3048 = vld [vmem:[#allocation17 + $0xf0] sm:$0xff]
        %v3049 = vld [vmem:[#allocation17 + $0xf8] sm:$0xff]
        %v3082 = vunpack.c.l.b16 %v3018
        %v3083 = vunpack.c.h.b16 %v3018
        %v3084 = vunpack.c.l.b16 %v3019
        %v3085 = vunpack.c.h.b16 %v3019
        %v3086 = vunpack.c.l.b16 %v3020
        %v3087 = vunpack.c.h.b16 %v3020
        %v3088 = vunpack.c.l.b16 %v3021
        %v3089 = vunpack.c.h.b16 %v3021
        %v3090 = vunpack.c.l.b16 %v3022
        %v3091 = vunpack.c.h.b16 %v3022
        %v3092 = vunpack.c.l.b16 %v3023
        %v3093 = vunpack.c.h.b16 %v3023
        %v3094 = vunpack.c.l.b16 %v3024
        %v3095 = vunpack.c.h.b16 %v3024
        %v3096 = vunpack.c.l.b16 %v3025
        %v3097 = vunpack.c.h.b16 %v3025
        %v3098 = vunpack.c.l.b16 %v3026
        %v3099 = vunpack.c.h.b16 %v3026
        %v3100 = vunpack.c.l.b16 %v3027
        %v3101 = vunpack.c.h.b16 %v3027
        %v3102 = vunpack.c.l.b16 %v3028
        %v3103 = vunpack.c.h.b16 %v3028
        %v3104 = vunpack.c.l.b16 %v3029
        %v3105 = vunpack.c.h.b16 %v3029
        %v3106 = vunpack.c.l.b16 %v3030
        %v3107 = vunpack.c.h.b16 %v3030
        %v3108 = vunpack.c.l.b16 %v3031
        %v3109 = vunpack.c.h.b16 %v3031
        %v3110 = vunpack.c.l.b16 %v3032
        %v3111 = vunpack.c.h.b16 %v3032
        %v3112 = vunpack.c.l.b16 %v3033
        %v3113 = vunpack.c.h.b16 %v3033
        %v3114 = vunpack.c.l.b16 %v3034
        %v3115 = vunpack.c.h.b16 %v3034
        %v3116 = vunpack.c.l.b16 %v3035
        %v3117 = vunpack.c.h.b16 %v3035
        %v3118 = vunpack.c.l.b16 %v3036
        %v3119 = vunpack.c.h.b16 %v3036
        %v3120 = vunpack.c.l.b16 %v3037
        %v3121 = vunpack.c.h.b16 %v3037
        %v3122 = vunpack.c.l.b16 %v3038
        %v3123 = vunpack.c.h.b16 %v3038
        %v3124 = vunpack.c.l.b16 %v3039
        %v3125 = vunpack.c.h.b16 %v3039
        %v3126 = vunpack.c.l.b16 %v3040
        %v3127 = vunpack.c.h.b16 %v3040
        %v3128 = vunpack.c.l.b16 %v3041
        %v3129 = vunpack.c.h.b16 %v3041
        %v3130 = vunpack.c.l.b16 %v3042
        %v3131 = vunpack.c.h.b16 %v3042
        %v3132 = vunpack.c.l.b16 %v3043
        %v3133 = vunpack.c.h.b16 %v3043
        %v3134 = vunpack.c.l.b16 %v3044
        %v3135 = vunpack.c.h.b16 %v3044
        %v3136 = vunpack.c.l.b16 %v3045
        %v3137 = vunpack.c.h.b16 %v3045
        %v3138 = vunpack.c.l.b16 %v3046
        %v3139 = vunpack.c.h.b16 %v3046
        %v3140 = vunpack.c.l.b16 %v3047
        %v3141 = vunpack.c.h.b16 %v3047
        %v3142 = vunpack.c.l.b16 %v3048
        %v3143 = vunpack.c.h.b16 %v3048
        %v3144 = vunpack.c.l.b16 %v3049
        %v3145 = vunpack.c.h.b16 %v3049
        %v3146 = vpack.c.b16 %v3086, %v3082
        %v3147 = vpack.c.b16 %v3087, %v3083
        %v3148 = vpack.c.b16 %v3088, %v3084
        %v3149 = vpack.c.b16 %v3089, %v3085
        %v3150 = vpack.c.b16 %v3094, %v3090
        %v3151 = vpack.c.b16 %v3095, %v3091
        %v3152 = vpack.c.b16 %v3096, %v3092
        %v3153 = vpack.c.b16 %v3097, %v3093
        %v3154 = vpack.c.b16 %v3102, %v3098
        %v3155 = vpack.c.b16 %v3103, %v3099
        %v3156 = vpack.c.b16 %v3104, %v3100
        %v3157 = vpack.c.b16 %v3105, %v3101
        %v3158 = vpack.c.b16 %v3110, %v3106
        %v3159 = vpack.c.b16 %v3111, %v3107
        %v3160 = vpack.c.b16 %v3112, %v3108
        %v3161 = vpack.c.b16 %v3113, %v3109
        %v3162 = vpack.c.b16 %v3118, %v3114
        %v3163 = vpack.c.b16 %v3119, %v3115
        %v3164 = vpack.c.b16 %v3120, %v3116
        %v3165 = vpack.c.b16 %v3121, %v3117
        %v3166 = vpack.c.b16 %v3126, %v3122
        %v3167 = vpack.c.b16 %v3127, %v3123
        %v3168 = vpack.c.b16 %v3128, %v3124
        %v3169 = vpack.c.b16 %v3129, %v3125
        %v3170 = vpack.c.b16 %v3134, %v3130
        %v3171 = vpack.c.b16 %v3135, %v3131
        %v3172 = vpack.c.b16 %v3136, %v3132
        %v3173 = vpack.c.b16 %v3137, %v3133
        %v3174 = vpack.c.b16 %v3142, %v3138
        %v3175 = vpack.c.b16 %v3143, %v3139
        %v3176 = vpack.c.b16 %v3144, %v3140
        %v3177 = vpack.c.b16 %v3145, %v3141
        %3210 = vmatprep.subr.bf16.mxu0 %v3175
        %3211 = vmatpush1.bf16.msra.mxu0 %v3174
        %3212 = vmatprep.subr.bf16.mxu0 %v3171
        %3213 = vmatpush1.bf16.msra.mxu0 %v3170
        %3214 = vmatprep.subr.bf16.mxu0 %v3167
        %3215 = vmatpush1.bf16.msra.mxu0 %v3166
        %3216 = vmatprep.subr.bf16.mxu0 %v3163
        %3217 = vmatpush1.bf16.msra.mxu0 %v3162
        %3218 = vmatprep.subr.bf16.mxu0 %v3159
        %3219 = vmatpush1.bf16.msra.mxu0 %v3158
        %3220 = vmatprep.subr.bf16.mxu0 %v3155
        %3221 = vmatpush1.bf16.msra.mxu0 %v3154
        %3222 = vmatprep.subr.bf16.mxu0 %v3151
        %3223 = vmatpush1.bf16.msra.mxu0 %v3150
        %3224 = vmatprep.subr.bf16.mxu0 %v3147
        %3225 = vmatpush1.bf16.msra.mxu0 %v3146
        %3226 = vmatprep.subr.bf16.mxu0 0
        %3227 = vmatpush2.bf16.msra.mxu0 0
        %3228 = vmatprep.subr.bf16.mxu0 0
        %3229 = vmatpush2.bf16.msra.mxu0 0
        %3230 = vmatprep.subr.bf16.mxu0 0
        %3231 = vmatpush2.bf16.msra.mxu0 0
        %3232 = vmatprep.subr.bf16.mxu0 0
        %3233 = vmatpush2.bf16.msra.mxu0 0
        %3234 = vmatprep.subr.bf16.mxu0 0
        %3235 = vmatpush2.bf16.msra.mxu0 0
        %3236 = vmatprep.subr.bf16.mxu0 0
        %3237 = vmatpush2.bf16.msra.mxu0 0
        %3238 = vmatprep.subr.bf16.mxu0 0
        %3239 = vmatpush2.bf16.msra.mxu0 0
        %3240 = vmatprep.subr.bf16.mxu0 0
        %3241 = vmatpush2.bf16.msra.mxu0 0
        %3242 = vmatprep.mubr.bf16.mxu0 0
        %3243 = vmatmul.mubr.bf16.gmra.mxu0 %v3010
        %v3244 = vpop.f32.mrf.mxu0
        %v3245 = vadd.f32 0.0, %v3244
        %v3246 = vpop.f32.mrf.mxu0
        %v3247 = vadd.f32 0.0, %v3246
        %v3248 = vpop.f32.mrf.mxu0
        %v3249 = vadd.f32 0.0, %v3248
        %v3250 = vpop.f32.mrf.mxu0
        %v3251 = vadd.f32 0.0, %v3250
        %3252 = vmatprep.mubr.bf16.mxu0 0
        %3253 = vmatmul.mubr.bf16.gmra.mxu0 %v3011
        %v3254 = vpop.f32.mrf.mxu0
        %v3255 = vadd.f32 0.0, %v3254
        %v3256 = vpop.f32.mrf.mxu0
        %v3257 = vadd.f32 0.0, %v3256
        %v3258 = vpop.f32.mrf.mxu0
        %v3259 = vadd.f32 0.0, %v3258
        %v3260 = vpop.f32.mrf.mxu0
        %v3261 = vadd.f32 0.0, %v3260
        %3262 = vmatprep.mubr.bf16.mxu0 0
        %3263 = vmatmul.mubr.bf16.gmra.mxu0 %v3012
        %v3264 = vpop.f32.mrf.mxu0
        %v3265 = vadd.f32 0.0, %v3264
        %v3266 = vpop.f32.mrf.mxu0
        %v3267 = vadd.f32 0.0, %v3266
        %v3268 = vpop.f32.mrf.mxu0
        %v3269 = vadd.f32 0.0, %v3268
        %v3270 = vpop.f32.mrf.mxu0
        %v3271 = vadd.f32 0.0, %v3270
        %3272 = vmatprep.mubr.bf16.mxu0 0
        %3273 = vmatmul.mubr.bf16.gmra.mxu0 %v3013
        %v3274 = vpop.f32.mrf.mxu0
        %v3275 = vadd.f32 0.0, %v3274
        %v3276 = vpop.f32.mrf.mxu0
        %v3277 = vadd.f32 0.0, %v3276
        %v3278 = vpop.f32.mrf.mxu0
        %v3279 = vadd.f32 0.0, %v3278
        %v3280 = vpop.f32.mrf.mxu0
        %v3281 = vadd.f32 0.0, %v3280
        %3282 = vmatprep.mubr.bf16.mxu0 0
        %3283 = vmatmul.mubr.bf16.gmra.mxu0 %v3014
        %v3284 = vpop.f32.mrf.mxu0
        %v3285 = vadd.f32 0.0, %v3284
        %v3286 = vpop.f32.mrf.mxu0
        %v3287 = vadd.f32 0.0, %v3286
        %v3288 = vpop.f32.mrf.mxu0
        %v3289 = vadd.f32 0.0, %v3288
        %v3290 = vpop.f32.mrf.mxu0
        %v3291 = vadd.f32 0.0, %v3290
        %3292 = vmatprep.mubr.bf16.mxu0 0
        %3293 = vmatmul.mubr.bf16.gmra.mxu0 %v3015
        %v3294 = vpop.f32.mrf.mxu0
        %v3295 = vadd.f32 0.0, %v3294
        %v3296 = vpop.f32.mrf.mxu0
        %v3297 = vadd.f32 0.0, %v3296
        %v3298 = vpop.f32.mrf.mxu0
        %v3299 = vadd.f32 0.0, %v3298
        %v3300 = vpop.f32.mrf.mxu0
        %v3301 = vadd.f32 0.0, %v3300
        %3302 = vmatprep.mubr.bf16.mxu0 0
        %3303 = vmatmul.mubr.bf16.gmra.mxu0 %v3016
        %v3304 = vpop.f32.mrf.mxu0
        %v3305 = vadd.f32 0.0, %v3304
        %v3306 = vpop.f32.mrf.mxu0
        %v3307 = vadd.f32 0.0, %v3306
        %v3308 = vpop.f32.mrf.mxu0
        %v3309 = vadd.f32 0.0, %v3308
        %v3310 = vpop.f32.mrf.mxu0
        %v3311 = vadd.f32 0.0, %v3310
        %3312 = vmatprep.mubr.bf16.mxu0 0
        %3313 = vmatmul.mubr.bf16.gmra.mxu0 %v3017
        %v3314 = vpop.f32.mrf.mxu0
        %v3315 = vadd.f32 0.0, %v3314
        %v3316 = vpop.f32.mrf.mxu0
        %v3317 = vadd.f32 0.0, %v3316
        %v3318 = vpop.f32.mrf.mxu0
        %v3319 = vadd.f32 0.0, %v3318
        %v3320 = vpop.f32.mrf.mxu0
        %v3321 = vadd.f32 0.0, %v3320
        %3322 = vdwg.mxu0
        %3323 = vmatprep.subr.bf16.mxu0 %v3177
        %3324 = vmatpush1.bf16.msra.mxu0 %v3176
        %3325 = vmatprep.subr.bf16.mxu0 %v3173
        %3326 = vmatpush1.bf16.msra.mxu0 %v3172
        %3327 = vmatprep.subr.bf16.mxu0 %v3169
        %3328 = vmatpush1.bf16.msra.mxu0 %v3168
        %3329 = vmatprep.subr.bf16.mxu0 %v3165
        %3330 = vmatpush1.bf16.msra.mxu0 %v3164
        %3331 = vmatprep.subr.bf16.mxu0 %v3161
        %3332 = vmatpush1.bf16.msra.mxu0 %v3160
        %3333 = vmatprep.subr.bf16.mxu0 %v3157
        %3334 = vmatpush1.bf16.msra.mxu0 %v3156
        %3335 = vmatprep.subr.bf16.mxu0 %v3153
        %3336 = vmatpush1.bf16.msra.mxu0 %v3152
        %3337 = vmatprep.subr.bf16.mxu0 %v3149
        %3338 = vmatpush1.bf16.msra.mxu0 %v3148
        %3339 = vmatprep.subr.bf16.mxu0 0
        %3340 = vmatpush2.bf16.msra.mxu0 0
        %3341 = vmatprep.subr.bf16.mxu0 0
        %3342 = vmatpush2.bf16.msra.mxu0 0
        %3343 = vmatprep.subr.bf16.mxu0 0
        %3344 = vmatpush2.bf16.msra.mxu0 0
        %3345 = vmatprep.subr.bf16.mxu0 0
        %3346 = vmatpush2.bf16.msra.mxu0 0
        %3347 = vmatprep.subr.bf16.mxu0 0
        %3348 = vmatpush2.bf16.msra.mxu0 0
        %3349 = vmatprep.subr.bf16.mxu0 0
        %3350 = vmatpush2.bf16.msra.mxu0 0
        %3351 = vmatprep.subr.bf16.mxu0 0
        %3352 = vmatpush2.bf16.msra.mxu0 0
        %3353 = vmatprep.subr.bf16.mxu0 0
        %3354 = vmatpush2.bf16.msra.mxu0 0
        %3355 = vmatprep.mubr.bf16.mxu0 0
        %3356 = vmatmul.mubr.bf16.gmra.mxu0 %v3010
        %v3357 = vpop.f32.mrf.mxu0
        %v3358 = vadd.f32 0.0, %v3357
        %v3359 = vpop.f32.mrf.mxu0
        %v3360 = vadd.f32 0.0, %v3359
        %v3361 = vpop.f32.mrf.mxu0
        %v3362 = vadd.f32 0.0, %v3361
        %v3363 = vpop.f32.mrf.mxu0
        %v3364 = vadd.f32 0.0, %v3363
        %3365 = vmatprep.mubr.bf16.mxu0 0
        %3366 = vmatmul.mubr.bf16.gmra.mxu0 %v3011
        %v3367 = vpop.f32.mrf.mxu0
        %v3368 = vadd.f32 0.0, %v3367
        %v3369 = vpop.f32.mrf.mxu0
        %v3370 = vadd.f32 0.0, %v3369
        %v3371 = vpop.f32.mrf.mxu0
        %v3372 = vadd.f32 0.0, %v3371
        %v3373 = vpop.f32.mrf.mxu0
        %v3374 = vadd.f32 0.0, %v3373
        %3375 = vmatprep.mubr.bf16.mxu0 0
        %3376 = vmatmul.mubr.bf16.gmra.mxu0 %v3012
        %v3377 = vpop.f32.mrf.mxu0
        %v3378 = vadd.f32 0.0, %v3377
        %v3379 = vpop.f32.mrf.mxu0
        %v3380 = vadd.f32 0.0, %v3379
        %v3381 = vpop.f32.mrf.mxu0
        %v3382 = vadd.f32 0.0, %v3381
        %v3383 = vpop.f32.mrf.mxu0
        %v3384 = vadd.f32 0.0, %v3383
        %3385 = vmatprep.mubr.bf16.mxu0 0
        %3386 = vmatmul.mubr.bf16.gmra.mxu0 %v3013
        %v3387 = vpop.f32.mrf.mxu0
        %v3388 = vadd.f32 0.0, %v3387
        %v3389 = vpop.f32.mrf.mxu0
        %v3390 = vadd.f32 0.0, %v3389
        %v3391 = vpop.f32.mrf.mxu0
        %v3392 = vadd.f32 0.0, %v3391
        %v3393 = vpop.f32.mrf.mxu0
        %v3394 = vadd.f32 0.0, %v3393
        %3395 = vmatprep.mubr.bf16.mxu0 0
        %3396 = vmatmul.mubr.bf16.gmra.mxu0 %v3014
        %v3397 = vpop.f32.mrf.mxu0
        %v3398 = vadd.f32 0.0, %v3397
        %v3399 = vpop.f32.mrf.mxu0
        %v3400 = vadd.f32 0.0, %v3399
        %v3401 = vpop.f32.mrf.mxu0
        %v3402 = vadd.f32 0.0, %v3401
        %v3403 = vpop.f32.mrf.mxu0
        %v3404 = vadd.f32 0.0, %v3403
        %3405 = vmatprep.mubr.bf16.mxu0 0
        %3406 = vmatmul.mubr.bf16.gmra.mxu0 %v3015
        %v3407 = vpop.f32.mrf.mxu0
        %v3408 = vadd.f32 0.0, %v3407
        %v3409 = vpop.f32.mrf.mxu0
        %v3410 = vadd.f32 0.0, %v3409
        %v3411 = vpop.f32.mrf.mxu0
        %v3412 = vadd.f32 0.0, %v3411
        %v3413 = vpop.f32.mrf.mxu0
        %v3414 = vadd.f32 0.0, %v3413
        %3415 = vmatprep.mubr.bf16.mxu0 0
        %3416 = vmatmul.mubr.bf16.gmra.mxu0 %v3016
        %v3417 = vpop.f32.mrf.mxu0
        %v3418 = vadd.f32 0.0, %v3417
        %v3419 = vpop.f32.mrf.mxu0
        %v3420 = vadd.f32 0.0, %v3419
        %v3421 = vpop.f32.mrf.mxu0
        %v3422 = vadd.f32 0.0, %v3421
        %v3423 = vpop.f32.mrf.mxu0
        %v3424 = vadd.f32 0.0, %v3423
        %3425 = vmatprep.mubr.bf16.mxu0 0
        %3426 = vmatmul.mubr.bf16.gmra.mxu0 %v3017
        %v3427 = vpop.f32.mrf.mxu0
        %v3428 = vadd.f32 0.0, %v3427
        %v3429 = vpop.f32.mrf.mxu0
        %v3430 = vadd.f32 0.0, %v3429
        %v3431 = vpop.f32.mrf.mxu0
        %v3432 = vadd.f32 0.0, %v3431
        %v3433 = vpop.f32.mrf.mxu0
        %v3434 = vadd.f32 0.0, %v3433
        %3435 = vdwg.mxu0
        %v3436 = vadd.f32 %v2850, %v3245
        %v3437 = vadd.f32 %v2851, %v3247
        %v3438 = vadd.f32 %v2852, %v3358
        %v3439 = vadd.f32 %v2853, %v3360
        %v3440 = vadd.f32 %v2854, %v3249
        %v3441 = vadd.f32 %v2855, %v3251
        %v3442 = vadd.f32 %v2856, %v3362
        %v3443 = vadd.f32 %v2857, %v3364
        %v3444 = vadd.f32 %v2858, %v3255
        %v3445 = vadd.f32 %v2859, %v3257
        %v3446 = vadd.f32 %v2860, %v3368
        %v3447 = vadd.f32 %v2861, %v3370
        %v3448 = vadd.f32 %v2862, %v3259
        %v3449 = vadd.f32 %v2863, %v3261
        %v3450 = vadd.f32 %v2864, %v3372
        %v3451 = vadd.f32 %v2865, %v3374
        %v3452 = vadd.f32 %v2866, %v3265
        %v3453 = vadd.f32 %v2867, %v3267
        %v3454 = vadd.f32 %v2868, %v3378
        %v3455 = vadd.f32 %v2869, %v3380
        %v3456 = vadd.f32 %v2870, %v3269
        %v3457 = vadd.f32 %v2871, %v3271
        %v3458 = vadd.f32 %v2872, %v3382
        %v3459 = vadd.f32 %v2873, %v3384
        %v3460 = vadd.f32 %v2874, %v3275
        %v3461 = vadd.f32 %v2875, %v3277
        %v3462 = vadd.f32 %v2876, %v3388
        %v3463 = vadd.f32 %v2877, %v3390
        %v3464 = vadd.f32 %v2878, %v3279
        %v3465 = vadd.f32 %v2879, %v3281
        %v3466 = vadd.f32 %v2880, %v3392
        %v3467 = vadd.f32 %v2881, %v3394
        %v3468 = vadd.f32 %v2882, %v3285
        %v3469 = vadd.f32 %v2883, %v3287
        %v3470 = vadd.f32 %v2884, %v3398
        %v3471 = vadd.f32 %v2885, %v3400
        %v3472 = vadd.f32 %v2886, %v3289
        %v3473 = vadd.f32 %v2887, %v3291
        %v3474 = vadd.f32 %v2888, %v3402
        %v3475 = vadd.f32 %v2889, %v3404
        %v3476 = vadd.f32 %v2890, %v3295
        %v3477 = vadd.f32 %v2891, %v3297
        %v3478 = vadd.f32 %v2892, %v3408
        %v3479 = vadd.f32 %v2893, %v3410
        %v3480 = vadd.f32 %v2894, %v3299
        %v3481 = vadd.f32 %v2895, %v3301
        %v3482 = vadd.f32 %v2896, %v3412
        %v3483 = vadd.f32 %v2897, %v3414
        %v3484 = vadd.f32 %v2898, %v3305
        %v3485 = vadd.f32 %v2899, %v3307
        %v3486 = vadd.f32 %v2900, %v3418
        %v3487 = vadd.f32 %v2901, %v3420
        %v3488 = vadd.f32 %v2902, %v3309
        %v3489 = vadd.f32 %v2903, %v3311
        %v3490 = vadd.f32 %v2904, %v3422
        %v3491 = vadd.f32 %v2905, %v3424
        %v3492 = vadd.f32 %v2906, %v3315
        %v3493 = vadd.f32 %v2907, %v3317
        %v3494 = vadd.f32 %v2908, %v3428
        %v3495 = vadd.f32 %v2909, %v3430
        %v3496 = vadd.f32 %v2910, %v3319
        %v3497 = vadd.f32 %v2911, %v3321
        %v3498 = vadd.f32 %v2912, %v3432
        %v3499 = vadd.f32 %v2913, %v3434
        %v3500 = vld [vmem:[%s8] sm:$0xf]
        %v3502 = vlaneseq
        %v3503 = vshrl.u32 %v3502, 7
        %v3504 = vsub.s32 0, %v3503
        %v3505 = vrot.slane %v3500, %v3504
        %v3506 = vlaneseq
        %v3507 = vshrl.u32 %v3506, 7
        %v3508 = vsub.s32 1, %v3507
        %v3509 = vrot.slane %v3500, %v3508
        %v3510 = vlaneseq
        %v3511 = vshrl.u32 %v3510, 7
        %v3512 = vsub.s32 2, %v3511
        %v3513 = vrot.slane %v3500, %v3512
        %v3514 = vlaneseq
        %v3515 = vshrl.u32 %v3514, 7
        %v3516 = vsub.s32 3, %v3515
        %v3517 = vrot.slane %v3500, %v3516
        %v3522 = vadd.f32 %v3436, %v3505
        %v3523 = vadd.f32 %v3437, %v3509
        %v3524 = vadd.f32 %v3438, %v3513
        %v3525 = vadd.f32 %v3439, %v3517
        %v3526 = vadd.f32 %v3440, %v3505
        %v3527 = vadd.f32 %v3441, %v3509
        %v3528 = vadd.f32 %v3442, %v3513
        %v3529 = vadd.f32 %v3443, %v3517
        %v3530 = vadd.f32 %v3444, %v3505
        %v3531 = vadd.f32 %v3445, %v3509
        %v3532 = vadd.f32 %v3446, %v3513
        %v3533 = vadd.f32 %v3447, %v3517
        %v3534 = vadd.f32 %v3448, %v3505
        %v3535 = vadd.f32 %v3449, %v3509
        %v3536 = vadd.f32 %v3450, %v3513
        %v3537 = vadd.f32 %v3451, %v3517
        %v3538 = vadd.f32 %v3452, %v3505
        %v3539 = vadd.f32 %v3453, %v3509
        %v3540 = vadd.f32 %v3454, %v3513
        %v3541 = vadd.f32 %v3455, %v3517
        %v3542 = vadd.f32 %v3456, %v3505
        %v3543 = vadd.f32 %v3457, %v3509
        %v3544 = vadd.f32 %v3458, %v3513
        %v3545 = vadd.f32 %v3459, %v3517
        %v3546 = vadd.f32 %v3460, %v3505
        %v3547 = vadd.f32 %v3461, %v3509
        %v3548 = vadd.f32 %v3462, %v3513
        %v3549 = vadd.f32 %v3463, %v3517
        %v3550 = vadd.f32 %v3464, %v3505
        %v3551 = vadd.f32 %v3465, %v3509
        %v3552 = vadd.f32 %v3466, %v3513
        %v3553 = vadd.f32 %v3467, %v3517
        %v3554 = vadd.f32 %v3468, %v3505
        %v3555 = vadd.f32 %v3469, %v3509
        %v3556 = vadd.f32 %v3470, %v3513
        %v3557 = vadd.f32 %v3471, %v3517
        %v3558 = vadd.f32 %v3472, %v3505
        %v3559 = vadd.f32 %v3473, %v3509
        %v3560 = vadd.f32 %v3474, %v3513
        %v3561 = vadd.f32 %v3475, %v3517
        %v3562 = vadd.f32 %v3476, %v3505
        %v3563 = vadd.f32 %v3477, %v3509
        %v3564 = vadd.f32 %v3478, %v3513
        %v3565 = vadd.f32 %v3479, %v3517
        %v3566 = vadd.f32 %v3480, %v3505
        %v3567 = vadd.f32 %v3481, %v3509
        %v3568 = vadd.f32 %v3482, %v3513
        %v3569 = vadd.f32 %v3483, %v3517
        %v3570 = vadd.f32 %v3484, %v3505
        %v3571 = vadd.f32 %v3485, %v3509
        %v3572 = vadd.f32 %v3486, %v3513
        %v3573 = vadd.f32 %v3487, %v3517
        %v3574 = vadd.f32 %v3488, %v3505
        %v3575 = vadd.f32 %v3489, %v3509
        %v3576 = vadd.f32 %v3490, %v3513
        %v3577 = vadd.f32 %v3491, %v3517
        %v3578 = vadd.f32 %v3492, %v3505
        %v3579 = vadd.f32 %v3493, %v3509
        %v3580 = vadd.f32 %v3494, %v3513
        %v3581 = vadd.f32 %v3495, %v3517
        %v3582 = vadd.f32 %v3496, %v3505
        %v3583 = vadd.f32 %v3497, %v3509
        %v3584 = vadd.f32 %v3498, %v3513
        %v3585 = vadd.f32 %v3499, %v3517
        %v3586 = vmax.f32 %v3522, 0.0
        %v3587 = vmax.f32 %v3523, 0.0
        %v3588 = vmax.f32 %v3524, 0.0
        %v3589 = vmax.f32 %v3525, 0.0
        %v3590 = vmax.f32 %v3526, 0.0
        %v3591 = vmax.f32 %v3527, 0.0
        %v3592 = vmax.f32 %v3528, 0.0
        %v3593 = vmax.f32 %v3529, 0.0
        %v3594 = vmax.f32 %v3530, 0.0
        %v3595 = vmax.f32 %v3531, 0.0
        %v3596 = vmax.f32 %v3532, 0.0
        %v3597 = vmax.f32 %v3533, 0.0
        %v3598 = vmax.f32 %v3534, 0.0
        %v3599 = vmax.f32 %v3535, 0.0
        %v3600 = vmax.f32 %v3536, 0.0
        %v3601 = vmax.f32 %v3537, 0.0
        %v3602 = vmax.f32 %v3538, 0.0
        %v3603 = vmax.f32 %v3539, 0.0
        %v3604 = vmax.f32 %v3540, 0.0
        %v3605 = vmax.f32 %v3541, 0.0
        %v3606 = vmax.f32 %v3542, 0.0
        %v3607 = vmax.f32 %v3543, 0.0
        %v3608 = vmax.f32 %v3544, 0.0
        %v3609 = vmax.f32 %v3545, 0.0
        %v3610 = vmax.f32 %v3546, 0.0
        %v3611 = vmax.f32 %v3547, 0.0
        %v3612 = vmax.f32 %v3548, 0.0
        %v3613 = vmax.f32 %v3549, 0.0
        %v3614 = vmax.f32 %v3550, 0.0
        %v3615 = vmax.f32 %v3551, 0.0
        %v3616 = vmax.f32 %v3552, 0.0
        %v3617 = vmax.f32 %v3553, 0.0
        %v3618 = vmax.f32 %v3554, 0.0
        %v3619 = vmax.f32 %v3555, 0.0
        %v3620 = vmax.f32 %v3556, 0.0
        %v3621 = vmax.f32 %v3557, 0.0
        %v3622 = vmax.f32 %v3558, 0.0
        %v3623 = vmax.f32 %v3559, 0.0
        %v3624 = vmax.f32 %v3560, 0.0
        %v3625 = vmax.f32 %v3561, 0.0
        %v3626 = vmax.f32 %v3562, 0.0
        %v3627 = vmax.f32 %v3563, 0.0
        %v3628 = vmax.f32 %v3564, 0.0
        %v3629 = vmax.f32 %v3565, 0.0
        %v3630 = vmax.f32 %v3566, 0.0
        %v3631 = vmax.f32 %v3567, 0.0
        %v3632 = vmax.f32 %v3568, 0.0
        %v3633 = vmax.f32 %v3569, 0.0
        %v3634 = vmax.f32 %v3570, 0.0
        %v3635 = vmax.f32 %v3571, 0.0
        %v3636 = vmax.f32 %v3572, 0.0
        %v3637 = vmax.f32 %v3573, 0.0
        %v3638 = vmax.f32 %v3574, 0.0
        %v3639 = vmax.f32 %v3575, 0.0
        %v3640 = vmax.f32 %v3576, 0.0
        %v3641 = vmax.f32 %v3577, 0.0
        %v3642 = vmax.f32 %v3578, 0.0
        %v3643 = vmax.f32 %v3579, 0.0
        %v3644 = vmax.f32 %v3580, 0.0
        %v3645 = vmax.f32 %v3581, 0.0
        %v3646 = vmax.f32 %v3582, 0.0
        %v3647 = vmax.f32 %v3583, 0.0
        %v3648 = vmax.f32 %v3584, 0.0
        %v3649 = vmax.f32 %v3585, 0.0
        %v3650 = vsel %vm984, 1, 0
        %v3651 = vsel %vm985, 1, 0
        %v3652 = vsel %vm986, 1, 0
        %v3653 = vsel %vm987, 1, 0
        %v3654 = vsel %vm988, 1, 0
        %v3655 = vsel %vm989, 1, 0
        %v3656 = vsel %vm990, 1, 0
        %v3657 = vsel %vm991, 1, 0
        %v3658 = vsel %vm992, 1, 0
        %v3659 = vsel %vm993, 1, 0
        %v3660 = vsel %vm994, 1, 0
        %v3661 = vsel %vm995, 1, 0
        %v3662 = vsel %vm996, 1, 0
        %v3663 = vsel %vm997, 1, 0
        %v3664 = vsel %vm998, 1, 0
        %v3665 = vsel %vm999, 1, 0
        %vm3666 = vcmp.eq.s32.totalorder %v3650, 1
        %vm3667 = vcmp.eq.s32.totalorder %v3651, 1
        %vm3668 = vcmp.eq.s32.totalorder %v3652, 1
        %vm3669 = vcmp.eq.s32.totalorder %v3653, 1
        %vm3670 = vcmp.eq.s32.totalorder %v3654, 1
        %vm3671 = vcmp.eq.s32.totalorder %v3655, 1
        %vm3672 = vcmp.eq.s32.totalorder %v3656, 1
        %vm3673 = vcmp.eq.s32.totalorder %v3657, 1
        %vm3674 = vcmp.eq.s32.totalorder %v3658, 1
        %vm3675 = vcmp.eq.s32.totalorder %v3659, 1
        %vm3676 = vcmp.eq.s32.totalorder %v3660, 1
        %vm3677 = vcmp.eq.s32.totalorder %v3661, 1
        %vm3678 = vcmp.eq.s32.totalorder %v3662, 1
        %vm3679 = vcmp.eq.s32.totalorder %v3663, 1
        %vm3680 = vcmp.eq.s32.totalorder %v3664, 1
        %vm3681 = vcmp.eq.s32.totalorder %v3665, 1
        %v3682 = vsel %vm3666, %v3586, 0.0
        %v3683 = vsel %vm3666, %v3587, 0.0
        %v3684 = vsel %vm3666, %v3588, 0.0
        %v3685 = vsel %vm3666, %v3589, 0.0
        %v3686 = vsel %vm3667, %v3590, 0.0
        %v3687 = vsel %vm3667, %v3591, 0.0
        %v3688 = vsel %vm3667, %v3592, 0.0
        %v3689 = vsel %vm3667, %v3593, 0.0
        %v3690 = vsel %vm3668, %v3594, 0.0
        %v3691 = vsel %vm3668, %v3595, 0.0
        %v3692 = vsel %vm3668, %v3596, 0.0
        %v3693 = vsel %vm3668, %v3597, 0.0
        %v3694 = vsel %vm3669, %v3598, 0.0
        %v3695 = vsel %vm3669, %v3599, 0.0
        %v3696 = vsel %vm3669, %v3600, 0.0
        %v3697 = vsel %vm3669, %v3601, 0.0
        %v3698 = vsel %vm3670, %v3602, 0.0
        %v3699 = vsel %vm3670, %v3603, 0.0
        %v3700 = vsel %vm3670, %v3604, 0.0
        %v3701 = vsel %vm3670, %v3605, 0.0
        %v3702 = vsel %vm3671, %v3606, 0.0
        %v3703 = vsel %vm3671, %v3607, 0.0
        %v3704 = vsel %vm3671, %v3608, 0.0
        %v3705 = vsel %vm3671, %v3609, 0.0
        %v3706 = vsel %vm3672, %v3610, 0.0
        %v3707 = vsel %vm3672, %v3611, 0.0
        %v3708 = vsel %vm3672, %v3612, 0.0
        %v3709 = vsel %vm3672, %v3613, 0.0
        %v3710 = vsel %vm3673, %v3614, 0.0
        %v3711 = vsel %vm3673, %v3615, 0.0
        %v3712 = vsel %vm3673, %v3616, 0.0
        %v3713 = vsel %vm3673, %v3617, 0.0
        %v3714 = vsel %vm3674, %v3618, 0.0
        %v3715 = vsel %vm3674, %v3619, 0.0
        %v3716 = vsel %vm3674, %v3620, 0.0
        %v3717 = vsel %vm3674, %v3621, 0.0
        %v3718 = vsel %vm3675, %v3622, 0.0
        %v3719 = vsel %vm3675, %v3623, 0.0
        %v3720 = vsel %vm3675, %v3624, 0.0
        %v3721 = vsel %vm3675, %v3625, 0.0
        %v3722 = vsel %vm3676, %v3626, 0.0
        %v3723 = vsel %vm3676, %v3627, 0.0
        %v3724 = vsel %vm3676, %v3628, 0.0
        %v3725 = vsel %vm3676, %v3629, 0.0
        %v3726 = vsel %vm3677, %v3630, 0.0
        %v3727 = vsel %vm3677, %v3631, 0.0
        %v3728 = vsel %vm3677, %v3632, 0.0
        %v3729 = vsel %vm3677, %v3633, 0.0
        %v3730 = vsel %vm3678, %v3634, 0.0
        %v3731 = vsel %vm3678, %v3635, 0.0
        %v3732 = vsel %vm3678, %v3636, 0.0
        %v3733 = vsel %vm3678, %v3637, 0.0
        %v3734 = vsel %vm3679, %v3638, 0.0
        %v3735 = vsel %vm3679, %v3639, 0.0
        %v3736 = vsel %vm3679, %v3640, 0.0
        %v3737 = vsel %vm3679, %v3641, 0.0
        %v3738 = vsel %vm3680, %v3642, 0.0
        %v3739 = vsel %vm3680, %v3643, 0.0
        %v3740 = vsel %vm3680, %v3644, 0.0
        %v3741 = vsel %vm3680, %v3645, 0.0
        %v3742 = vsel %vm3681, %v3646, 0.0
        %v3743 = vsel %vm3681, %v3647, 0.0
        %v3744 = vsel %vm3681, %v3648, 0.0
        %v3745 = vsel %vm3681, %v3649, 0.0
        %v3746 = vpack.c.bf16 %v3686, %v3682
        %v3747 = vpack.c.bf16 %v3687, %v3683
        %v3748 = vpack.c.bf16 %v3688, %v3684
        %v3749 = vpack.c.bf16 %v3689, %v3685
        %v3750 = vpack.c.bf16 %v3694, %v3690
        %v3751 = vpack.c.bf16 %v3695, %v3691
        %v3752 = vpack.c.bf16 %v3696, %v3692
        %v3753 = vpack.c.bf16 %v3697, %v3693
        %v3754 = vpack.c.bf16 %v3702, %v3698
        %v3755 = vpack.c.bf16 %v3703, %v3699
        %v3756 = vpack.c.bf16 %v3704, %v3700
        %v3757 = vpack.c.bf16 %v3705, %v3701
        %v3758 = vpack.c.bf16 %v3710, %v3706
        %v3759 = vpack.c.bf16 %v3711, %v3707
        %v3760 = vpack.c.bf16 %v3712, %v3708
        %v3761 = vpack.c.bf16 %v3713, %v3709
        %v3762 = vpack.c.bf16 %v3718, %v3714
        %v3763 = vpack.c.bf16 %v3719, %v3715
        %v3764 = vpack.c.bf16 %v3720, %v3716
        %v3765 = vpack.c.bf16 %v3721, %v3717
        %v3766 = vpack.c.bf16 %v3726, %v3722
        %v3767 = vpack.c.bf16 %v3727, %v3723
        %v3768 = vpack.c.bf16 %v3728, %v3724
        %v3769 = vpack.c.bf16 %v3729, %v3725
        %v3770 = vpack.c.bf16 %v3734, %v3730
        %v3771 = vpack.c.bf16 %v3735, %v3731
        %v3772 = vpack.c.bf16 %v3736, %v3732
        %v3773 = vpack.c.bf16 %v3737, %v3733
        %v3774 = vpack.c.bf16 %v3742, %v3738
        %v3775 = vpack.c.bf16 %v3743, %v3739
        %v3776 = vpack.c.bf16 %v3744, %v3740
        %v3777 = vpack.c.bf16 %v3745, %v3741
        %v3778 = vld [vmem:[#allocation19] sm:$0xff]
        %v3779 = vld [vmem:[#allocation19 + $0x8] sm:$0xff]
        %v3780 = vld [vmem:[#allocation19 + $0x10] sm:$0xff]
        %v3781 = vld [vmem:[#allocation19 + $0x18] sm:$0xff]
        %v3782 = vld [vmem:[#allocation19 + $0x20] sm:$0xff]
        %v3783 = vld [vmem:[#allocation19 + $0x28] sm:$0xff]
        %v3784 = vld [vmem:[#allocation19 + $0x30] sm:$0xff]
        %v3785 = vld [vmem:[#allocation19 + $0x38] sm:$0xff]
        %v3786 = vld [vmem:[#allocation19 + $0x40] sm:$0xff]
        %v3787 = vld [vmem:[#allocation19 + $0x48] sm:$0xff]
        %v3788 = vld [vmem:[#allocation19 + $0x50] sm:$0xff]
        %v3789 = vld [vmem:[#allocation19 + $0x58] sm:$0xff]
        %v3790 = vld [vmem:[#allocation19 + $0x60] sm:$0xff]
        %v3791 = vld [vmem:[#allocation19 + $0x68] sm:$0xff]
        %v3792 = vld [vmem:[#allocation19 + $0x70] sm:$0xff]
        %v3793 = vld [vmem:[#allocation19 + $0x78] sm:$0xff]
        %v3794 = vld [vmem:[#allocation19 + $0x80] sm:$0xff]
        %v3795 = vld [vmem:[#allocation19 + $0x88] sm:$0xff]
        %v3796 = vld [vmem:[#allocation19 + $0x90] sm:$0xff]
        %v3797 = vld [vmem:[#allocation19 + $0x98] sm:$0xff]
        %v3798 = vld [vmem:[#allocation19 + $0xa0] sm:$0xff]
        %v3799 = vld [vmem:[#allocation19 + $0xa8] sm:$0xff]
        %v3800 = vld [vmem:[#allocation19 + $0xb0] sm:$0xff]
        %v3801 = vld [vmem:[#allocation19 + $0xb8] sm:$0xff]
        %v3802 = vld [vmem:[#allocation19 + $0xc0] sm:$0xff]
        %v3803 = vld [vmem:[#allocation19 + $0xc8] sm:$0xff]
        %v3804 = vld [vmem:[#allocation19 + $0xd0] sm:$0xff]
        %v3805 = vld [vmem:[#allocation19 + $0xd8] sm:$0xff]
        %v3806 = vld [vmem:[#allocation19 + $0xe0] sm:$0xff]
        %v3807 = vld [vmem:[#allocation19 + $0xe8] sm:$0xff]
        %v3808 = vld [vmem:[#allocation19 + $0xf0] sm:$0xff]
        %v3809 = vld [vmem:[#allocation19 + $0xf8] sm:$0xff]
        %v3810 = vld [vmem:[#allocation19 + $0x100] sm:$0xff]
        %v3811 = vld [vmem:[#allocation19 + $0x108] sm:$0xff]
        %v3812 = vld [vmem:[#allocation19 + $0x110] sm:$0xff]
        %v3813 = vld [vmem:[#allocation19 + $0x118] sm:$0xff]
        %v3814 = vld [vmem:[#allocation19 + $0x120] sm:$0xff]
        %v3815 = vld [vmem:[#allocation19 + $0x128] sm:$0xff]
        %v3816 = vld [vmem:[#allocation19 + $0x130] sm:$0xff]
        %v3817 = vld [vmem:[#allocation19 + $0x138] sm:$0xff]
        %v3818 = vld [vmem:[#allocation19 + $0x140] sm:$0xff]
        %v3819 = vld [vmem:[#allocation19 + $0x148] sm:$0xff]
        %v3820 = vld [vmem:[#allocation19 + $0x150] sm:$0xff]
        %v3821 = vld [vmem:[#allocation19 + $0x158] sm:$0xff]
        %v3822 = vld [vmem:[#allocation19 + $0x160] sm:$0xff]
        %v3823 = vld [vmem:[#allocation19 + $0x168] sm:$0xff]
        %v3824 = vld [vmem:[#allocation19 + $0x170] sm:$0xff]
        %v3825 = vld [vmem:[#allocation19 + $0x178] sm:$0xff]
        %v3826 = vld [vmem:[#allocation19 + $0x180] sm:$0xff]
        %v3827 = vld [vmem:[#allocation19 + $0x188] sm:$0xff]
        %v3828 = vld [vmem:[#allocation19 + $0x190] sm:$0xff]
        %v3829 = vld [vmem:[#allocation19 + $0x198] sm:$0xff]
        %v3830 = vld [vmem:[#allocation19 + $0x1a0] sm:$0xff]
        %v3831 = vld [vmem:[#allocation19 + $0x1a8] sm:$0xff]
        %v3832 = vld [vmem:[#allocation19 + $0x1b0] sm:$0xff]
        %v3833 = vld [vmem:[#allocation19 + $0x1b8] sm:$0xff]
        %v3834 = vld [vmem:[#allocation19 + $0x1c0] sm:$0xff]
        %v3835 = vld [vmem:[#allocation19 + $0x1c8] sm:$0xff]
        %v3836 = vld [vmem:[#allocation19 + $0x1d0] sm:$0xff]
        %v3837 = vld [vmem:[#allocation19 + $0x1d8] sm:$0xff]
        %v3838 = vld [vmem:[#allocation19 + $0x1e0] sm:$0xff]
        %v3839 = vld [vmem:[#allocation19 + $0x1e8] sm:$0xff]
        %v3840 = vld [vmem:[#allocation19 + $0x1f0] sm:$0xff]
        %v3841 = vld [vmem:[#allocation19 + $0x1f8] sm:$0xff]
        %v3842 = vld [vmem:[%s10] sm:$0x3]
        %v3844 = vlaneseq
        %v3845 = vshrl.u32 %v3844, 7
        %v3846 = vsub.s32 0, %v3845
        %v3847 = vrot.slane %v3842, %v3846
        %v3848 = vlaneseq
        %v3849 = vshrl.u32 %v3848, 7
        %v3850 = vsub.s32 1, %v3849
        %v3851 = vrot.slane %v3842, %v3850
        %v3918 = vunpack.c.l.b16 %v3778
        %v3919 = vunpack.c.h.b16 %v3778
        %v3920 = vunpack.c.l.b16 %v3779
        %v3921 = vunpack.c.h.b16 %v3779
        %v3922 = vunpack.c.l.b16 %v3780
        %v3923 = vunpack.c.h.b16 %v3780
        %v3924 = vunpack.c.l.b16 %v3781
        %v3925 = vunpack.c.h.b16 %v3781
        %v3926 = vunpack.c.l.b16 %v3782
        %v3927 = vunpack.c.h.b16 %v3782
        %v3928 = vunpack.c.l.b16 %v3783
        %v3929 = vunpack.c.h.b16 %v3783
        %v3930 = vunpack.c.l.b16 %v3784
        %v3931 = vunpack.c.h.b16 %v3784
        %v3932 = vunpack.c.l.b16 %v3785
        %v3933 = vunpack.c.h.b16 %v3785
        %v3934 = vunpack.c.l.b16 %v3786
        %v3935 = vunpack.c.h.b16 %v3786
        %v3936 = vunpack.c.l.b16 %v3787
        %v3937 = vunpack.c.h.b16 %v3787
        %v3938 = vunpack.c.l.b16 %v3788
        %v3939 = vunpack.c.h.b16 %v3788
        %v3940 = vunpack.c.l.b16 %v3789
        %v3941 = vunpack.c.h.b16 %v3789
        %v3942 = vunpack.c.l.b16 %v3790
        %v3943 = vunpack.c.h.b16 %v3790
        %v3944 = vunpack.c.l.b16 %v3791
        %v3945 = vunpack.c.h.b16 %v3791
        %v3946 = vunpack.c.l.b16 %v3792
        %v3947 = vunpack.c.h.b16 %v3792
        %v3948 = vunpack.c.l.b16 %v3793
        %v3949 = vunpack.c.h.b16 %v3793
        %v3950 = vunpack.c.l.b16 %v3794
        %v3951 = vunpack.c.h.b16 %v3794
        %v3952 = vunpack.c.l.b16 %v3795
        %v3953 = vunpack.c.h.b16 %v3795
        %v3954 = vunpack.c.l.b16 %v3796
        %v3955 = vunpack.c.h.b16 %v3796
        %v3956 = vunpack.c.l.b16 %v3797
        %v3957 = vunpack.c.h.b16 %v3797
        %v3958 = vunpack.c.l.b16 %v3798
        %v3959 = vunpack.c.h.b16 %v3798
        %v3960 = vunpack.c.l.b16 %v3799
        %v3961 = vunpack.c.h.b16 %v3799
        %v3962 = vunpack.c.l.b16 %v3800
        %v3963 = vunpack.c.h.b16 %v3800
        %v3964 = vunpack.c.l.b16 %v3801
        %v3965 = vunpack.c.h.b16 %v3801
        %v3966 = vunpack.c.l.b16 %v3802
        %v3967 = vunpack.c.h.b16 %v3802
        %v3968 = vunpack.c.l.b16 %v3803
        %v3969 = vunpack.c.h.b16 %v3803
        %v3970 = vunpack.c.l.b16 %v3804
        %v3971 = vunpack.c.h.b16 %v3804
        %v3972 = vunpack.c.l.b16 %v3805
        %v3973 = vunpack.c.h.b16 %v3805
        %v3974 = vunpack.c.l.b16 %v3806
        %v3975 = vunpack.c.h.b16 %v3806
        %v3976 = vunpack.c.l.b16 %v3807
        %v3977 = vunpack.c.h.b16 %v3807
        %v3978 = vunpack.c.l.b16 %v3808
        %v3979 = vunpack.c.h.b16 %v3808
        %v3980 = vunpack.c.l.b16 %v3809
        %v3981 = vunpack.c.h.b16 %v3809
        %v3982 = vunpack.c.l.b16 %v3810
        %v3983 = vunpack.c.h.b16 %v3810
        %v3984 = vunpack.c.l.b16 %v3811
        %v3985 = vunpack.c.h.b16 %v3811
        %v3986 = vunpack.c.l.b16 %v3812
        %v3987 = vunpack.c.h.b16 %v3812
        %v3988 = vunpack.c.l.b16 %v3813
        %v3989 = vunpack.c.h.b16 %v3813
        %v3990 = vunpack.c.l.b16 %v3814
        %v3991 = vunpack.c.h.b16 %v3814
        %v3992 = vunpack.c.l.b16 %v3815
        %v3993 = vunpack.c.h.b16 %v3815
        %v3994 = vunpack.c.l.b16 %v3816
        %v3995 = vunpack.c.h.b16 %v3816
        %v3996 = vunpack.c.l.b16 %v3817
        %v3997 = vunpack.c.h.b16 %v3817
        %v3998 = vunpack.c.l.b16 %v3818
        %v3999 = vunpack.c.h.b16 %v3818
        %v4000 = vunpack.c.l.b16 %v3819
        %v4001 = vunpack.c.h.b16 %v3819
        %v4002 = vunpack.c.l.b16 %v3820
        %v4003 = vunpack.c.h.b16 %v3820
        %v4004 = vunpack.c.l.b16 %v3821
        %v4005 = vunpack.c.h.b16 %v3821
        %v4006 = vunpack.c.l.b16 %v3822
        %v4007 = vunpack.c.h.b16 %v3822
        %v4008 = vunpack.c.l.b16 %v3823
        %v4009 = vunpack.c.h.b16 %v3823
        %v4010 = vunpack.c.l.b16 %v3824
        %v4011 = vunpack.c.h.b16 %v3824
        %v4012 = vunpack.c.l.b16 %v3825
        %v4013 = vunpack.c.h.b16 %v3825
        %v4014 = vunpack.c.l.b16 %v3826
        %v4015 = vunpack.c.h.b16 %v3826
        %v4016 = vunpack.c.l.b16 %v3827
        %v4017 = vunpack.c.h.b16 %v3827
        %v4018 = vunpack.c.l.b16 %v3828
        %v4019 = vunpack.c.h.b16 %v3828
        %v4020 = vunpack.c.l.b16 %v3829
        %v4021 = vunpack.c.h.b16 %v3829
        %v4022 = vunpack.c.l.b16 %v3830
        %v4023 = vunpack.c.h.b16 %v3830
        %v4024 = vunpack.c.l.b16 %v3831
        %v4025 = vunpack.c.h.b16 %v3831
        %v4026 = vunpack.c.l.b16 %v3832
        %v4027 = vunpack.c.h.b16 %v3832
        %v4028 = vunpack.c.l.b16 %v3833
        %v4029 = vunpack.c.h.b16 %v3833
        %v4030 = vunpack.c.l.b16 %v3834
        %v4031 = vunpack.c.h.b16 %v3834
        %v4032 = vunpack.c.l.b16 %v3835
        %v4033 = vunpack.c.h.b16 %v3835
        %v4034 = vunpack.c.l.b16 %v3836
        %v4035 = vunpack.c.h.b16 %v3836
        %v4036 = vunpack.c.l.b16 %v3837
        %v4037 = vunpack.c.h.b16 %v3837
        %v4038 = vunpack.c.l.b16 %v3838
        %v4039 = vunpack.c.h.b16 %v3838
        %v4040 = vunpack.c.l.b16 %v3839
        %v4041 = vunpack.c.h.b16 %v3839
        %v4042 = vunpack.c.l.b16 %v3840
        %v4043 = vunpack.c.h.b16 %v3840
        %v4044 = vunpack.c.l.b16 %v3841
        %v4045 = vunpack.c.h.b16 %v3841
        %v4046 = vpack.c.b16 %v3920, %v3918
        %v4047 = vpack.c.b16 %v3921, %v3919
        %v4048 = vpack.c.b16 %v3924, %v3922
        %v4049 = vpack.c.b16 %v3925, %v3923
        %v4050 = vpack.c.b16 %v3928, %v3926
        %v4051 = vpack.c.b16 %v3929, %v3927
        %v4052 = vpack.c.b16 %v3932, %v3930
        %v4053 = vpack.c.b16 %v3933, %v3931
        %v4054 = vpack.c.b16 %v3936, %v3934
        %v4055 = vpack.c.b16 %v3937, %v3935
        %v4056 = vpack.c.b16 %v3940, %v3938
        %v4057 = vpack.c.b16 %v3941, %v3939
        %v4058 = vpack.c.b16 %v3944, %v3942
        %v4059 = vpack.c.b16 %v3945, %v3943
        %v4060 = vpack.c.b16 %v3948, %v3946
        %v4061 = vpack.c.b16 %v3949, %v3947
        %v4062 = vpack.c.b16 %v3952, %v3950
        %v4063 = vpack.c.b16 %v3953, %v3951
        %v4064 = vpack.c.b16 %v3956, %v3954
        %v4065 = vpack.c.b16 %v3957, %v3955
        %v4066 = vpack.c.b16 %v3960, %v3958
        %v4067 = vpack.c.b16 %v3961, %v3959
        %v4068 = vpack.c.b16 %v3964, %v3962
        %v4069 = vpack.c.b16 %v3965, %v3963
        %v4070 = vpack.c.b16 %v3968, %v3966
        %v4071 = vpack.c.b16 %v3969, %v3967
        %v4072 = vpack.c.b16 %v3972, %v3970
        %v4073 = vpack.c.b16 %v3973, %v3971
        %v4074 = vpack.c.b16 %v3976, %v3974
        %v4075 = vpack.c.b16 %v3977, %v3975
        %v4076 = vpack.c.b16 %v3980, %v3978
        %v4077 = vpack.c.b16 %v3981, %v3979
        %v4078 = vpack.c.b16 %v3984, %v3982
        %v4079 = vpack.c.b16 %v3985, %v3983
        %v4080 = vpack.c.b16 %v3988, %v3986
        %v4081 = vpack.c.b16 %v3989, %v3987
        %v4082 = vpack.c.b16 %v3992, %v3990
        %v4083 = vpack.c.b16 %v3993, %v3991
        %v4084 = vpack.c.b16 %v3996, %v3994
        %v4085 = vpack.c.b16 %v3997, %v3995
        %v4086 = vpack.c.b16 %v4000, %v3998
        %v4087 = vpack.c.b16 %v4001, %v3999
        %v4088 = vpack.c.b16 %v4004, %v4002
        %v4089 = vpack.c.b16 %v4005, %v4003
        %v4090 = vpack.c.b16 %v4008, %v4006
        %v4091 = vpack.c.b16 %v4009, %v4007
        %v4092 = vpack.c.b16 %v4012, %v4010
        %v4093 = vpack.c.b16 %v4013, %v4011
        %v4094 = vpack.c.b16 %v4016, %v4014
        %v4095 = vpack.c.b16 %v4017, %v4015
        %v4096 = vpack.c.b16 %v4020, %v4018
        %v4097 = vpack.c.b16 %v4021, %v4019
        %v4098 = vpack.c.b16 %v4024, %v4022
        %v4099 = vpack.c.b16 %v4025, %v4023
        %v4100 = vpack.c.b16 %v4028, %v4026
        %v4101 = vpack.c.b16 %v4029, %v4027
        %v4102 = vpack.c.b16 %v4032, %v4030
        %v4103 = vpack.c.b16 %v4033, %v4031
        %v4104 = vpack.c.b16 %v4036, %v4034
        %v4105 = vpack.c.b16 %v4037, %v4035
        %v4106 = vpack.c.b16 %v4040, %v4038
        %v4107 = vpack.c.b16 %v4041, %v4039
        %v4108 = vpack.c.b16 %v4044, %v4042
        %v4109 = vpack.c.b16 %v4045, %v4043
        %4174 = vmatprep.subr.bf16.mxu0 %v4061
        %4175 = vmatpush1.bf16.msra.mxu0 %v4060
        %4176 = vmatprep.subr.bf16.mxu0 %v4059
        %4177 = vmatpush1.bf16.msra.mxu0 %v4058
        %4178 = vmatprep.subr.bf16.mxu0 %v4057
        %4179 = vmatpush1.bf16.msra.mxu0 %v4056
        %4180 = vmatprep.subr.bf16.mxu0 %v4055
        %4181 = vmatpush1.bf16.msra.mxu0 %v4054
        %4182 = vmatprep.subr.bf16.mxu0 %v4053
        %4183 = vmatpush1.bf16.msra.mxu0 %v4052
        %4184 = vmatprep.subr.bf16.mxu0 %v4051
        %4185 = vmatpush1.bf16.msra.mxu0 %v4050
        %4186 = vmatprep.subr.bf16.mxu0 %v4049
        %4187 = vmatpush1.bf16.msra.mxu0 %v4048
        %4188 = vmatprep.subr.bf16.mxu0 %v4047
        %4189 = vmatpush1.bf16.msra.mxu0 %v4046
        %4190 = vmatprep.subr.bf16.mxu0 %v4077
        %4191 = vmatpush2.bf16.msra.mxu0 %v4076
        %4192 = vmatprep.subr.bf16.mxu0 %v4075
        %4193 = vmatpush2.bf16.msra.mxu0 %v4074
        %4194 = vmatprep.subr.bf16.mxu0 %v4073
        %4195 = vmatpush2.bf16.msra.mxu0 %v4072
        %4196 = vmatprep.subr.bf16.mxu0 %v4071
        %4197 = vmatpush2.bf16.msra.mxu0 %v4070
        %4198 = vmatprep.subr.bf16.mxu0 %v4069
        %4199 = vmatpush2.bf16.msra.mxu0 %v4068
        %4200 = vmatprep.subr.bf16.mxu0 %v4067
        %4201 = vmatpush2.bf16.msra.mxu0 %v4066
        %4202 = vmatprep.subr.bf16.mxu0 %v4065
        %4203 = vmatpush2.bf16.msra.mxu0 %v4064
        %4204 = vmatprep.subr.bf16.mxu0 %v4063
        %4205 = vmatpush2.bf16.msra.mxu0 %v4062
        %4206 = vmatprep.mubr.bf16.mxu0 %v3747
        %4207 = vmatmul.mubr.bf16.gmra.mxu0 %v3746
        %v4208 = vpop.f32.mrf.mxu0
        %v4209 = vadd.f32 %v3847, %v4208
        %v4210 = vpop.f32.mrf.mxu0
        %v4211 = vadd.f32 %v3851, %v4210
        %v4212 = vpop.f32.mrf.mxu0
        %v4213 = vadd.f32 %v3847, %v4212
        %v4214 = vpop.f32.mrf.mxu0
        %v4215 = vadd.f32 %v3851, %v4214
        %4216 = vmatprep.mubr.bf16.mxu0 %v3751
        %4217 = vmatmul.mubr.bf16.gmra.mxu0 %v3750
        %v4218 = vpop.f32.mrf.mxu0
        %v4219 = vadd.f32 %v3847, %v4218
        %v4220 = vpop.f32.mrf.mxu0
        %v4221 = vadd.f32 %v3851, %v4220
        %v4222 = vpop.f32.mrf.mxu0
        %v4223 = vadd.f32 %v3847, %v4222
        %v4224 = vpop.f32.mrf.mxu0
        %v4225 = vadd.f32 %v3851, %v4224
        %4226 = vmatprep.mubr.bf16.mxu0 %v3755
        %4227 = vmatmul.mubr.bf16.gmra.mxu0 %v3754
        %v4228 = vpop.f32.mrf.mxu0
        %v4229 = vadd.f32 %v3847, %v4228
        %v4230 = vpop.f32.mrf.mxu0
        %v4231 = vadd.f32 %v3851, %v4230
        %v4232 = vpop.f32.mrf.mxu0
        %v4233 = vadd.f32 %v3847, %v4232
        %v4234 = vpop.f32.mrf.mxu0
        %v4235 = vadd.f32 %v3851, %v4234
        %4236 = vmatprep.mubr.bf16.mxu0 %v3759
        %4237 = vmatmul.mubr.bf16.gmra.mxu0 %v3758
        %v4238 = vpop.f32.mrf.mxu0
        %v4239 = vadd.f32 %v3847, %v4238
        %v4240 = vpop.f32.mrf.mxu0
        %v4241 = vadd.f32 %v3851, %v4240
        %v4242 = vpop.f32.mrf.mxu0
        %v4243 = vadd.f32 %v3847, %v4242
        %v4244 = vpop.f32.mrf.mxu0
        %v4245 = vadd.f32 %v3851, %v4244
        %4246 = vmatprep.mubr.bf16.mxu0 %v3763
        %4247 = vmatmul.mubr.bf16.gmra.mxu0 %v3762
        %v4248 = vpop.f32.mrf.mxu0
        %v4249 = vadd.f32 %v3847, %v4248
        %v4250 = vpop.f32.mrf.mxu0
        %v4251 = vadd.f32 %v3851, %v4250
        %v4252 = vpop.f32.mrf.mxu0
        %v4253 = vadd.f32 %v3847, %v4252
        %v4254 = vpop.f32.mrf.mxu0
        %v4255 = vadd.f32 %v3851, %v4254
        %4256 = vmatprep.mubr.bf16.mxu0 %v3767
        %4257 = vmatmul.mubr.bf16.gmra.mxu0 %v3766
        %v4258 = vpop.f32.mrf.mxu0
        %v4259 = vadd.f32 %v3847, %v4258
        %v4260 = vpop.f32.mrf.mxu0
        %v4261 = vadd.f32 %v3851, %v4260
        %v4262 = vpop.f32.mrf.mxu0
        %v4263 = vadd.f32 %v3847, %v4262
        %v4264 = vpop.f32.mrf.mxu0
        %v4265 = vadd.f32 %v3851, %v4264
        %4266 = vmatprep.mubr.bf16.mxu0 %v3771
        %4267 = vmatmul.mubr.bf16.gmra.mxu0 %v3770
        %v4268 = vpop.f32.mrf.mxu0
        %v4269 = vadd.f32 %v3847, %v4268
        %v4270 = vpop.f32.mrf.mxu0
        %v4271 = vadd.f32 %v3851, %v4270
        %v4272 = vpop.f32.mrf.mxu0
        %v4273 = vadd.f32 %v3847, %v4272
        %v4274 = vpop.f32.mrf.mxu0
        %v4275 = vadd.f32 %v3851, %v4274
        %4276 = vmatprep.mubr.bf16.mxu0 %v3775
        %4277 = vmatmul.mubr.bf16.gmra.mxu0 %v3774
        %v4278 = vpop.f32.mrf.mxu0
        %v4279 = vadd.f32 %v3847, %v4278
        %v4280 = vpop.f32.mrf.mxu0
        %v4281 = vadd.f32 %v3851, %v4280
        %v4282 = vpop.f32.mrf.mxu0
        %v4283 = vadd.f32 %v3847, %v4282
        %v4284 = vpop.f32.mrf.mxu0
        %v4285 = vadd.f32 %v3851, %v4284
        %4286 = vdwg.mxu0
        %4287 = vmatprep.subr.bf16.mxu0 %v4093
        %4288 = vmatpush1.bf16.msra.mxu0 %v4092
        %4289 = vmatprep.subr.bf16.mxu0 %v4091
        %4290 = vmatpush1.bf16.msra.mxu0 %v4090
        %4291 = vmatprep.subr.bf16.mxu0 %v4089
        %4292 = vmatpush1.bf16.msra.mxu0 %v4088
        %4293 = vmatprep.subr.bf16.mxu0 %v4087
        %4294 = vmatpush1.bf16.msra.mxu0 %v4086
        %4295 = vmatprep.subr.bf16.mxu0 %v4085
        %4296 = vmatpush1.bf16.msra.mxu0 %v4084
        %4297 = vmatprep.subr.bf16.mxu0 %v4083
        %4298 = vmatpush1.bf16.msra.mxu0 %v4082
        %4299 = vmatprep.subr.bf16.mxu0 %v4081
        %4300 = vmatpush1.bf16.msra.mxu0 %v4080
        %4301 = vmatprep.subr.bf16.mxu0 %v4079
        %4302 = vmatpush1.bf16.msra.mxu0 %v4078
        %4303 = vmatprep.subr.bf16.mxu0 %v4109
        %4304 = vmatpush2.bf16.msra.mxu0 %v4108
        %4305 = vmatprep.subr.bf16.mxu0 %v4107
        %4306 = vmatpush2.bf16.msra.mxu0 %v4106
        %4307 = vmatprep.subr.bf16.mxu0 %v4105
        %4308 = vmatpush2.bf16.msra.mxu0 %v4104
        %4309 = vmatprep.subr.bf16.mxu0 %v4103
        %4310 = vmatpush2.bf16.msra.mxu0 %v4102
        %4311 = vmatprep.subr.bf16.mxu0 %v4101
        %4312 = vmatpush2.bf16.msra.mxu0 %v4100
        %4313 = vmatprep.subr.bf16.mxu0 %v4099
        %4314 = vmatpush2.bf16.msra.mxu0 %v4098
        %4315 = vmatprep.subr.bf16.mxu0 %v4097
        %4316 = vmatpush2.bf16.msra.mxu0 %v4096
        %4317 = vmatprep.subr.bf16.mxu0 %v4095
        %4318 = vmatpush2.bf16.msra.mxu0 %v4094
        %4319 = vmatprep.mubr.bf16.mxu0 %v3749
        %4320 = vmatmul.mubr.bf16.gmra.mxu0 %v3748
        %v4321 = vpop.f32.mrf.mxu0
        %v4322 = vadd.f32 %v4209, %v4321
        %v4323 = vpop.f32.mrf.mxu0
        %v4324 = vadd.f32 %v4211, %v4323
        %v4325 = vpop.f32.mrf.mxu0
        %v4326 = vadd.f32 %v4213, %v4325
        %v4327 = vpop.f32.mrf.mxu0
        %v4328 = vadd.f32 %v4215, %v4327
        %4329 = vmatprep.mubr.bf16.mxu0 %v3753
        %4330 = vmatmul.mubr.bf16.gmra.mxu0 %v3752
        %v4331 = vpop.f32.mrf.mxu0
        %v4332 = vadd.f32 %v4219, %v4331
        %v4333 = vpop.f32.mrf.mxu0
        %v4334 = vadd.f32 %v4221, %v4333
        %v4335 = vpop.f32.mrf.mxu0
        %v4336 = vadd.f32 %v4223, %v4335
        %v4337 = vpop.f32.mrf.mxu0
        %v4338 = vadd.f32 %v4225, %v4337
        %4339 = vmatprep.mubr.bf16.mxu0 %v3757
        %4340 = vmatmul.mubr.bf16.gmra.mxu0 %v3756
        %v4341 = vpop.f32.mrf.mxu0
        %v4342 = vadd.f32 %v4229, %v4341
        %v4343 = vpop.f32.mrf.mxu0
        %v4344 = vadd.f32 %v4231, %v4343
        %v4345 = vpop.f32.mrf.mxu0
        %v4346 = vadd.f32 %v4233, %v4345
        %v4347 = vpop.f32.mrf.mxu0
        %v4348 = vadd.f32 %v4235, %v4347
        %4349 = vmatprep.mubr.bf16.mxu0 %v3761
        %4350 = vmatmul.mubr.bf16.gmra.mxu0 %v3760
        %v4351 = vpop.f32.mrf.mxu0
        %v4352 = vadd.f32 %v4239, %v4351
        %v4353 = vpop.f32.mrf.mxu0
        %v4354 = vadd.f32 %v4241, %v4353
        %v4355 = vpop.f32.mrf.mxu0
        %v4356 = vadd.f32 %v4243, %v4355
        %v4357 = vpop.f32.mrf.mxu0
        %v4358 = vadd.f32 %v4245, %v4357
        %4359 = vmatprep.mubr.bf16.mxu0 %v3765
        %4360 = vmatmul.mubr.bf16.gmra.mxu0 %v3764
        %v4361 = vpop.f32.mrf.mxu0
        %v4362 = vadd.f32 %v4249, %v4361
        %v4363 = vpop.f32.mrf.mxu0
        %v4364 = vadd.f32 %v4251, %v4363
        %v4365 = vpop.f32.mrf.mxu0
        %v4366 = vadd.f32 %v4253, %v4365
        %v4367 = vpop.f32.mrf.mxu0
        %v4368 = vadd.f32 %v4255, %v4367
        %4369 = vmatprep.mubr.bf16.mxu0 %v3769
        %4370 = vmatmul.mubr.bf16.gmra.mxu0 %v3768
        %v4371 = vpop.f32.mrf.mxu0
        %v4372 = vadd.f32 %v4259, %v4371
        %v4373 = vpop.f32.mrf.mxu0
        %v4374 = vadd.f32 %v4261, %v4373
        %v4375 = vpop.f32.mrf.mxu0
        %v4376 = vadd.f32 %v4263, %v4375
        %v4377 = vpop.f32.mrf.mxu0
        %v4378 = vadd.f32 %v4265, %v4377
        %4379 = vmatprep.mubr.bf16.mxu0 %v3773
        %4380 = vmatmul.mubr.bf16.gmra.mxu0 %v3772
        %v4381 = vpop.f32.mrf.mxu0
        %v4382 = vadd.f32 %v4269, %v4381
        %v4383 = vpop.f32.mrf.mxu0
        %v4384 = vadd.f32 %v4271, %v4383
        %v4385 = vpop.f32.mrf.mxu0
        %v4386 = vadd.f32 %v4273, %v4385
        %v4387 = vpop.f32.mrf.mxu0
        %v4388 = vadd.f32 %v4275, %v4387
        %4389 = vmatprep.mubr.bf16.mxu0 %v3777
        %4390 = vmatmul.mubr.bf16.gmra.mxu0 %v3776
        %v4391 = vpop.f32.mrf.mxu0
        %v4392 = vadd.f32 %v4279, %v4391
        %v4393 = vpop.f32.mrf.mxu0
        %v4394 = vadd.f32 %v4281, %v4393
        %v4395 = vpop.f32.mrf.mxu0
        %v4396 = vadd.f32 %v4283, %v4395
        %v4397 = vpop.f32.mrf.mxu0
        %v4398 = vadd.f32 %v4285, %v4397
        %4399 = vdwg.mxu0
        %v4400 = vtanh.pop %v4322
        %v4401 = vtanh.pop %v4324
        %v4402 = vtanh.pop %v4326
        %v4403 = vtanh.pop %v4328
        %v4404 = vtanh.pop %v4332
        %v4405 = vtanh.pop %v4334
        %v4406 = vtanh.pop %v4336
        %v4407 = vtanh.pop %v4338
        %v4408 = vtanh.pop %v4342
        %v4409 = vtanh.pop %v4344
        %v4410 = vtanh.pop %v4346
        %v4411 = vtanh.pop %v4348
        %v4412 = vtanh.pop %v4352
        %v4413 = vtanh.pop %v4354
        %v4414 = vtanh.pop %v4356
        %v4415 = vtanh.pop %v4358
        %v4416 = vtanh.pop %v4362
        %v4417 = vtanh.pop %v4364
        %v4418 = vtanh.pop %v4366
        %v4419 = vtanh.pop %v4368
        %v4420 = vtanh.pop %v4372
        %v4421 = vtanh.pop %v4374
        %v4422 = vtanh.pop %v4376
        %v4423 = vtanh.pop %v4378
        %v4424 = vtanh.pop %v4382
        %v4425 = vtanh.pop %v4384
        %v4426 = vtanh.pop %v4386
        %v4427 = vtanh.pop %v4388
        %v4428 = vtanh.pop %v4392
        %v4429 = vtanh.pop %v4394
        %v4430 = vtanh.pop %v4396
        %v4431 = vtanh.pop %v4398
        %v4432 = vld [vmem:[#allocation20] sm:$0xff]
        %v4433 = vld [vmem:[#allocation20 + $0x8] sm:$0xff]
        %v4434 = vld [vmem:[#allocation20 + $0x10] sm:$0xff]
        %v4435 = vld [vmem:[#allocation20 + $0x18] sm:$0xff]
        %v4436 = vld [vmem:[#allocation20 + $0x20] sm:$0xff]
        %v4437 = vld [vmem:[#allocation20 + $0x28] sm:$0xff]
        %v4438 = vld [vmem:[#allocation20 + $0x30] sm:$0xff]
        %v4439 = vld [vmem:[#allocation20 + $0x38] sm:$0xff]
        %v4440 = vld [vmem:[#allocation20 + $0x40] sm:$0xff]
        %v4441 = vld [vmem:[#allocation20 + $0x48] sm:$0xff]
        %v4442 = vld [vmem:[#allocation20 + $0x50] sm:$0xff]
        %v4443 = vld [vmem:[#allocation20 + $0x58] sm:$0xff]
        %v4444 = vld [vmem:[#allocation20 + $0x60] sm:$0xff]
        %v4445 = vld [vmem:[#allocation20 + $0x68] sm:$0xff]
        %v4446 = vld [vmem:[#allocation20 + $0x70] sm:$0xff]
        %v4447 = vld [vmem:[#allocation20 + $0x78] sm:$0xff]
        %v4448 = vld [vmem:[#allocation20 + $0x80] sm:$0xff]
        %v4449 = vld [vmem:[#allocation20 + $0x88] sm:$0xff]
        %v4450 = vld [vmem:[#allocation20 + $0x90] sm:$0xff]
        %v4451 = vld [vmem:[#allocation20 + $0x98] sm:$0xff]
        %v4452 = vld [vmem:[#allocation20 + $0xa0] sm:$0xff]
        %v4453 = vld [vmem:[#allocation20 + $0xa8] sm:$0xff]
        %v4454 = vld [vmem:[#allocation20 + $0xb0] sm:$0xff]
        %v4455 = vld [vmem:[#allocation20 + $0xb8] sm:$0xff]
        %v4456 = vld [vmem:[#allocation20 + $0xc0] sm:$0xff]
        %v4457 = vld [vmem:[#allocation20 + $0xc8] sm:$0xff]
        %v4458 = vld [vmem:[#allocation20 + $0xd0] sm:$0xff]
        %v4459 = vld [vmem:[#allocation20 + $0xd8] sm:$0xff]
        %v4460 = vld [vmem:[#allocation20 + $0xe0] sm:$0xff]
        %v4461 = vld [vmem:[#allocation20 + $0xe8] sm:$0xff]
        %v4462 = vld [vmem:[#allocation20 + $0xf0] sm:$0xff]
        %v4463 = vld [vmem:[#allocation20 + $0xf8] sm:$0xff]
        %v4464 = vld [vmem:[#allocation20 + $0x100] sm:$0xff]
        %v4465 = vld [vmem:[#allocation20 + $0x108] sm:$0xff]
        %v4466 = vld [vmem:[#allocation20 + $0x110] sm:$0xff]
        %v4467 = vld [vmem:[#allocation20 + $0x118] sm:$0xff]
        %v4468 = vld [vmem:[#allocation20 + $0x120] sm:$0xff]
        %v4469 = vld [vmem:[#allocation20 + $0x128] sm:$0xff]
        %v4470 = vld [vmem:[#allocation20 + $0x130] sm:$0xff]
        %v4471 = vld [vmem:[#allocation20 + $0x138] sm:$0xff]
        %v4472 = vld [vmem:[#allocation20 + $0x140] sm:$0xff]
        %v4473 = vld [vmem:[#allocation20 + $0x148] sm:$0xff]
        %v4474 = vld [vmem:[#allocation20 + $0x150] sm:$0xff]
        %v4475 = vld [vmem:[#allocation20 + $0x158] sm:$0xff]
        %v4476 = vld [vmem:[#allocation20 + $0x160] sm:$0xff]
        %v4477 = vld [vmem:[#allocation20 + $0x168] sm:$0xff]
        %v4478 = vld [vmem:[#allocation20 + $0x170] sm:$0xff]
        %v4479 = vld [vmem:[#allocation20 + $0x178] sm:$0xff]
        %v4480 = vld [vmem:[#allocation20 + $0x180] sm:$0xff]
        %v4481 = vld [vmem:[#allocation20 + $0x188] sm:$0xff]
        %v4482 = vld [vmem:[#allocation20 + $0x190] sm:$0xff]
        %v4483 = vld [vmem:[#allocation20 + $0x198] sm:$0xff]
        %v4484 = vld [vmem:[#allocation20 + $0x1a0] sm:$0xff]
        %v4485 = vld [vmem:[#allocation20 + $0x1a8] sm:$0xff]
        %v4486 = vld [vmem:[#allocation20 + $0x1b0] sm:$0xff]
        %v4487 = vld [vmem:[#allocation20 + $0x1b8] sm:$0xff]
        %v4488 = vld [vmem:[#allocation20 + $0x1c0] sm:$0xff]
        %v4489 = vld [vmem:[#allocation20 + $0x1c8] sm:$0xff]
        %v4490 = vld [vmem:[#allocation20 + $0x1d0] sm:$0xff]
        %v4491 = vld [vmem:[#allocation20 + $0x1d8] sm:$0xff]
        %v4492 = vld [vmem:[#allocation20 + $0x1e0] sm:$0xff]
        %v4493 = vld [vmem:[#allocation20 + $0x1e8] sm:$0xff]
        %v4494 = vld [vmem:[#allocation20 + $0x1f0] sm:$0xff]
        %v4495 = vld [vmem:[#allocation20 + $0x1f8] sm:$0xff]
        %v4496 = vld [vmem:[%s12] sm:$0x3]
        %v4498 = vlaneseq
        %v4499 = vshrl.u32 %v4498, 7
        %v4500 = vsub.s32 0, %v4499
        %v4501 = vrot.slane %v4496, %v4500
        %v4502 = vlaneseq
        %v4503 = vshrl.u32 %v4502, 7
        %v4504 = vsub.s32 1, %v4503
        %v4505 = vrot.slane %v4496, %v4504
        %v4572 = vunpack.c.l.b16 %v4432
        %v4573 = vunpack.c.h.b16 %v4432
        %v4574 = vunpack.c.l.b16 %v4433
        %v4575 = vunpack.c.h.b16 %v4433
        %v4576 = vunpack.c.l.b16 %v4434
        %v4577 = vunpack.c.h.b16 %v4434
        %v4578 = vunpack.c.l.b16 %v4435
        %v4579 = vunpack.c.h.b16 %v4435
        %v4580 = vunpack.c.l.b16 %v4436
        %v4581 = vunpack.c.h.b16 %v4436
        %v4582 = vunpack.c.l.b16 %v4437
        %v4583 = vunpack.c.h.b16 %v4437
        %v4584 = vunpack.c.l.b16 %v4438
        %v4585 = vunpack.c.h.b16 %v4438
        %v4586 = vunpack.c.l.b16 %v4439
        %v4587 = vunpack.c.h.b16 %v4439
        %v4588 = vunpack.c.l.b16 %v4440
        %v4589 = vunpack.c.h.b16 %v4440
        %v4590 = vunpack.c.l.b16 %v4441
        %v4591 = vunpack.c.h.b16 %v4441
        %v4592 = vunpack.c.l.b16 %v4442
        %v4593 = vunpack.c.h.b16 %v4442
        %v4594 = vunpack.c.l.b16 %v4443
        %v4595 = vunpack.c.h.b16 %v4443
        %v4596 = vunpack.c.l.b16 %v4444
        %v4597 = vunpack.c.h.b16 %v4444
        %v4598 = vunpack.c.l.b16 %v4445
        %v4599 = vunpack.c.h.b16 %v4445
        %v4600 = vunpack.c.l.b16 %v4446
        %v4601 = vunpack.c.h.b16 %v4446
        %v4602 = vunpack.c.l.b16 %v4447
        %v4603 = vunpack.c.h.b16 %v4447
        %v4604 = vunpack.c.l.b16 %v4448
        %v4605 = vunpack.c.h.b16 %v4448
        %v4606 = vunpack.c.l.b16 %v4449
        %v4607 = vunpack.c.h.b16 %v4449
        %v4608 = vunpack.c.l.b16 %v4450
        %v4609 = vunpack.c.h.b16 %v4450
        %v4610 = vunpack.c.l.b16 %v4451
        %v4611 = vunpack.c.h.b16 %v4451
        %v4612 = vunpack.c.l.b16 %v4452
        %v4613 = vunpack.c.h.b16 %v4452
        %v4614 = vunpack.c.l.b16 %v4453
        %v4615 = vunpack.c.h.b16 %v4453
        %v4616 = vunpack.c.l.b16 %v4454
        %v4617 = vunpack.c.h.b16 %v4454
        %v4618 = vunpack.c.l.b16 %v4455
        %v4619 = vunpack.c.h.b16 %v4455
        %v4620 = vunpack.c.l.b16 %v4456
        %v4621 = vunpack.c.h.b16 %v4456
        %v4622 = vunpack.c.l.b16 %v4457
        %v4623 = vunpack.c.h.b16 %v4457
        %v4624 = vunpack.c.l.b16 %v4458
        %v4625 = vunpack.c.h.b16 %v4458
        %v4626 = vunpack.c.l.b16 %v4459
        %v4627 = vunpack.c.h.b16 %v4459
        %v4628 = vunpack.c.l.b16 %v4460
        %v4629 = vunpack.c.h.b16 %v4460
        %v4630 = vunpack.c.l.b16 %v4461
        %v4631 = vunpack.c.h.b16 %v4461
        %v4632 = vunpack.c.l.b16 %v4462
        %v4633 = vunpack.c.h.b16 %v4462
        %v4634 = vunpack.c.l.b16 %v4463
        %v4635 = vunpack.c.h.b16 %v4463
        %v4636 = vunpack.c.l.b16 %v4464
        %v4637 = vunpack.c.h.b16 %v4464
        %v4638 = vunpack.c.l.b16 %v4465
        %v4639 = vunpack.c.h.b16 %v4465
        %v4640 = vunpack.c.l.b16 %v4466
        %v4641 = vunpack.c.h.b16 %v4466
        %v4642 = vunpack.c.l.b16 %v4467
        %v4643 = vunpack.c.h.b16 %v4467
        %v4644 = vunpack.c.l.b16 %v4468
        %v4645 = vunpack.c.h.b16 %v4468
        %v4646 = vunpack.c.l.b16 %v4469
        %v4647 = vunpack.c.h.b16 %v4469
        %v4648 = vunpack.c.l.b16 %v4470
        %v4649 = vunpack.c.h.b16 %v4470
        %v4650 = vunpack.c.l.b16 %v4471
        %v4651 = vunpack.c.h.b16 %v4471
        %v4652 = vunpack.c.l.b16 %v4472
        %v4653 = vunpack.c.h.b16 %v4472
        %v4654 = vunpack.c.l.b16 %v4473
        %v4655 = vunpack.c.h.b16 %v4473
        %v4656 = vunpack.c.l.b16 %v4474
        %v4657 = vunpack.c.h.b16 %v4474
        %v4658 = vunpack.c.l.b16 %v4475
        %v4659 = vunpack.c.h.b16 %v4475
        %v4660 = vunpack.c.l.b16 %v4476
        %v4661 = vunpack.c.h.b16 %v4476
        %v4662 = vunpack.c.l.b16 %v4477
        %v4663 = vunpack.c.h.b16 %v4477
        %v4664 = vunpack.c.l.b16 %v4478
        %v4665 = vunpack.c.h.b16 %v4478
        %v4666 = vunpack.c.l.b16 %v4479
        %v4667 = vunpack.c.h.b16 %v4479
        %v4668 = vunpack.c.l.b16 %v4480
        %v4669 = vunpack.c.h.b16 %v4480
        %v4670 = vunpack.c.l.b16 %v4481
        %v4671 = vunpack.c.h.b16 %v4481
        %v4672 = vunpack.c.l.b16 %v4482
        %v4673 = vunpack.c.h.b16 %v4482
        %v4674 = vunpack.c.l.b16 %v4483
        %v4675 = vunpack.c.h.b16 %v4483
        %v4676 = vunpack.c.l.b16 %v4484
        %v4677 = vunpack.c.h.b16 %v4484
        %v4678 = vunpack.c.l.b16 %v4485
        %v4679 = vunpack.c.h.b16 %v4485
        %v4680 = vunpack.c.l.b16 %v4486
        %v4681 = vunpack.c.h.b16 %v4486
        %v4682 = vunpack.c.l.b16 %v4487
        %v4683 = vunpack.c.h.b16 %v4487
        %v4684 = vunpack.c.l.b16 %v4488
        %v4685 = vunpack.c.h.b16 %v4488
        %v4686 = vunpack.c.l.b16 %v4489
        %v4687 = vunpack.c.h.b16 %v4489
        %v4688 = vunpack.c.l.b16 %v4490
        %v4689 = vunpack.c.h.b16 %v4490
        %v4690 = vunpack.c.l.b16 %v4491
        %v4691 = vunpack.c.h.b16 %v4491
        %v4692 = vunpack.c.l.b16 %v4492
        %v4693 = vunpack.c.h.b16 %v4492
        %v4694 = vunpack.c.l.b16 %v4493
        %v4695 = vunpack.c.h.b16 %v4493
        %v4696 = vunpack.c.l.b16 %v4494
        %v4697 = vunpack.c.h.b16 %v4494
        %v4698 = vunpack.c.l.b16 %v4495
        %v4699 = vunpack.c.h.b16 %v4495
        %v4700 = vpack.c.b16 %v4574, %v4572
        %v4701 = vpack.c.b16 %v4575, %v4573
        %v4702 = vpack.c.b16 %v4578, %v4576
        %v4703 = vpack.c.b16 %v4579, %v4577
        %v4704 = vpack.c.b16 %v4582, %v4580
        %v4705 = vpack.c.b16 %v4583, %v4581
        %v4706 = vpack.c.b16 %v4586, %v4584
        %v4707 = vpack.c.b16 %v4587, %v4585
        %v4708 = vpack.c.b16 %v4590, %v4588
        %v4709 = vpack.c.b16 %v4591, %v4589
        %v4710 = vpack.c.b16 %v4594, %v4592
        %v4711 = vpack.c.b16 %v4595, %v4593
        %v4712 = vpack.c.b16 %v4598, %v4596
        %v4713 = vpack.c.b16 %v4599, %v4597
        %v4714 = vpack.c.b16 %v4602, %v4600
        %v4715 = vpack.c.b16 %v4603, %v4601
        %v4716 = vpack.c.b16 %v4606, %v4604
        %v4717 = vpack.c.b16 %v4607, %v4605
        %v4718 = vpack.c.b16 %v4610, %v4608
        %v4719 = vpack.c.b16 %v4611, %v4609
        %v4720 = vpack.c.b16 %v4614, %v4612
        %v4721 = vpack.c.b16 %v4615, %v4613
        %v4722 = vpack.c.b16 %v4618, %v4616
        %v4723 = vpack.c.b16 %v4619, %v4617
        %v4724 = vpack.c.b16 %v4622, %v4620
        %v4725 = vpack.c.b16 %v4623, %v4621
        %v4726 = vpack.c.b16 %v4626, %v4624
        %v4727 = vpack.c.b16 %v4627, %v4625
        %v4728 = vpack.c.b16 %v4630, %v4628
        %v4729 = vpack.c.b16 %v4631, %v4629
        %v4730 = vpack.c.b16 %v4634, %v4632
        %v4731 = vpack.c.b16 %v4635, %v4633
        %v4732 = vpack.c.b16 %v4638, %v4636
        %v4733 = vpack.c.b16 %v4639, %v4637
        %v4734 = vpack.c.b16 %v4642, %v4640
        %v4735 = vpack.c.b16 %v4643, %v4641
        %v4736 = vpack.c.b16 %v4646, %v4644
        %v4737 = vpack.c.b16 %v4647, %v4645
        %v4738 = vpack.c.b16 %v4650, %v4648
        %v4739 = vpack.c.b16 %v4651, %v4649
        %v4740 = vpack.c.b16 %v4654, %v4652
        %v4741 = vpack.c.b16 %v4655, %v4653
        %v4742 = vpack.c.b16 %v4658, %v4656
        %v4743 = vpack.c.b16 %v4659, %v4657
        %v4744 = vpack.c.b16 %v4662, %v4660
        %v4745 = vpack.c.b16 %v4663, %v4661
        %v4746 = vpack.c.b16 %v4666, %v4664
        %v4747 = vpack.c.b16 %v4667, %v4665
        %v4748 = vpack.c.b16 %v4670, %v4668
        %v4749 = vpack.c.b16 %v4671, %v4669
        %v4750 = vpack.c.b16 %v4674, %v4672
        %v4751 = vpack.c.b16 %v4675, %v4673
        %v4752 = vpack.c.b16 %v4678, %v4676
        %v4753 = vpack.c.b16 %v4679, %v4677
        %v4754 = vpack.c.b16 %v4682, %v4680
        %v4755 = vpack.c.b16 %v4683, %v4681
        %v4756 = vpack.c.b16 %v4686, %v4684
        %v4757 = vpack.c.b16 %v4687, %v4685
        %v4758 = vpack.c.b16 %v4690, %v4688
        %v4759 = vpack.c.b16 %v4691, %v4689
        %v4760 = vpack.c.b16 %v4694, %v4692
        %v4761 = vpack.c.b16 %v4695, %v4693
        %v4762 = vpack.c.b16 %v4698, %v4696
        %v4763 = vpack.c.b16 %v4699, %v4697
        %4828 = vmatprep.subr.bf16.mxu0 %v4715
        %4829 = vmatpush1.bf16.msra.mxu0 %v4714
        %4830 = vmatprep.subr.bf16.mxu0 %v4713
        %4831 = vmatpush1.bf16.msra.mxu0 %v4712
        %4832 = vmatprep.subr.bf16.mxu0 %v4711
        %4833 = vmatpush1.bf16.msra.mxu0 %v4710
        %4834 = vmatprep.subr.bf16.mxu0 %v4709
        %4835 = vmatpush1.bf16.msra.mxu0 %v4708
        %4836 = vmatprep.subr.bf16.mxu0 %v4707
        %4837 = vmatpush1.bf16.msra.mxu0 %v4706
        %4838 = vmatprep.subr.bf16.mxu0 %v4705
        %4839 = vmatpush1.bf16.msra.mxu0 %v4704
        %4840 = vmatprep.subr.bf16.mxu0 %v4703
        %4841 = vmatpush1.bf16.msra.mxu0 %v4702
        %4842 = vmatprep.subr.bf16.mxu0 %v4701
        %4843 = vmatpush1.bf16.msra.mxu0 %v4700
        %4844 = vmatprep.subr.bf16.mxu0 %v4731
        %4845 = vmatpush2.bf16.msra.mxu0 %v4730
        %4846 = vmatprep.subr.bf16.mxu0 %v4729
        %4847 = vmatpush2.bf16.msra.mxu0 %v4728
        %4848 = vmatprep.subr.bf16.mxu0 %v4727
        %4849 = vmatpush2.bf16.msra.mxu0 %v4726
        %4850 = vmatprep.subr.bf16.mxu0 %v4725
        %4851 = vmatpush2.bf16.msra.mxu0 %v4724
        %4852 = vmatprep.subr.bf16.mxu0 %v4723
        %4853 = vmatpush2.bf16.msra.mxu0 %v4722
        %4854 = vmatprep.subr.bf16.mxu0 %v4721
        %4855 = vmatpush2.bf16.msra.mxu0 %v4720
        %4856 = vmatprep.subr.bf16.mxu0 %v4719
        %4857 = vmatpush2.bf16.msra.mxu0 %v4718
        %4858 = vmatprep.subr.bf16.mxu0 %v4717
        %4859 = vmatpush2.bf16.msra.mxu0 %v4716
        %4860 = vmatprep.mubr.bf16.mxu0 %v3747
        %4861 = vmatmul.mubr.bf16.gmra.mxu0 %v3746
        %v4862 = vpop.f32.mrf.mxu0
        %v4863 = vadd.f32 %v4501, %v4862
        %v4864 = vpop.f32.mrf.mxu0
        %v4865 = vadd.f32 %v4505, %v4864
        %v4866 = vpop.f32.mrf.mxu0
        %v4867 = vadd.f32 %v4501, %v4866
        %v4868 = vpop.f32.mrf.mxu0
        %v4869 = vadd.f32 %v4505, %v4868
        %4870 = vmatprep.mubr.bf16.mxu0 %v3751
        %4871 = vmatmul.mubr.bf16.gmra.mxu0 %v3750
        %v4872 = vpop.f32.mrf.mxu0
        %v4873 = vadd.f32 %v4501, %v4872
        %v4874 = vpop.f32.mrf.mxu0
        %v4875 = vadd.f32 %v4505, %v4874
        %v4876 = vpop.f32.mrf.mxu0
        %v4877 = vadd.f32 %v4501, %v4876
        %v4878 = vpop.f32.mrf.mxu0
        %v4879 = vadd.f32 %v4505, %v4878
        %4880 = vmatprep.mubr.bf16.mxu0 %v3755
        %4881 = vmatmul.mubr.bf16.gmra.mxu0 %v3754
        %v4882 = vpop.f32.mrf.mxu0
        %v4883 = vadd.f32 %v4501, %v4882
        %v4884 = vpop.f32.mrf.mxu0
        %v4885 = vadd.f32 %v4505, %v4884
        %v4886 = vpop.f32.mrf.mxu0
        %v4887 = vadd.f32 %v4501, %v4886
        %v4888 = vpop.f32.mrf.mxu0
        %v4889 = vadd.f32 %v4505, %v4888
        %4890 = vmatprep.mubr.bf16.mxu0 %v3759
        %4891 = vmatmul.mubr.bf16.gmra.mxu0 %v3758
        %v4892 = vpop.f32.mrf.mxu0
        %v4893 = vadd.f32 %v4501, %v4892
        %v4894 = vpop.f32.mrf.mxu0
        %v4895 = vadd.f32 %v4505, %v4894
        %v4896 = vpop.f32.mrf.mxu0
        %v4897 = vadd.f32 %v4501, %v4896
        %v4898 = vpop.f32.mrf.mxu0
        %v4899 = vadd.f32 %v4505, %v4898
        %4900 = vmatprep.mubr.bf16.mxu0 %v3763
        %4901 = vmatmul.mubr.bf16.gmra.mxu0 %v3762
        %v4902 = vpop.f32.mrf.mxu0
        %v4903 = vadd.f32 %v4501, %v4902
        %v4904 = vpop.f32.mrf.mxu0
        %v4905 = vadd.f32 %v4505, %v4904
        %v4906 = vpop.f32.mrf.mxu0
        %v4907 = vadd.f32 %v4501, %v4906
        %v4908 = vpop.f32.mrf.mxu0
        %v4909 = vadd.f32 %v4505, %v4908
        %4910 = vmatprep.mubr.bf16.mxu0 %v3767
        %4911 = vmatmul.mubr.bf16.gmra.mxu0 %v3766
        %v4912 = vpop.f32.mrf.mxu0
        %v4913 = vadd.f32 %v4501, %v4912
        %v4914 = vpop.f32.mrf.mxu0
        %v4915 = vadd.f32 %v4505, %v4914
        %v4916 = vpop.f32.mrf.mxu0
        %v4917 = vadd.f32 %v4501, %v4916
        %v4918 = vpop.f32.mrf.mxu0
        %v4919 = vadd.f32 %v4505, %v4918
        %4920 = vmatprep.mubr.bf16.mxu0 %v3771
        %4921 = vmatmul.mubr.bf16.gmra.mxu0 %v3770
        %v4922 = vpop.f32.mrf.mxu0
        %v4923 = vadd.f32 %v4501, %v4922
        %v4924 = vpop.f32.mrf.mxu0
        %v4925 = vadd.f32 %v4505, %v4924
        %v4926 = vpop.f32.mrf.mxu0
        %v4927 = vadd.f32 %v4501, %v4926
        %v4928 = vpop.f32.mrf.mxu0
        %v4929 = vadd.f32 %v4505, %v4928
        %4930 = vmatprep.mubr.bf16.mxu0 %v3775
        %4931 = vmatmul.mubr.bf16.gmra.mxu0 %v3774
        %v4932 = vpop.f32.mrf.mxu0
        %v4933 = vadd.f32 %v4501, %v4932
        %v4934 = vpop.f32.mrf.mxu0
        %v4935 = vadd.f32 %v4505, %v4934
        %v4936 = vpop.f32.mrf.mxu0
        %v4937 = vadd.f32 %v4501, %v4936
        %v4938 = vpop.f32.mrf.mxu0
        %v4939 = vadd.f32 %v4505, %v4938
        %4940 = vdwg.mxu0
        %4941 = vmatprep.subr.bf16.mxu0 %v4747
        %4942 = vmatpush1.bf16.msra.mxu0 %v4746
        %4943 = vmatprep.subr.bf16.mxu0 %v4745
        %4944 = vmatpush1.bf16.msra.mxu0 %v4744
        %4945 = vmatprep.subr.bf16.mxu0 %v4743
        %4946 = vmatpush1.bf16.msra.mxu0 %v4742
        %4947 = vmatprep.subr.bf16.mxu0 %v4741
        %4948 = vmatpush1.bf16.msra.mxu0 %v4740
        %4949 = vmatprep.subr.bf16.mxu0 %v4739
        %4950 = vmatpush1.bf16.msra.mxu0 %v4738
        %4951 = vmatprep.subr.bf16.mxu0 %v4737
        %4952 = vmatpush1.bf16.msra.mxu0 %v4736
        %4953 = vmatprep.subr.bf16.mxu0 %v4735
        %4954 = vmatpush1.bf16.msra.mxu0 %v4734
        %4955 = vmatprep.subr.bf16.mxu0 %v4733
        %4956 = vmatpush1.bf16.msra.mxu0 %v4732
        %4957 = vmatprep.subr.bf16.mxu0 %v4763
        %4958 = vmatpush2.bf16.msra.mxu0 %v4762
        %4959 = vmatprep.subr.bf16.mxu0 %v4761
        %4960 = vmatpush2.bf16.msra.mxu0 %v4760
        %4961 = vmatprep.subr.bf16.mxu0 %v4759
        %4962 = vmatpush2.bf16.msra.mxu0 %v4758
        %4963 = vmatprep.subr.bf16.mxu0 %v4757
        %4964 = vmatpush2.bf16.msra.mxu0 %v4756
        %4965 = vmatprep.subr.bf16.mxu0 %v4755
        %4966 = vmatpush2.bf16.msra.mxu0 %v4754
        %4967 = vmatprep.subr.bf16.mxu0 %v4753
        %4968 = vmatpush2.bf16.msra.mxu0 %v4752
        %4969 = vmatprep.subr.bf16.mxu0 %v4751
        %4970 = vmatpush2.bf16.msra.mxu0 %v4750
        %4971 = vmatprep.subr.bf16.mxu0 %v4749
        %4972 = vmatpush2.bf16.msra.mxu0 %v4748
        %4973 = vmatprep.mubr.bf16.mxu0 %v3749
        %4974 = vmatmul.mubr.bf16.gmra.mxu0 %v3748
        %v4975 = vpop.f32.mrf.mxu0
        %v4976 = vadd.f32 %v4863, %v4975
        %v4977 = vpop.f32.mrf.mxu0
        %v4978 = vadd.f32 %v4865, %v4977
        %v4979 = vpop.f32.mrf.mxu0
        %v4980 = vadd.f32 %v4867, %v4979
        %v4981 = vpop.f32.mrf.mxu0
        %v4982 = vadd.f32 %v4869, %v4981
        %4983 = vmatprep.mubr.bf16.mxu0 %v3753
        %4984 = vmatmul.mubr.bf16.gmra.mxu0 %v3752
        %v4985 = vpop.f32.mrf.mxu0
        %v4986 = vadd.f32 %v4873, %v4985
        %v4987 = vpop.f32.mrf.mxu0
        %v4988 = vadd.f32 %v4875, %v4987
        %v4989 = vpop.f32.mrf.mxu0
        %v4990 = vadd.f32 %v4877, %v4989
        %v4991 = vpop.f32.mrf.mxu0
        %v4992 = vadd.f32 %v4879, %v4991
        %4993 = vmatprep.mubr.bf16.mxu0 %v3757
        %4994 = vmatmul.mubr.bf16.gmra.mxu0 %v3756
        %v4995 = vpop.f32.mrf.mxu0
        %v4996 = vadd.f32 %v4883, %v4995
        %v4997 = vpop.f32.mrf.mxu0
        %v4998 = vadd.f32 %v4885, %v4997
        %v4999 = vpop.f32.mrf.mxu0
        %v5000 = vadd.f32 %v4887, %v4999
        %v5001 = vpop.f32.mrf.mxu0
        %v5002 = vadd.f32 %v4889, %v5001
        %5003 = vmatprep.mubr.bf16.mxu0 %v3761
        %5004 = vmatmul.mubr.bf16.gmra.mxu0 %v3760
        %v5005 = vpop.f32.mrf.mxu0
        %v5006 = vadd.f32 %v4893, %v5005
        %v5007 = vpop.f32.mrf.mxu0
        %v5008 = vadd.f32 %v4895, %v5007
        %v5009 = vpop.f32.mrf.mxu0
        %v5010 = vadd.f32 %v4897, %v5009
        %v5011 = vpop.f32.mrf.mxu0
        %v5012 = vadd.f32 %v4899, %v5011
        %5013 = vmatprep.mubr.bf16.mxu0 %v3765
        %5014 = vmatmul.mubr.bf16.gmra.mxu0 %v3764
        %v5015 = vpop.f32.mrf.mxu0
        %v5016 = vadd.f32 %v4903, %v5015
        %v5017 = vpop.f32.mrf.mxu0
        %v5018 = vadd.f32 %v4905, %v5017
        %v5019 = vpop.f32.mrf.mxu0
        %v5020 = vadd.f32 %v4907, %v5019
        %v5021 = vpop.f32.mrf.mxu0
        %v5022 = vadd.f32 %v4909, %v5021
        %5023 = vmatprep.mubr.bf16.mxu0 %v3769
        %5024 = vmatmul.mubr.bf16.gmra.mxu0 %v3768
        %v5025 = vpop.f32.mrf.mxu0
        %v5026 = vadd.f32 %v4913, %v5025
        %v5027 = vpop.f32.mrf.mxu0
        %v5028 = vadd.f32 %v4915, %v5027
        %v5029 = vpop.f32.mrf.mxu0
        %v5030 = vadd.f32 %v4917, %v5029
        %v5031 = vpop.f32.mrf.mxu0
        %v5032 = vadd.f32 %v4919, %v5031
        %5033 = vmatprep.mubr.bf16.mxu0 %v3773
        %5034 = vmatmul.mubr.bf16.gmra.mxu0 %v3772
        %v5035 = vpop.f32.mrf.mxu0
        %v5036 = vadd.f32 %v4923, %v5035
        %v5037 = vpop.f32.mrf.mxu0
        %v5038 = vadd.f32 %v4925, %v5037
        %v5039 = vpop.f32.mrf.mxu0
        %v5040 = vadd.f32 %v4927, %v5039
        %v5041 = vpop.f32.mrf.mxu0
        %v5042 = vadd.f32 %v4929, %v5041
        %5043 = vmatprep.mubr.bf16.mxu0 %v3777
        %5044 = vmatmul.mubr.bf16.gmra.mxu0 %v3776
        %v5045 = vpop.f32.mrf.mxu0
        %v5046 = vadd.f32 %v4933, %v5045
        %v5047 = vpop.f32.mrf.mxu0
        %v5048 = vadd.f32 %v4935, %v5047
        %v5049 = vpop.f32.mrf.mxu0
        %v5050 = vadd.f32 %v4937, %v5049
        %v5051 = vpop.f32.mrf.mxu0
        %v5052 = vadd.f32 %v4939, %v5051
        %5053 = vdwg.mxu0
        %v5054 = vmul.f32 %v4976, 0.5
        %v5055 = vmul.f32 %v4978, 0.5
        %v5056 = vmul.f32 %v4980, 0.5
        %v5057 = vmul.f32 %v4982, 0.5
        %v5058 = vmul.f32 %v4986, 0.5
        %v5059 = vmul.f32 %v4988, 0.5
        %v5060 = vmul.f32 %v4990, 0.5
        %v5061 = vmul.f32 %v4992, 0.5
        %v5062 = vmul.f32 %v4996, 0.5
        %v5063 = vmul.f32 %v4998, 0.5
        %v5064 = vmul.f32 %v5000, 0.5
        %v5065 = vmul.f32 %v5002, 0.5
        %v5066 = vmul.f32 %v5006, 0.5
        %v5067 = vmul.f32 %v5008, 0.5
        %v5068 = vmul.f32 %v5010, 0.5
        %v5069 = vmul.f32 %v5012, 0.5
        %v5070 = vmul.f32 %v5016, 0.5
        %v5071 = vmul.f32 %v5018, 0.5
        %v5072 = vmul.f32 %v5020, 0.5
        %v5073 = vmul.f32 %v5022, 0.5
        %v5074 = vmul.f32 %v5026, 0.5
        %v5075 = vmul.f32 %v5028, 0.5
        %v5076 = vmul.f32 %v5030, 0.5
        %v5077 = vmul.f32 %v5032, 0.5
        %v5078 = vmul.f32 %v5036, 0.5
        %v5079 = vmul.f32 %v5038, 0.5
        %v5080 = vmul.f32 %v5040, 0.5
        %v5081 = vmul.f32 %v5042, 0.5
        %v5082 = vmul.f32 %v5046, 0.5
        %v5083 = vmul.f32 %v5048, 0.5
        %v5084 = vmul.f32 %v5050, 0.5
        %v5085 = vmul.f32 %v5052, 0.5
        %v5086 = vtanh.pop %v5054
        %v5087 = vtanh.pop %v5055
        %v5088 = vtanh.pop %v5056
        %v5089 = vtanh.pop %v5057
        %v5090 = vtanh.pop %v5058
        %v5091 = vtanh.pop %v5059
        %v5092 = vtanh.pop %v5060
        %v5093 = vtanh.pop %v5061
        %v5094 = vtanh.pop %v5062
        %v5095 = vtanh.pop %v5063
        %v5096 = vtanh.pop %v5064
        %v5097 = vtanh.pop %v5065
        %v5098 = vtanh.pop %v5066
        %v5099 = vtanh.pop %v5067
        %v5100 = vtanh.pop %v5068
        %v5101 = vtanh.pop %v5069
        %v5102 = vtanh.pop %v5070
        %v5103 = vtanh.pop %v5071
        %v5104 = vtanh.pop %v5072
        %v5105 = vtanh.pop %v5073
        %v5106 = vtanh.pop %v5074
        %v5107 = vtanh.pop %v5075
        %v5108 = vtanh.pop %v5076
        %v5109 = vtanh.pop %v5077
        %v5110 = vtanh.pop %v5078
        %v5111 = vtanh.pop %v5079
        %v5112 = vtanh.pop %v5080
        %v5113 = vtanh.pop %v5081
        %v5114 = vtanh.pop %v5082
        %v5115 = vtanh.pop %v5083
        %v5116 = vtanh.pop %v5084
        %v5117 = vtanh.pop %v5085
        %v5118 = vmul.f32 %v5086, 0.5
        %v5119 = vmul.f32 %v5087, 0.5
        %v5120 = vmul.f32 %v5088, 0.5
        %v5121 = vmul.f32 %v5089, 0.5
        %v5122 = vmul.f32 %v5090, 0.5
        %v5123 = vmul.f32 %v5091, 0.5
        %v5124 = vmul.f32 %v5092, 0.5
        %v5125 = vmul.f32 %v5093, 0.5
        %v5126 = vmul.f32 %v5094, 0.5
        %v5127 = vmul.f32 %v5095, 0.5
        %v5128 = vmul.f32 %v5096, 0.5
        %v5129 = vmul.f32 %v5097, 0.5
        %v5130 = vmul.f32 %v5098, 0.5
        %v5131 = vmul.f32 %v5099, 0.5
        %v5132 = vmul.f32 %v5100, 0.5
        %v5133 = vmul.f32 %v5101, 0.5
        %v5134 = vmul.f32 %v5102, 0.5
        %v5135 = vmul.f32 %v5103, 0.5
        %v5136 = vmul.f32 %v5104, 0.5
        %v5137 = vmul.f32 %v5105, 0.5
        %v5138 = vmul.f32 %v5106, 0.5
        %v5139 = vmul.f32 %v5107, 0.5
        %v5140 = vmul.f32 %v5108, 0.5
        %v5141 = vmul.f32 %v5109, 0.5
        %v5142 = vmul.f32 %v5110, 0.5
        %v5143 = vmul.f32 %v5111, 0.5
        %v5144 = vmul.f32 %v5112, 0.5
        %v5145 = vmul.f32 %v5113, 0.5
        %v5146 = vmul.f32 %v5114, 0.5
        %v5147 = vmul.f32 %v5115, 0.5
        %v5148 = vmul.f32 %v5116, 0.5
        %v5149 = vmul.f32 %v5117, 0.5
        %v5150 = vadd.f32 %v5118, 0.5
        %v5151 = vadd.f32 %v5119, 0.5
        %v5152 = vadd.f32 %v5120, 0.5
        %v5153 = vadd.f32 %v5121, 0.5
        %v5154 = vadd.f32 %v5122, 0.5
        %v5155 = vadd.f32 %v5123, 0.5
        %v5156 = vadd.f32 %v5124, 0.5
        %v5157 = vadd.f32 %v5125, 0.5
        %v5158 = vadd.f32 %v5126, 0.5
        %v5159 = vadd.f32 %v5127, 0.5
        %v5160 = vadd.f32 %v5128, 0.5
        %v5161 = vadd.f32 %v5129, 0.5
        %v5162 = vadd.f32 %v5130, 0.5
        %v5163 = vadd.f32 %v5131, 0.5
        %v5164 = vadd.f32 %v5132, 0.5
        %v5165 = vadd.f32 %v5133, 0.5
        %v5166 = vadd.f32 %v5134, 0.5
        %v5167 = vadd.f32 %v5135, 0.5
        %v5168 = vadd.f32 %v5136, 0.5
        %v5169 = vadd.f32 %v5137, 0.5
        %v5170 = vadd.f32 %v5138, 0.5
        %v5171 = vadd.f32 %v5139, 0.5
        %v5172 = vadd.f32 %v5140, 0.5
        %v5173 = vadd.f32 %v5141, 0.5
        %v5174 = vadd.f32 %v5142, 0.5
        %v5175 = vadd.f32 %v5143, 0.5
        %v5176 = vadd.f32 %v5144, 0.5
        %v5177 = vadd.f32 %v5145, 0.5
        %v5178 = vadd.f32 %v5146, 0.5
        %v5179 = vadd.f32 %v5147, 0.5
        %v5180 = vadd.f32 %v5148, 0.5
        %v5181 = vadd.f32 %v5149, 0.5
        %v5182 = vmul.f32 %v4400, %v5150
        %v5183 = vmul.f32 %v4401, %v5151
        %v5184 = vmul.f32 %v4402, %v5152
        %v5185 = vmul.f32 %v4403, %v5153
        %v5186 = vmul.f32 %v4404, %v5154
        %v5187 = vmul.f32 %v4405, %v5155
        %v5188 = vmul.f32 %v4406, %v5156
        %v5189 = vmul.f32 %v4407, %v5157
        %v5190 = vmul.f32 %v4408, %v5158
        %v5191 = vmul.f32 %v4409, %v5159
        %v5192 = vmul.f32 %v4410, %v5160
        %v5193 = vmul.f32 %v4411, %v5161
        %v5194 = vmul.f32 %v4412, %v5162
        %v5195 = vmul.f32 %v4413, %v5163
        %v5196 = vmul.f32 %v4414, %v5164
        %v5197 = vmul.f32 %v4415, %v5165
        %v5198 = vmul.f32 %v4416, %v5166
        %v5199 = vmul.f32 %v4417, %v5167
        %v5200 = vmul.f32 %v4418, %v5168
        %v5201 = vmul.f32 %v4419, %v5169
        %v5202 = vmul.f32 %v4420, %v5170
        %v5203 = vmul.f32 %v4421, %v5171
        %v5204 = vmul.f32 %v4422, %v5172
        %v5205 = vmul.f32 %v4423, %v5173
        %v5206 = vmul.f32 %v4424, %v5174
        %v5207 = vmul.f32 %v4425, %v5175
        %v5208 = vmul.f32 %v4426, %v5176
        %v5209 = vmul.f32 %v4427, %v5177
        %v5210 = vmul.f32 %v4428, %v5178
        %v5211 = vmul.f32 %v4429, %v5179
        %v5212 = vmul.f32 %v4430, %v5180
        %v5213 = vmul.f32 %v4431, %v5181
        %v5214 = vpack.c.bf16 %v5184, %v5182
        %v5215 = vpack.c.bf16 %v5185, %v5183
        %v5216 = vpack.c.bf16 %v5188, %v5186
        %v5217 = vpack.c.bf16 %v5189, %v5187
        %v5218 = vpack.c.bf16 %v5192, %v5190
        %v5219 = vpack.c.bf16 %v5193, %v5191
        %v5220 = vpack.c.bf16 %v5196, %v5194
        %v5221 = vpack.c.bf16 %v5197, %v5195
        %v5222 = vpack.c.bf16 %v5200, %v5198
        %v5223 = vpack.c.bf16 %v5201, %v5199
        %v5224 = vpack.c.bf16 %v5204, %v5202
        %v5225 = vpack.c.bf16 %v5205, %v5203
        %v5226 = vpack.c.bf16 %v5208, %v5206
        %v5227 = vpack.c.bf16 %v5209, %v5207
        %v5228 = vpack.c.bf16 %v5212, %v5210
        %v5229 = vpack.c.bf16 %v5213, %v5211
        %v5230 = vld [vmem:[%s13] sm:$0x3]
        %v5231 = vld [vmem:[%s14] sm:$0x3]
        %5233 = vset.pattern.permute.xlu0 0
        %5234 = vperm.xlu0 %5233, %v5231
        %v5235 = vpop.permute.xlu0 %5234
        %v5239 = vunpack.c.l.s4 1966171168
        %v5240 = vunpack.c.0.s8 %v5239
        %v5241 = vlaneseq
        %v5242 = vshrl.u32 %v5241, 7
        %v5243 = vsub.s32 %v5240, %v5242
        %v5244 = vrot.slane %v5230, %v5243
        %v5245 = vcombine.high %v5244, %v5244
        %v5247 = vunpack.c.l.s4 1966171168
        %v5248 = vunpack.c.0.s8 %v5247
        %v5249 = vlaneseq
        %v5250 = vshrl.u32 %v5249, 7
        %v5251 = vsub.s32 %v5248, %v5250
        %v5252 = vrot.slane %v5244, %v5251
        %v5254 = vunpack.c.l.s4 1966171168
        %v5255 = vunpack.c.0.s8 %v5254
        %v5256 = vlaneseq
        %v5257 = vshrl.u32 %v5256, 7
        %v5258 = vsub.s32 %v5255, %v5257
        %v5259 = vrot.slane %v5245, %v5258
        %5262 = vmatprep.subr.bf16.mxu0 %v5229
        %5263 = vmatpush1.bf16.xpose.msra.mxu0 %v5228
        %5264 = vmatprep.subr.bf16.mxu0 %v5227
        %5265 = vmatpush1.bf16.xpose.msra.mxu0 %v5226
        %5266 = vmatprep.subr.bf16.mxu0 %v5225
        %5267 = vmatpush1.bf16.xpose.msra.mxu0 %v5224
        %5268 = vmatprep.subr.bf16.mxu0 %v5223
        %5269 = vmatpush1.bf16.xpose.msra.mxu0 %v5222
        %5270 = vmatprep.subr.bf16.mxu0 %v5221
        %5271 = vmatpush1.bf16.xpose.msra.mxu0 %v5220
        %5272 = vmatprep.subr.bf16.mxu0 %v5219
        %5273 = vmatpush1.bf16.xpose.msra.mxu0 %v5218
        %5274 = vmatprep.subr.bf16.mxu0 %v5217
        %5275 = vmatpush1.bf16.xpose.msra.mxu0 %v5216
        %5276 = vmatprep.subr.bf16.mxu0 %v5215
        %5277 = vmatpush1.bf16.xpose.msra.mxu0 %v5214
        %5278 = vmatprep.subr.bf16.mxu0 0
        %5279 = vmatpush2.bf16.xpose.msra.mxu0 0
        %5280 = vmatprep.subr.bf16.mxu0 0
        %5281 = vmatpush2.bf16.xpose.msra.mxu0 0
        %5282 = vmatprep.subr.bf16.mxu0 0
        %5283 = vmatpush2.bf16.xpose.msra.mxu0 0
        %5284 = vmatprep.subr.bf16.mxu0 0
        %5285 = vmatpush2.bf16.xpose.msra.mxu0 0
        %5286 = vmatprep.subr.bf16.mxu0 0
        %5287 = vmatpush2.bf16.xpose.msra.mxu0 0
        %5288 = vmatprep.subr.bf16.mxu0 0
        %5289 = vmatpush2.bf16.xpose.msra.mxu0 0
        %5290 = vmatprep.subr.bf16.mxu0 0
        %5291 = vmatpush2.bf16.xpose.msra.mxu0 0
        %5292 = vmatprep.subr.bf16.mxu0 0
        %5293 = vmatpush2.bf16.xpose.msra.mxu0 0
        %5294 = vmatprep.mubr.bf16.mxu0 %v5259
        %5295 = vmatmul.mubr.bf16.gmra.mxu0 %v5252
        %v5296 = vpop.f32.mrf.mxu0
        %v5297 = vadd.f32 %v5235, %v5296
        %v5298 = vpop.f32.mrf.mxu0
        %v5299 = vpop.f32.mrf.mxu0
        %v5300 = vpop.f32.mrf.mxu0
        %5301 = vdwg.mxu0
        %v5302 = vsel %vm1003, 1, 0
        %vm5303 = vcmp.eq.s32.totalorder %v5302, 1
        %v5304 = vsel %vm5303, %v5297, -inf
        %5305 = vst [vmem:[%s908] sm:$0x3] %v5304
        %vm5306 = vcmask 1041408
        %v5307 = vsel %vm5306, %v5304, -inf
        %5308 = vmax.xlane.f32.xlu0 %v5307
        %v5309 = vpop.xlane.xlu0 %5308
        %v5310 = vld [vmem:[#allocation2] sm:$0x3]
        %v5311 = vmax.f32 %v5310, %v5309
        %v5312 = vsub.f32 %v5310, %v5311
        %v5313 = vmul.f32 %v5312, 1.442695
        %v5314 = vpow.pop %v5313
        %5316 = vset.pattern.permute.xlu0 0
        %5317 = vperm.xlu0 %5316, %v5311
        %v5318 = vpop.permute.xlu0 %5317
        %v5320 = vsub.f32 %v5304, %v5318
        %v5321 = vmul.f32 %v5320, 1.442695
        %v5322 = vpow.pop %v5321
        %v5323 = vld [vmem:[#allocation3] sm:$0x3]
        %v5324 = vmul.f32 %v5314, %v5323
        %v5325 = vsel %vm5306, %v5322, 0.0
        %5326 = vadd.xlane.f32.xlu0 %v5325
        %v5327 = vpop.xlane.xlu0 %5326
        %v5328 = vadd.f32 %v5324, %v5327
        %vm5329 = vcmask 1024
        %5330 = vst.msk [vmem:[#allocation3] sm:$0x3] %vm5329, %v5328
        %v5331 = vld [vmem:[#allocation4] sm:$0xff]
        %5333 = vset.pattern.permute.xlu0 0
        %5334 = vperm.xlu0 %5333, %v5314
        %v5335 = vpop.permute.xlu0 %5334
        %v5338 = vcombine.high %v5331, %v5331
        %v5340 = vunpack.c.l.s4 1983009808
        %v5341 = vunpack.c.0.s8 %v5340
        %v5342 = vlaneseq
        %v5343 = vshrl.u32 %v5342, 7
        %v5344 = vsub.s32 %v5341, %v5343
        %v5345 = vrot.slane %v5331, %v5344
        %v5347 = vunpack.c.l.s4 1983009808
        %v5348 = vunpack.c.0.s8 %v5347
        %v5349 = vlaneseq
        %v5350 = vshrl.u32 %v5349, 7
        %v5351 = vsub.s32 %v5348, %v5350
        %v5352 = vrot.slane %v5338, %v5351
        %v5353 = vcombine.high %v5345, %v5345
        %v5354 = vcombine.high %v5352, %v5352
        %v5359 = vmul.f32 %v5335, %v5345
        %v5360 = vmul.f32 %v5335, %v5353
        %v5361 = vmul.f32 %v5335, %v5352
        %v5362 = vmul.f32 %v5335, %v5354
        %v5363 = vpack.c.bf16 %v5322, %v5322
        %5364 = vmatprep.subr.bf16.mxu0 %v3775
        %5365 = vmatpush1.bf16.msra.mxu0 %v3774
        %5366 = vmatprep.subr.bf16.mxu0 %v3771
        %5367 = vmatpush1.bf16.msra.mxu0 %v3770
        %5368 = vmatprep.subr.bf16.mxu0 %v3767
        %5369 = vmatpush1.bf16.msra.mxu0 %v3766
        %5370 = vmatprep.subr.bf16.mxu0 %v3763
        %5371 = vmatpush1.bf16.msra.mxu0 %v3762
        %5372 = vmatprep.subr.bf16.mxu0 %v3759
        %5373 = vmatpush1.bf16.msra.mxu0 %v3758
        %5374 = vmatprep.subr.bf16.mxu0 %v3755
        %5375 = vmatpush1.bf16.msra.mxu0 %v3754
        %5376 = vmatprep.subr.bf16.mxu0 %v3751
        %5377 = vmatpush1.bf16.msra.mxu0 %v3750
        %5378 = vmatprep.subr.bf16.mxu0 %v3747
        %5379 = vmatpush1.bf16.msra.mxu0 %v3746
        %5380 = vmatprep.subr.bf16.mxu0 0
        %5381 = vmatpush2.bf16.msra.mxu0 0
        %5382 = vmatprep.subr.bf16.mxu0 0
        %5383 = vmatpush2.bf16.msra.mxu0 0
        %5384 = vmatprep.subr.bf16.mxu0 0
        %5385 = vmatpush2.bf16.msra.mxu0 0
        %5386 = vmatprep.subr.bf16.mxu0 0
        %5387 = vmatpush2.bf16.msra.mxu0 0
        %5388 = vmatprep.subr.bf16.mxu0 0
        %5389 = vmatpush2.bf16.msra.mxu0 0
        %5390 = vmatprep.subr.bf16.mxu0 0
        %5391 = vmatpush2.bf16.msra.mxu0 0
        %5392 = vmatprep.subr.bf16.mxu0 0
        %5393 = vmatpush2.bf16.msra.mxu0 0
        %5394 = vmatprep.subr.bf16.mxu0 0
        %5395 = vmatpush2.bf16.msra.mxu0 0
        %5396 = vmatprep.mubr.bf16.mxu0 0
        %5397 = vmatmul.mubr.bf16.gmra.mxu0 %v5363
        %v5398 = vpop.f32.mrf.mxu0
        %v5399 = vadd.f32 0.0, %v5398
        %v5400 = vpop.f32.mrf.mxu0
        %v5401 = vadd.f32 0.0, %v5400
        %v5402 = vpop.f32.mrf.mxu0
        %v5403 = vpop.f32.mrf.mxu0
        %5404 = vdwg.mxu0
        %5405 = vmatprep.subr.bf16.mxu0 %v3777
        %5406 = vmatpush1.bf16.msra.mxu0 %v3776
        %5407 = vmatprep.subr.bf16.mxu0 %v3773
        %5408 = vmatpush1.bf16.msra.mxu0 %v3772
        %5409 = vmatprep.subr.bf16.mxu0 %v3769
        %5410 = vmatpush1.bf16.msra.mxu0 %v3768
        %5411 = vmatprep.subr.bf16.mxu0 %v3765
        %5412 = vmatpush1.bf16.msra.mxu0 %v3764
        %5413 = vmatprep.subr.bf16.mxu0 %v3761
        %5414 = vmatpush1.bf16.msra.mxu0 %v3760
        %5415 = vmatprep.subr.bf16.mxu0 %v3757
        %5416 = vmatpush1.bf16.msra.mxu0 %v3756
        %5417 = vmatprep.subr.bf16.mxu0 %v3753
        %5418 = vmatpush1.bf16.msra.mxu0 %v3752
        %5419 = vmatprep.subr.bf16.mxu0 %v3749
        %5420 = vmatpush1.bf16.msra.mxu0 %v3748
        %5421 = vmatprep.subr.bf16.mxu0 0
        %5422 = vmatpush2.bf16.msra.mxu0 0
        %5423 = vmatprep.subr.bf16.mxu0 0
        %5424 = vmatpush2.bf16.msra.mxu0 0
        %5425 = vmatprep.subr.bf16.mxu0 0
        %5426 = vmatpush2.bf16.msra.mxu0 0
        %5427 = vmatprep.subr.bf16.mxu0 0
        %5428 = vmatpush2.bf16.msra.mxu0 0
        %5429 = vmatprep.subr.bf16.mxu0 0
        %5430 = vmatpush2.bf16.msra.mxu0 0
        %5431 = vmatprep.subr.bf16.mxu0 0
        %5432 = vmatpush2.bf16.msra.mxu0 0
        %5433 = vmatprep.subr.bf16.mxu0 0
        %5434 = vmatpush2.bf16.msra.mxu0 0
        %5435 = vmatprep.subr.bf16.mxu0 0
        %5436 = vmatpush2.bf16.msra.mxu0 0
        %5437 = vmatprep.mubr.bf16.mxu0 0
        %5438 = vmatmul.mubr.bf16.gmra.mxu0 %v5363
        %v5439 = vpop.f32.mrf.mxu0
        %v5440 = vadd.f32 0.0, %v5439
        %v5441 = vpop.f32.mrf.mxu0
        %v5442 = vadd.f32 0.0, %v5441
        %v5443 = vpop.f32.mrf.mxu0
        %v5444 = vpop.f32.mrf.mxu0
        %5445 = vdwg.mxu0
        %v5446 = vadd.f32 %v5359, %v5399
        %v5447 = vadd.f32 %v5360, %v5401
        %v5448 = vadd.f32 %v5361, %v5440
        %v5449 = vadd.f32 %v5362, %v5442
        %v5454 = vcombine.low %v5446, %v5447
        %v5455 = vcombine.low %v5448, %v5449
        %v5457 = vunpack.c.l.s4 1983009808
        %v5458 = vunpack.c.0.s8 %v5457
        %v5459 = vlaneseq
        %v5460 = vshrl.u32 %v5459, 7
        %v5461 = vsub.s32 %v5458, %v5460
        %v5462 = vrot.slane %v5454, %v5461
        %v5464 = vunpack.c.l.s4 1983009808
        %v5465 = vunpack.c.0.s8 %v5464
        %v5466 = vlaneseq
        %v5467 = vshrl.u32 %v5466, 7
        %v5468 = vsub.s32 %v5465, %v5467
        %v5469 = vrot.slane %v5455, %v5468
        %v5470 = vcombine.low %v5462, %v5469
        %5472 = vst [vmem:[#allocation4] sm:$0xff] %v5470
        %5473 = vst.msk [vmem:[#allocation2] sm:$0x3] %vm5329, %v5311
        %p5474 = scmp.eq.s32.totalorder %s50, 2
        // Predicated region
        $region133: #{tpu_custom_call.1} parent=87 // pred_check
          %p5475 = pneg %p5474
        $region134: #{tpu_custom_call.1} parent=87 // pred_check_branch
          %5477 = sbr.rel (%p5475) target = $region136
        $region135: #{tpu_custom_call.1} parent=87 // pred_region
          %v5478 = vld [vmem:[#allocation3] sm:$0x3]
          %v5479 = vld [vmem:[#allocation4] sm:$0xff]
          %5481 = vset.pattern.permute.xlu0 0
          %5482 = vperm.xlu0 %5481, %v5478
          %v5483 = vpop.permute.xlu0 %5482
          %v5485 = vunpack.c.l.s4 269488144
          %v5486 = vunpack.c.0.s8 %v5485
          %v5487 = vlaneseq
          %v5488 = vshrl.u32 %v5487, 7
          %v5489 = vsub.s32 %v5486, %v5488
          %v5490 = vrot.slane %v5483, %v5489
          %v5492 = vrcp.pop %v5490
          %v5493 = vmul.f32 %v5479, %v5492
          %5494 = vst [vmem:[#allocation23] sm:$0xff] %v5493
          %v5495 = vld [vmem:[#allocation2] sm:$0x3]
          %5496 = vst.msk [vmem:[%s18] sm:$0x3] %vm5329, %v5495
          %5497 = vst.msk [vmem:[%s19] sm:$0x3] %vm5329, %v5478
          %v5498 = vld [vmem:[%s15] sm:$0xff]
          %v5499 = vmul.f32 %v5493, %v5498
          %v5501 = vcombine.high %v5499, %v5499
          %v5503 = vunpack.c.l.s4 1983009808
          %v5504 = vunpack.c.0.s8 %v5503
          %v5505 = vlaneseq
          %v5506 = vshrl.u32 %v5505, 7
          %v5507 = vsub.s32 %v5504, %v5506
          %v5508 = vrot.slane %v5499, %v5507
          %v5510 = vunpack.c.l.s4 1983009808
          %v5511 = vunpack.c.0.s8 %v5510
          %v5512 = vlaneseq
          %v5513 = vshrl.u32 %v5512, 7
          %v5514 = vsub.s32 %v5511, %v5513
          %v5515 = vrot.slane %v5501, %v5514
          %v5516 = vcombine.high %v5508, %v5508
          %v5517 = vcombine.high %v5515, %v5515
          %v5522 = vsel %vm5306, %v5508, 0.0
          %v5523 = vsel %vm5306, %v5516, 0.0
          %v5524 = vadd.f32 %v5522, %v5523
          %v5525 = vsel %vm5306, %v5515, 0.0
          %v5526 = vadd.f32 %v5524, %v5525
          %v5527 = vsel %vm5306, %v5517, 0.0
          %v5528 = vadd.f32 %v5526, %v5527
          %5529 = vadd.xlane.f32.xlu0 %v5528
          %v5530 = vpop.xlane.xlu0 %5529
          %v5531 = vld [vmem:[%s16] sm:$0x3]
          %v5532 = vadd.f32 %v5530, %v5531
          %5533 = vst.msk [vmem:[%s21] sm:$0x3] %vm5329, %v5532
          %v5534 = vsel %vm5329, %v5532, -inf
          %v5535 = vrot.slane %v5534, 4
          %v5536 = vmax.f32 %v5534, %v5535
          %v5537 = vrot.slane %v5536, 2
          %v5538 = vmax.f32 %v5536, %v5537
          %v5539 = vrot.slane %v5538, 1
          %v5540 = vmax.f32 %v5538, %v5539
          %v5541 = vsub.f32 %v5532, %v5540
          %v5542 = vmul.f32 %v5541, 1.442695
          %v5543 = vpow.pop %v5542
          %v5544 = vsel %vm5329, %v5543, 0.0
          %v5545 = vrot.slane %v5544, 4
          %v5546 = vadd.f32 %v5544, %v5545
          %v5547 = vrot.slane %v5546, 2
          %v5548 = vadd.f32 %v5546, %v5547
          %v5549 = vrot.slane %v5548, 1
          %v5550 = vadd.f32 %v5548, %v5549
          %v5551 = vrcp.pop %v5550
          %v5552 = vmul.f32 %v5543, %v5551
          %5553 = vst.msk [vmem:[%s22] sm:$0x3] %vm5329, %v5552
        $region136: #{tpu_custom_call.1} parent=87 // pred_fallthru
          _
        %s5554 = sand.u32 %s435, 1
        %s5555 = scalar_lea.sflag [#allocation7], %s5554
        %s5556 = sand.u32 %s435, 1
        %s5557 = smul.addr %s5556, 2
        %s5558 = scalar_lea.vmem [#allocation22], %s5557
        // Predicated region
        $region137: #{tpu_custom_call.1} parent=87 // pred_check
          %p5559 = pneg %p445
        $region138: #{tpu_custom_call.1} parent=87 // pred_check_branch
          %5561 = sbr.rel (%p5559) target = $region140
        $region139: #{tpu_custom_call.1} parent=87 // pred_region
          %s5563 = ssub.s32 32, 32
          %5564 = vsyncadd %s5555, %s5563
          %s5565 = smul.addr %s50, 32
          %s5566 = scalar_lea.hbm %s17, %s5565
          %s5568 = sshll.u32 %s5558, 4
          %s5569 = int_to_ptr.vmem [resolvable:$true] %s5568
          %5571 = dma.vmem_to_hbm [thread:$0]  %s5569, 32, %s5566, %s5555
        $region140: #{tpu_custom_call.1} parent=87 // pred_fallthru
          _
        // Predicated region
        $region141: #{tpu_custom_call.1} parent=87 // pred_check
          %p5572 = pneg %p466
        $region142: #{tpu_custom_call.1} parent=87 // pred_check_branch
          %5574 = sbr.rel (%p5572) target = $region144
        $region143: #{tpu_custom_call.1} parent=87 // pred_region
          _
        $region144: #{tpu_custom_call.1} parent=87 // pred_fallthru
          _
        // Predicated region
        $region145: #{tpu_custom_call.1} parent=87 // pred_check
          %p5575 = pneg %p487
        $region146: #{tpu_custom_call.1} parent=87 // pred_check_branch
          %5577 = sbr.rel (%p5575) target = $region148
        $region147: #{tpu_custom_call.1} parent=87 // pred_region
          _
        $region148: #{tpu_custom_call.1} parent=87 // pred_fallthru
          _
        // Predicated region
        $region149: #{tpu_custom_call.1} parent=87 // pred_check
          %p5578 = pneg %p508
        $region150: #{tpu_custom_call.1} parent=87 // pred_check_branch
          %5580 = sbr.rel (%p5578) target = $region152
        $region151: #{tpu_custom_call.1} parent=87 // pred_region
          %s5582 = ssub.s32 128, 128
          %5583 = vsyncadd [#allocation24], %s5582
          %s5585 = sshll.u32 [#allocation23], 4
          %s5586 = int_to_ptr.vmem [resolvable:$true] %s5585
          %5588 = dma.vmem_to_hbm [thread:$0]  %s5586, 128, %s20, [#allocation24]
        $region152: #{tpu_custom_call.1} parent=87 // pred_fallthru
          _
        // Predicated region
        $region153: #{tpu_custom_call.1} parent=87 // pred_check
          %p5589 = pneg %p529
        $region154: #{tpu_custom_call.1} parent=87 // pred_check_branch
          %5591 = sbr.rel (%p5589) target = $region156
        $region155: #{tpu_custom_call.1} parent=87 // pred_region
          _
        $region156: #{tpu_custom_call.1} parent=87 // pred_fallthru
          _
        // Predicated region
        $region157: #{tpu_custom_call.1} parent=87 // pred_check
          %p5592 = pneg %p550
        $region158: #{tpu_custom_call.1} parent=87 // pred_check_branch
          %5594 = sbr.rel (%p5592) target = $region160
        $region159: #{tpu_custom_call.1} parent=87 // pred_region
          _
        $region160: #{tpu_custom_call.1} parent=87 // pred_fallthru
          _
        // Predicated region
        $region161: #{tpu_custom_call.1} parent=87 // pred_check
          %p5595 = pneg %p466
        $region162: #{tpu_custom_call.1} parent=87 // pred_check_branch
          %5597 = sbr.rel (%p5595) target = $region164
        $region163: #{tpu_custom_call.1} parent=87 // pred_region
          _
        $region164: #{tpu_custom_call.1} parent=87 // pred_fallthru
          _
        // Predicated region
        $region165: #{tpu_custom_call.1} parent=87 // pred_check
          %p5598 = pneg %p487
        $region166: #{tpu_custom_call.1} parent=87 // pred_check_branch
          %5600 = sbr.rel (%p5598) target = $region168
        $region167: #{tpu_custom_call.1} parent=87 // pred_region
          _
        $region168: #{tpu_custom_call.1} parent=87 // pred_fallthru
          _
        // Predicated region
        $region169: #{tpu_custom_call.1} parent=87 // pred_check
          %p5601 = pneg %p508
        $region170: #{tpu_custom_call.1} parent=87 // pred_check_branch
          %5603 = sbr.rel (%p5601) target = $region172
        $region171: #{tpu_custom_call.1} parent=87 // pred_region
          %5604 = dma.done [#allocation24], 128
        $region172: #{tpu_custom_call.1} parent=87 // pred_fallthru
          _
        // Predicated region
        $region173: #{tpu_custom_call.1} parent=87 // pred_check
          %p5605 = pneg %p529
        $region174: #{tpu_custom_call.1} parent=87 // pred_check_branch
          %5607 = sbr.rel (%p5605) target = $region176
        $region175: #{tpu_custom_call.1} parent=87 // pred_region
          _
        $region176: #{tpu_custom_call.1} parent=87 // pred_fallthru
          _
        // Predicated region
        $region177: #{tpu_custom_call.1} parent=87 // pred_check
          %p5608 = pneg %p550
        $region178: #{tpu_custom_call.1} parent=87 // pred_check_branch
          %5610 = sbr.rel (%p5608) target = $region180
        $region179: #{tpu_custom_call.1} parent=87 // pred_region
          _
        $region180: #{tpu_custom_call.1} parent=87 // pred_fallthru
          _
      $region88: #{tpu_custom_call.1} parent=5 // pred_fallthru
        _
      %p5611 = scmp.le.s32.totalorder 2, %s45
      // Predicated region
      $region181: #{tpu_custom_call.1} parent=5 // pred_check
        %p5612 = pneg %p5611
      $region182: #{tpu_custom_call.1} parent=5 // pred_check_branch
        %5614 = sbr.rel (%p5612) target = $region184
      $region183: #{tpu_custom_call.1} parent=5 // pred_region
        %s5615 = ssub.s32 %s45, 2
        // Predicated region
        $region185: #{tpu_custom_call.1} parent=183 // pred_check
          %p5616 = pneg %p451
        $region186: #{tpu_custom_call.1} parent=183 // pred_check_branch
          %5618 = sbr.rel (%p5616) target = $region188
        $region187: #{tpu_custom_call.1} parent=183 // pred_region
          %s5619 = sand.u32 %s436, 1
          %s5620 = scalar_lea.sflag [#allocation7], %s5619
          %s5621 = sand.u32 %s436, 1
          %s5622 = smul.addr %s5621, 2
          %s5623 = scalar_lea.vmem [#allocation22], %s5622
          %5624 = dma.done %s5620, 32
        $region188: #{tpu_custom_call.1} parent=183 // pred_fallthru
          _
      $region184: #{tpu_custom_call.1} parent=5 // pred_fallthru
        _
    $region6: #{tpu_custom_call.1} parent=1 // loop_footer
      %s49 = sadd.s32 1, %s45
    $region7: #{tpu_custom_call.1} parent=1 // loop_footer_branch
      %44 = sbr.rel target = $region3
    $region8: #{tpu_custom_call.1} parent=1 // loop_exit
      _
    %5625 = vsyncpa [#allocation6], 1
    %s5626 = scalar_lea.sflag [#allocation6], 1
    %5627 = vsyncpa %s5626, 1
    %5628 = vsyncpa [#allocation9], 1
    %s5629 = scalar_lea.sflag [#allocation9], 1
    %5630 = vsyncpa %s5629, 1
    %5631 = vsyncpa [#allocation12], 1
    %s5632 = scalar_lea.sflag [#allocation12], 1
    %5633 = vsyncpa %s5632, 1
    %5634 = vsyncpa [#allocation15], 1
    %5635 = vsyncpa [#allocation18], 1
    %5636 = vsyncpa [#allocation21], 1
    %5637 = vsyncpa [#allocation7], 1
    %s5638 = scalar_lea.sflag [#allocation7], 1
    %5639 = vsyncpa %s5638, 1
    %5640 = vsyncpa [#allocation24], 1

</llo_original>
